<compile_context>
chip_gen: v5e
topology: v5e:2x2
jax: 0.10.0
libtpu: 0.0.40
codegen_flags: <defaults>
</compile_context>

<pallas_src>
import jax
import jax.numpy as jnp
from jax.experimental import pallas as pl
from jax.experimental.pallas import tpu as pltpu

LN_EPS = 1e-5  # PyTorch nn.LayerNorm default


# ----------------------------- in-kernel helpers -----------------------------
def _layernorm(x, w, b):
    # x: (N, dim);  w, b: (1, dim)
    mean = jnp.mean(x, axis=-1, keepdims=True)
    var = jnp.mean((x - mean) ** 2, axis=-1, keepdims=True)  # biased, like torch
    return (x - mean) * jax.lax.rsqrt(var + LN_EPS) * w + b


def _erf(x):
    # Abramowitz & Stegun 7.1.26 (max abs err ~1.5e-7).  Uses only exp (EUP slot)
    # and VPU arithmetic, so it lowers cleanly on Mosaic.
    a1, a2, a3, a4, a5 = 0.254829592, -0.284496736, 1.421413741, -1.453152027, 1.061405429
    p = 0.3275911
    ax = jnp.abs(x)
    t = 1.0 / (1.0 + p * ax)
    poly = ((((a5 * t + a4) * t + a3) * t + a2) * t + a1) * t
    y = 1.0 - poly * jnp.exp(-(ax * ax))
    return jnp.where(x < 0.0, -y, y)


def _gelu(x):
    # exact (erf-based) GELU, matching nn.GELU() default
    return 0.5 * x * (1.0 + _erf(x * 0.7071067811865476))


# ----------------------------- fused Pallas kernel ----------------------------
def vit3_fused_kernel(xp_ref, w_pe_ref, b_pe_ref, cls_ref, pos_ref,
                      ln1w_ref, ln1b_ref, wq_ref, wk_ref, wv_ref, wo_ref, bo_ref,
                      ln2w_ref, ln2b_ref, w1_ref, b1_ref, w2_ref, b2_ref,
                      hlnw_ref, hlnb_ref, hw1_ref, hb1_ref, hw2_ref, hb2_ref,
                      o_ref, x_scr):
    f32, bf16 = jnp.float32, jnp.bfloat16
    depth, heads, dim, dim_head = wq_ref.shape
    n_tok, _ = x_scr.shape
    n_patch = n_tok - 1
    scale = dim_head ** -0.5

    # ---- patch embedding (bf16 MXU, f32 accumulate) + positional embedding ----
    # In-kernel token layout: rows [0, n_patch) = patch tokens, row n_patch = CLS.
    # pos_emb was pre-permuted to this order, so both stores are sublane-aligned
    # row writes and no concatenate is needed.
    emb = jnp.dot(xp_ref[0].astype(bf16), w_pe_ref[...],
                  preferred_element_type=f32) + b_pe_ref[...]        # (Np, dim)
    pos = pos_ref[0]                                                 # (N, dim)
    x_scr[0:n_patch, :] = emb + pos[0:n_patch, :]
    x_scr[n_patch:, :] = cls_ref[...] + pos[n_patch:, :]
    x = x_scr[...]                                                   # (N, dim) f32

    # ---- transformer stack: fully unrolled, weights resident in VMEM ----
    for l in range(depth):
        # PreNorm + multi-head self-attention (heads batched on the MXU) + residual
        y = _layernorm(x, ln1w_ref[l], ln1b_ref[l])
        yh = jnp.broadcast_to(y.astype(bf16)[None], (heads, n_tok, dim))
        q = jnp.einsum('hnd,hdk->hnk', yh, wq_ref[l], preferred_element_type=f32)
        k = jnp.einsum('hnd,hdk->hnk', yh, wk_ref[l], preferred_element_type=f32)
        v = jnp.einsum('hnd,hdk->hnk', yh, wv_ref[l], preferred_element_type=f32)
        dots = jnp.einsum('hik,hjk->hij', q.astype(bf16), k.astype(bf16),
                          preferred_element_type=f32) * scale        # (h, N, N)
        dots = dots - jnp.max(dots, axis=-1, keepdims=True)
        p = jnp.exp(dots)
        attn = p * pl.reciprocal(jnp.sum(p, axis=-1, keepdims=True), approx=True)
        ctx = jnp.einsum('hij,hjk->hik', attn.astype(bf16), v.astype(bf16),
                         preferred_element_type=f32)                 # (h, N, dh)
        proj = jnp.einsum('hik,hkd->hid', ctx.astype(bf16), wo_ref[l],
                          preferred_element_type=f32)                # (h, N, dim)
        x = x + jnp.sum(proj, axis=0) + bo_ref[l]

        # PreNorm + GELU MLP + residual
        y2 = _layernorm(x, ln2w_ref[l], ln2b_ref[l])
        hid = _gelu(jnp.dot(y2.astype(bf16), w1_ref[l],
                            preferred_element_type=f32) + b1_ref[l])
        x = x + jnp.dot(hid.astype(bf16), w2_ref[l],
                        preferred_element_type=f32) + b2_ref[l]

    # ---- CLS token (last row in kernel layout) -> MLP head ----
    xc = x[n_patch:, :]                                              # (1, dim)
    yc = _layernorm(xc, hlnw_ref[...], hlnb_ref[...])
    hidc = _gelu(jnp.dot(yc.astype(bf16), hw1_ref[...],
                         preferred_element_type=f32) + hb1_ref[...])
    o_ref[0] = jnp.dot(hidc.astype(bf16), hw2_ref[...],
                       preferred_element_type=f32) + hb2_ref[...]


# ----------------------------- wrapper -----------------------------------------
def extract_patches(img, p):
    # 'b c (h p1) (w p2) (d p3) -> b (h w d) (p1 p2 p3 c)'
    B, C, H, W, D = img.shape
    h, w, d = H // p, W // p, D // p
    x = img.reshape(B, C, h, p, w, p, d, p)
    x = x.transpose(0, 2, 4, 6, 3, 5, 7, 1)          # b h w d p1 p2 p3 c
    return x.reshape(B, h * w * d, p * p * p * C)


def vit3_forward(img, kparams, *, patch_size):
    """Single fused pallas_call: patch-embed + transformer stack + MLP head."""
    xp = extract_patches(img, patch_size)                    # (B, Np, patch_dim)
    B, n_patch, patch_dim = xp.shape
    depth, heads, dim, dim_head = kparams["wq"].shape
    inner = heads * dim_head
    n_tok = n_patch + 1
    mlp_dim = kparams["w1"].shape[2]
    n_cls = kparams["head_w2"].shape[1]

    inputs = (xp, kparams["w_pe"], kparams["b_pe"], kparams["cls_tok"],
              kparams["pos_emb"],
              kparams["ln1_w"], kparams["ln1_b"],
              kparams["wq"], kparams["wk"], kparams["wv"],
              kparams["wo"], kparams["b_out"],
              kparams["ln2_w"], kparams["ln2_b"],
              kparams["w1"], kparams["b1"], kparams["w2"], kparams["b2"],
              kparams["head_ln_w"], kparams["head_ln_b"],
              kparams["head_w1"], kparams["head_b1"],
              kparams["head_w2"], kparams["head_b2"])

    def full_spec(a):
        # whole-array block, same block index for every grid step (fetched once)
        zeros = (0,) * a.ndim
        return pl.BlockSpec(a.shape, lambda b: zeros)

    in_specs = [pl.BlockSpec((1, n_patch, patch_dim), lambda b: (b, 0, 0))]
    in_specs += [full_spec(a) for a in inputs[1:]]

    flops = B * (2 * n_patch * patch_dim * dim
                 + depth * (6 * n_tok * dim * inner
                            + 4 * n_tok * n_tok * inner
                            + 2 * n_tok * inner * dim
                            + 4 * n_tok * dim * mlp_dim)
                 + 2 * dim * mlp_dim + 2 * mlp_dim * n_cls)
    transcendentals = B * (depth * (heads * n_tok * n_tok + n_tok * mlp_dim) + mlp_dim)
    bytes_accessed = sum(int(a.size) * a.dtype.itemsize for a in inputs) + B * n_cls * 4

    out = pl.pallas_call(
        vit3_fused_kernel,
        out_shape=jax.ShapeDtypeStruct((B, 1, n_cls), jnp.float32),
        grid=(B,),
        in_specs=in_specs,
        out_specs=pl.BlockSpec((1, 1, n_cls), lambda b: (b, 0, 0)),
        scratch_shapes=[pltpu.VMEM((n_tok, dim), jnp.float32)],
        compiler_params=pltpu.CompilerParams(dimension_semantics=("parallel",)),
        cost_estimate=pl.CostEstimate(flops=flops,
                                      transcendentals=transcendentals,
                                      bytes_accessed=bytes_accessed),
    )(*inputs)
    return out[:, 0, :]


# ----------------------------- parameter packing --------------------------------
def pack_params(params, *, heads, dim_head):
    """Re-layout PyTorch-style params for the fused kernel:
    - per-layer tensors stacked along a leading (depth,) axis,
    - qkv / output projections split per head (no in-kernel lane slicing),
    - matmul weights cast to bf16 (f32 accumulation on the MXU),
    - pos_emb permuted so the CLS position is the LAST token row."""
    bf16 = jnp.bfloat16
    layers = params["layers"]
    depth = len(layers)
    dim = params["w_pe"].shape[1]
    inner = heads * dim_head

    def stack(key):
        return jnp.stack([lp[key] for lp in layers], axis=0)

    w_qkv = stack("w_qkv")                                    # (depth, dim, 3*inner)

    def split_heads(i):
        w = w_qkv[:, :, i * inner:(i + 1) * inner]
        return (w.reshape(depth, dim, heads, dim_head)
                 .transpose(0, 2, 1, 3).astype(bf16))         # (depth, heads, dim, dh)

    wo = stack("w_out").reshape(depth, heads, dim_head, dim).astype(bf16)

    pos = params["pos_emb"]                                   # (1, N, dim), CLS first
    pos_cls_last = jnp.concatenate([pos[:, 1:, :], pos[:, :1, :]], axis=1)

    return {
        "w_pe": params["w_pe"].astype(bf16), "b_pe": params["b_pe"],
        "cls_tok": params["cls_tok"], "pos_emb": pos_cls_last,
        "ln1_w": stack("ln1_w"), "ln1_b": stack("ln1_b"),
        "wq": split_heads(0), "wk": split_heads(1), "wv": split_heads(2),
        "wo": wo, "b_out": stack("b_out"),
        "ln2_w": stack("ln2_w"), "ln2_b": stack("ln2_b"),
        "w1": stack("w1").astype(bf16), "b1": stack("b1"),
        "w2": stack("w2").astype(bf16), "b2": stack("b2"),
        "head_ln_w": params["head_ln_w"], "head_ln_b": params["head_ln_b"],
        "head_w1": params["head_w1"].astype(bf16), "head_b1": params["head_b1"],
        "head_w2": params["head_w2"].astype(bf16), "head_b2": params["head_b2"],
    }


# ----------------------------- parameter init ------------------------------------
def init_params(key, *, patch_dim, dim, depth, heads, dim_head, mlp_dim,
                num_classes, num_patches):
    inner = heads * dim_head
    keys = iter(jax.random.split(key, 8 + 8 * depth))

    def nrm(shape, scale=0.02):
        return (scale * jax.random.normal(next(keys), shape)).astype(jnp.float32)

    params = {
        "pos_emb": nrm((1, num_patches + 1, dim), 1.0),
        "cls_tok": nrm((1, dim), 1.0),
        "w_pe": nrm((patch_dim, dim)),
        "b_pe": nrm((1, dim)),
        "layers": [],
        "head_ln_w": jnp.ones((1, dim), jnp.float32),
        "head_ln_b": jnp.zeros((1, dim), jnp.float32),
        "head_w1": nrm((dim, mlp_dim)),
        "head_b1": nrm((1, mlp_dim)),
        "head_w2": nrm((mlp_dim, num_classes)),
        "head_b2": nrm((1, num_classes)),
    }
    for _ in range(depth):
        params["layers"].append({
            "ln1_w": jnp.ones((1, dim), jnp.float32),
            "ln1_b": jnp.zeros((1, dim), jnp.float32),
            "w_qkv": nrm((dim, 3 * inner)),
            "w_out": nrm((inner, dim)),
            "b_out": nrm((1, dim)),
            "ln2_w": jnp.ones((1, dim), jnp.float32),
            "ln2_b": jnp.zeros((1, dim), jnp.float32),
            "w1": nrm((dim, mlp_dim)),
            "b1": nrm((1, mlp_dim)),
            "w2": nrm((mlp_dim, dim)),
            "b2": nrm((1, dim)),
        })
    return params


# ----------------------------- pure-JAX reference ---------------------------------
def reference_forward(img, params, *, patch_size, heads, dim_head):
    xp = extract_patches(img, patch_size)
    x = xp @ params["w_pe"] + params["b_pe"]
    B, _, dim = x.shape
    cls = jnp.broadcast_to(params["cls_tok"][None], (B, 1, dim))
    x = jnp.concatenate([cls, x], axis=1) + params["pos_emb"]

    def ln(t, w, b):
        m = t.mean(-1, keepdims=True)
        v = ((t - m) ** 2).mean(-1, keepdims=True)
        return (t - m) / jnp.sqrt(v + LN_EPS) * w + b

    inner = heads * dim_head
    for lp in params["layers"]:
        y = ln(x, lp["ln1_w"][0], lp["ln1_b"][0])
        qkv = y @ lp["w_qkv"]
        q, k, v = qkv[..., :inner], qkv[..., inner:2 * inner], qkv[..., 2 * inner:]
        sp = lambda t: t.reshape(B, -1, heads, dim_head).transpose(0, 2, 1, 3)
        q, k, v = sp(q), sp(k), sp(v)
        dots = jnp.einsum("bhid,bhjd->bhij", q, k) * dim_head ** -0.5
        attn = jax.nn.softmax(dots, axis=-1)
        out = jnp.einsum("bhij,bhjd->bhid", attn, v)
        out = out.transpose(0, 2, 1, 3).reshape(B, -1, inner)
        x = x + (out @ lp["w_out"] + lp["b_out"][0])
        y2 = ln(x, lp["ln2_w"][0], lp["ln2_b"][0])
        x = x + (jax.nn.gelu(y2 @ lp["w1"] + lp["b1"][0], approximate=False)
                 @ lp["w2"] + lp["b2"][0])
    xc = x[:, 0]
    y = ln(xc, params["head_ln_w"][0], params["head_ln_b"][0])
    h = jax.nn.gelu(y @ params["head_w1"] + params["head_b1"][0], approximate=False)
    return h @ params["head_w2"] + params["head_b2"][0]


# ----------------------------- main -------------------------------------------------
if __name__ == "__main__":
    # small, divisibility-respecting, lane-friendly config
    B, C = 2, 2
    image_size = (8, 8, 8)
    patch_size = 4
    dim, depth, heads, dim_head = 128, 2, 4, 32
    mlp_dim, num_classes = 256, 10

    num_patches = (image_size[0] // patch_size) * (image_size[1] // patch_size) \
                  * (image_size[2] // patch_size)          # 8
    patch_dim = C * patch_size ** 3                        # 128

    key = jax.random.PRNGKey(0)
    k_img, k_param = jax.random.split(key)
    img = jax.random.normal(k_img, (B, C, *image_size), dtype=jnp.float32)

    params = init_params(k_param, patch_dim=patch_dim, dim=dim, depth=depth,
                         heads=heads, dim_head=dim_head, mlp_dim=mlp_dim,
                         num_classes=num_classes, num_patches=num_patches)
    kparams = pack_params(params, heads=heads, dim_head=dim_head)

    out = vit3_forward(img, kparams, patch_size=patch_size)
    out = jax.block_until_ready(out)
    assert out.shape == (B, num_classes)

    ref = reference_forward(img, params, patch_size=patch_size,
                            heads=heads, dim_head=dim_head)
    assert jnp.allclose(out, ref, atol=2e-2, rtol=2e-2), "mismatch vs reference"

    print("KERNEL_OK")
</pallas_src>

<mosaic_0001>
module attributes {stable_mosaic.version = 11 : i64} {
  func.func @vit3_fused_kernel(%arg0: i32, %arg1: memref<1x8x128xf32, #tpu.memory_space<vmem>>, %arg2: memref<128x128xbf16, #tpu.memory_space<vmem>>, %arg3: memref<1x128xf32, #tpu.memory_space<vmem>>, %arg4: memref<1x128xf32, #tpu.memory_space<vmem>>, %arg5: memref<1x9x128xf32, #tpu.memory_space<vmem>>, %arg6: memref<2x1x128xf32, #tpu.memory_space<vmem>>, %arg7: memref<2x1x128xf32, #tpu.memory_space<vmem>>, %arg8: memref<2x4x128x32xbf16, #tpu.memory_space<vmem>>, %arg9: memref<2x4x128x32xbf16, #tpu.memory_space<vmem>>, %arg10: memref<2x4x128x32xbf16, #tpu.memory_space<vmem>>, %arg11: memref<2x4x32x128xbf16, #tpu.memory_space<vmem>>, %arg12: memref<2x1x128xf32, #tpu.memory_space<vmem>>, %arg13: memref<2x1x128xf32, #tpu.memory_space<vmem>>, %arg14: memref<2x1x128xf32, #tpu.memory_space<vmem>>, %arg15: memref<2x128x256xbf16, #tpu.memory_space<vmem>>, %arg16: memref<2x1x256xf32, #tpu.memory_space<vmem>>, %arg17: memref<2x256x128xbf16, #tpu.memory_space<vmem>>, %arg18: memref<2x1x128xf32, #tpu.memory_space<vmem>>, %arg19: memref<1x128xf32, #tpu.memory_space<vmem>>, %arg20: memref<1x128xf32, #tpu.memory_space<vmem>>, %arg21: memref<128x256xbf16, #tpu.memory_space<vmem>>, %arg22: memref<1x256xf32, #tpu.memory_space<vmem>>, %arg23: memref<256x10xbf16, #tpu.memory_space<vmem>>, %arg24: memref<1x10xf32, #tpu.memory_space<vmem>>, %arg25: memref<1x1x10xf32, #tpu.memory_space<vmem>>, %arg26: memref<9x128xf32, #tpu.memory_space<vmem>>) attributes {dimension_semantics = [#tpu.dimension_semantics<parallel>], iteration_bounds = array<i64: 2>, scalar_prefetch = 0 : i64, scratch_operands = 1 : i64, tpu.core_type = #tpu.core_type<tc>, window_params = [{transform_indices = @transform_0, window_bounds = array<i64: 1, 8, 128>}, {pipeline_mode = #tpu.pipeline_mode<synchronous>, transform_indices = @transform_1, window_bounds = array<i64: 128, 128>}, {pipeline_mode = #tpu.pipeline_mode<synchronous>, transform_indices = @transform_2, window_bounds = array<i64: 1, 128>}, {pipeline_mode = #tpu.pipeline_mode<synchronous>, transform_indices = @transform_3, window_bounds = array<i64: 1, 128>}, {pipeline_mode = #tpu.pipeline_mode<synchronous>, transform_indices = @transform_4, window_bounds = array<i64: 1, 9, 128>}, {pipeline_mode = #tpu.pipeline_mode<synchronous>, transform_indices = @transform_5, window_bounds = array<i64: 2, 1, 128>}, {pipeline_mode = #tpu.pipeline_mode<synchronous>, transform_indices = @transform_6, window_bounds = array<i64: 2, 1, 128>}, {pipeline_mode = #tpu.pipeline_mode<synchronous>, transform_indices = @transform_7, window_bounds = array<i64: 2, 4, 128, 32>}, {pipeline_mode = #tpu.pipeline_mode<synchronous>, transform_indices = @transform_8, window_bounds = array<i64: 2, 4, 128, 32>}, {pipeline_mode = #tpu.pipeline_mode<synchronous>, transform_indices = @transform_9, window_bounds = array<i64: 2, 4, 128, 32>}, {pipeline_mode = #tpu.pipeline_mode<synchronous>, transform_indices = @transform_10, window_bounds = array<i64: 2, 4, 32, 128>}, {pipeline_mode = #tpu.pipeline_mode<synchronous>, transform_indices = @transform_11, window_bounds = array<i64: 2, 1, 128>}, {pipeline_mode = #tpu.pipeline_mode<synchronous>, transform_indices = @transform_12, window_bounds = array<i64: 2, 1, 128>}, {pipeline_mode = #tpu.pipeline_mode<synchronous>, transform_indices = @transform_13, window_bounds = array<i64: 2, 1, 128>}, {pipeline_mode = #tpu.pipeline_mode<synchronous>, transform_indices = @transform_14, window_bounds = array<i64: 2, 128, 256>}, {pipeline_mode = #tpu.pipeline_mode<synchronous>, transform_indices = @transform_15, window_bounds = array<i64: 2, 1, 256>}, {pipeline_mode = #tpu.pipeline_mode<synchronous>, transform_indices = @transform_16, window_bounds = array<i64: 2, 256, 128>}, {pipeline_mode = #tpu.pipeline_mode<synchronous>, transform_indices = @transform_17, window_bounds = array<i64: 2, 1, 128>}, {pipeline_mode = #tpu.pipeline_mode<synchronous>, transform_indices = @transform_18, window_bounds = array<i64: 1, 128>}, {pipeline_mode = #tpu.pipeline_mode<synchronous>, transform_indices = @transform_19, window_bounds = array<i64: 1, 128>}, {pipeline_mode = #tpu.pipeline_mode<synchronous>, transform_indices = @transform_20, window_bounds = array<i64: 128, 256>}, {pipeline_mode = #tpu.pipeline_mode<synchronous>, transform_indices = @transform_21, window_bounds = array<i64: 1, 256>}, {pipeline_mode = #tpu.pipeline_mode<synchronous>, transform_indices = @transform_22, window_bounds = array<i64: 256, 10>}, {pipeline_mode = #tpu.pipeline_mode<synchronous>, transform_indices = @transform_23, window_bounds = array<i64: 1, 10>}, {transform_indices = @transform_24, window_bounds = array<i64: 1, 1, 10>}]} {
    %c0 = arith.constant 0 : index
    %c0_0 = arith.constant 0 : index
    %c0_1 = arith.constant 0 : index
    %0 = vector.load %arg1[%c0, %c0_0, %c0_1] : memref<1x8x128xf32, #tpu.memory_space<vmem>>, vector<1x8x128xf32>
    %1 = vector.shape_cast %0 : vector<1x8x128xf32> to vector<8x128xf32>
    %2 = arith.truncf %1 : vector<8x128xf32> to vector<8x128xbf16>
    %c0_2 = arith.constant 0 : index
    %c0_3 = arith.constant 0 : index
    %3 = vector.load %arg2[%c0_2, %c0_3] : memref<128x128xbf16, #tpu.memory_space<vmem>>, vector<128x128xbf16>
    %cst = arith.constant dense<0.000000e+00> : vector<8x128xf32>
    %4 = tpu.matmul %2, %3, %cst {dimension_numbers = #tpu.dot_dimension_numbers<[1], [0], [0], [1], [0, 0, 1, 1], [], []>} : vector<8x128xbf16>, vector<128x128xbf16>, vector<8x128xf32> -> vector<8x128xf32>
    %c0_4 = arith.constant 0 : index
    %c0_5 = arith.constant 0 : index
    %5 = vector.load %arg3[%c0_4, %c0_5] : memref<1x128xf32, #tpu.memory_space<vmem>>, vector<1x128xf32>
    %6 = vector.broadcast %5 : vector<1x128xf32> to vector<8x128xf32>
    %7 = arith.addf %4, %6 : vector<8x128xf32>
    %c0_6 = arith.constant 0 : index
    %c0_7 = arith.constant 0 : index
    %c0_8 = arith.constant 0 : index
    %8 = vector.load %arg5[%c0_6, %c0_7, %c0_8] : memref<1x9x128xf32, #tpu.memory_space<vmem>>, vector<1x9x128xf32>
    %9 = vector.shape_cast %8 : vector<1x9x128xf32> to vector<9x128xf32>
    %10 = vector.extract_strided_slice %9 {offsets = [0, 0], sizes = [8, 128], strides = [1, 1]} : vector<9x128xf32> to vector<8x128xf32>
    %11 = arith.addf %7, %10 : vector<8x128xf32>
    %c0_9 = arith.constant 0 : index
    %c0_10 = arith.constant 0 : index
    %12 = vector.load %arg26[%c0_9, %c0_10] : memref<9x128xf32, #tpu.memory_space<vmem>>, vector<8x128xf32>
    tpu.vector_store %arg26[%c0_9, %c0_10], %11 {strides = array<i32>} : memref<9x128xf32, #tpu.memory_space<vmem>>, vector<8x128xf32>,
    %c0_11 = arith.constant 0 : index
    %c0_12 = arith.constant 0 : index
    %13 = vector.load %arg4[%c0_11, %c0_12] : memref<1x128xf32, #tpu.memory_space<vmem>>, vector<1x128xf32>
    %14 = vector.extract_strided_slice %9 {offsets = [8, 0], sizes = [1, 128], strides = [1, 1]} : vector<9x128xf32> to vector<1x128xf32>
    %15 = arith.addf %13, %14 : vector<1x128xf32>
    %c8 = arith.constant 8 : index
    %c0_13 = arith.constant 0 : index
    %16 = vector.load %arg26[%c8, %c0_13] : memref<9x128xf32, #tpu.memory_space<vmem>>, vector<1x128xf32>
    tpu.vector_store %arg26[%c8, %c0_13], %15 {strides = array<i32>} : memref<9x128xf32, #tpu.memory_space<vmem>>, vector<1x128xf32>,
    %c0_14 = arith.constant 0 : index
    %c0_15 = arith.constant 0 : index
    %17 = vector.load %arg26[%c0_14, %c0_15] : memref<9x128xf32, #tpu.memory_space<vmem>>, vector<9x128xf32>
    %c0_16 = arith.constant 0 : index
    %c0_17 = arith.constant 0 : index
    %c0_18 = arith.constant 0 : index
    %18 = vector.load %arg6[%c0_16, %c0_17, %c0_18] : memref<2x1x128xf32, #tpu.memory_space<vmem>>, vector<1x1x128xf32>
    %19 = vector.shape_cast %18 : vector<1x1x128xf32> to vector<1x128xf32>
    %c0_19 = arith.constant 0 : index
    %c0_20 = arith.constant 0 : index
    %c0_21 = arith.constant 0 : index
    %20 = vector.load %arg7[%c0_19, %c0_20, %c0_21] : memref<2x1x128xf32, #tpu.memory_space<vmem>>, vector<1x1x128xf32>
    %21 = vector.shape_cast %20 : vector<1x1x128xf32> to vector<1x128xf32>
    %cst_22 = arith.constant dense<0.000000e+00> : vector<9xf32>
    %22 = vector.multi_reduction <add>, %17, %cst_22 [1] : vector<9x128xf32> to vector<9xf32>
    %23 = vector.shape_cast %22 : vector<9xf32> to vector<9x1xf32>
    %cst_23 = arith.constant 1.280000e+02 : f32
    %24 = vector.broadcast %cst_23 : f32 to vector<9x1xf32>
    %25 = arith.divf %23, %24 : vector<9x1xf32>
    %26 = vector.broadcast %25 : vector<9x1xf32> to vector<9x128xf32>
    %27 = arith.subf %17, %26 : vector<9x128xf32>
    %28 = arith.mulf %27, %27 : vector<9x128xf32>
    %cst_24 = arith.constant dense<0.000000e+00> : vector<9xf32>
    %29 = vector.multi_reduction <add>, %28, %cst_24 [1] : vector<9x128xf32> to vector<9xf32>
    %30 = vector.shape_cast %29 : vector<9xf32> to vector<9x1xf32>
    %cst_25 = arith.constant 1.280000e+02 : f32
    %31 = vector.broadcast %cst_25 : f32 to vector<9x1xf32>
    %32 = arith.divf %30, %31 : vector<9x1xf32>
    %33 = vector.broadcast %25 : vector<9x1xf32> to vector<9x128xf32>
    %34 = arith.subf %17, %33 : vector<9x128xf32>
    %cst_26 = arith.constant 9.99999974E-6 : f32
    %35 = vector.broadcast %cst_26 : f32 to vector<9x1xf32>
    %36 = arith.addf %32, %35 : vector<9x1xf32>
    %37 = math.rsqrt %36 : vector<9x1xf32>
    %38 = vector.broadcast %37 : vector<9x1xf32> to vector<9x128xf32>
    %39 = arith.mulf %34, %38 : vector<9x128xf32>
    %40 = vector.broadcast %19 : vector<1x128xf32> to vector<9x128xf32>
    %41 = arith.mulf %39, %40 : vector<9x128xf32>
    %42 = vector.broadcast %21 : vector<1x128xf32> to vector<9x128xf32>
    %43 = arith.addf %41, %42 : vector<9x128xf32>
    %44 = arith.truncf %43 : vector<9x128xf32> to vector<9x128xbf16>
    %45 = vector.shape_cast %44 : vector<9x128xbf16> to vector<1x9x128xbf16>
    %46 = vector.shape_cast %45 : vector<1x9x128xbf16> to vector<1x9x128xbf16>
    %47 = vector.broadcast %46 : vector<1x9x128xbf16> to vector<4x9x128xbf16>
    %c0_27 = arith.constant 0 : index
    %c0_28 = arith.constant 0 : index
    %c0_29 = arith.constant 0 : index
    %c0_30 = arith.constant 0 : index
    %48 = vector.load %arg8[%c0_27, %c0_28, %c0_29, %c0_30] : memref<2x4x128x32xbf16, #tpu.memory_space<vmem>>, vector<1x4x128x32xbf16>
    %49 = vector.shape_cast %48 : vector<1x4x128x32xbf16> to vector<4x128x32xbf16>
    "tpu.trace_start"() <{level = 10 : i32, message = "hnd,hdk->hnk"}> : () -> ()
    %cst_31 = arith.constant dense<0.000000e+00> : vector<4x9x32xf32>
    %50 = tpu.matmul %47, %49, %cst_31 {dimension_numbers = #tpu.dot_dimension_numbers<[2], [1], [1], [2], [0, 0, 0, 1, 1, 2], [0], [0]>} : vector<4x9x128xbf16>, vector<4x128x32xbf16>, vector<4x9x32xf32> -> vector<4x9x32xf32>
    "tpu.trace_stop"() : () -> ()
    %c0_32 = arith.constant 0 : index
    %c0_33 = arith.constant 0 : index
    %c0_34 = arith.constant 0 : index
    %c0_35 = arith.constant 0 : index
    %51 = vector.load %arg9[%c0_32, %c0_33, %c0_34, %c0_35] : memref<2x4x128x32xbf16, #tpu.memory_space<vmem>>, vector<1x4x128x32xbf16>
    %52 = vector.shape_cast %51 : vector<1x4x128x32xbf16> to vector<4x128x32xbf16>
    "tpu.trace_start"() <{level = 10 : i32, message = "hnd,hdk->hnk"}> : () -> ()
    %cst_36 = arith.constant dense<0.000000e+00> : vector<4x9x32xf32>
    %53 = tpu.matmul %47, %52, %cst_36 {dimension_numbers = #tpu.dot_dimension_numbers<[2], [1], [1], [2], [0, 0, 0, 1, 1, 2], [0], [0]>} : vector<4x9x128xbf16>, vector<4x128x32xbf16>, vector<4x9x32xf32> -> vector<4x9x32xf32>
    "tpu.trace_stop"() : () -> ()
    %c0_37 = arith.constant 0 : index
    %c0_38 = arith.constant 0 : index
    %c0_39 = arith.constant 0 : index
    %c0_40 = arith.constant 0 : index
    %54 = vector.load %arg10[%c0_37, %c0_38, %c0_39, %c0_40] : memref<2x4x128x32xbf16, #tpu.memory_space<vmem>>, vector<1x4x128x32xbf16>
    %55 = vector.shape_cast %54 : vector<1x4x128x32xbf16> to vector<4x128x32xbf16>
    "tpu.trace_start"() <{level = 10 : i32, message = "hnd,hdk->hnk"}> : () -> ()
    %cst_41 = arith.constant dense<0.000000e+00> : vector<4x9x32xf32>
    %56 = tpu.matmul %47, %55, %cst_41 {dimension_numbers = #tpu.dot_dimension_numbers<[2], [1], [1], [2], [0, 0, 0, 1, 1, 2], [0], [0]>} : vector<4x9x128xbf16>, vector<4x128x32xbf16>, vector<4x9x32xf32> -> vector<4x9x32xf32>
    "tpu.trace_stop"() : () -> ()
    %57 = arith.truncf %50 : vector<4x9x32xf32> to vector<4x9x32xbf16>
    %58 = arith.truncf %53 : vector<4x9x32xf32> to vector<4x9x32xbf16>
    "tpu.trace_start"() <{level = 10 : i32, message = "hik,hjk->hij"}> : () -> ()
    %cst_42 = arith.constant dense<0.000000e+00> : vector<4x9x9xf32>
    %59 = tpu.matmul %57, %58, %cst_42 {dimension_numbers = #tpu.dot_dimension_numbers<[2], [2], [1], [1], [0, 0, 0, 1, 1, 1], [0], [0]>} : vector<4x9x32xbf16>, vector<4x9x32xbf16>, vector<4x9x9xf32> -> vector<4x9x9xf32>
    "tpu.trace_stop"() : () -> ()
    %cst_43 = arith.constant 0.176776692 : f32
    %60 = vector.broadcast %cst_43 : f32 to vector<4x9x9xf32>
    %61 = arith.mulf %59, %60 : vector<4x9x9xf32>
    %cst_44 = arith.constant dense<0xFF800000> : vector<4x9xf32>
    %62 = vector.multi_reduction <maximumf>, %61, %cst_44 [2] : vector<4x9x9xf32> to vector<4x9xf32>
    %63 = vector.shape_cast %62 : vector<4x9xf32> to vector<4x9x1xf32>
    %64 = vector.broadcast %63 : vector<4x9x1xf32> to vector<4x9x9xf32>
    %65 = arith.subf %61, %64 : vector<4x9x9xf32>
    %66 = math.exp %65 : vector<4x9x9xf32>
    %cst_45 = arith.constant dense<0.000000e+00> : vector<4x9xf32>
    %67 = vector.multi_reduction <add>, %66, %cst_45 [2] : vector<4x9x9xf32> to vector<4x9xf32>
    %68 = vector.shape_cast %67 : vector<4x9xf32> to vector<4x9x1xf32>
    %69 = tpu.reciprocal %68 {approx = true} : vector<4x9x1xf32> -> vector<4x9x1xf32>
    %70 = vector.broadcast %69 : vector<4x9x1xf32> to vector<4x9x9xf32>
    %71 = arith.mulf %66, %70 : vector<4x9x9xf32>
    %72 = arith.truncf %71 : vector<4x9x9xf32> to vector<4x9x9xbf16>
    %73 = arith.truncf %56 : vector<4x9x32xf32> to vector<4x9x32xbf16>
    "tpu.trace_start"() <{level = 10 : i32, message = "hij,hjk->hik"}> : () -> ()
    %cst_46 = arith.constant dense<0.000000e+00> : vector<4x9x32xf32>
    %74 = tpu.matmul %72, %73, %cst_46 {dimension_numbers = #tpu.dot_dimension_numbers<[2], [1], [1], [2], [0, 0, 0, 1, 1, 2], [0], [0]>} : vector<4x9x9xbf16>, vector<4x9x32xbf16>, vector<4x9x32xf32> -> vector<4x9x32xf32>
    "tpu.trace_stop"() : () -> ()
    %75 = arith.truncf %74 : vector<4x9x32xf32> to vector<4x9x32xbf16>
    %c0_47 = arith.constant 0 : index
    %c0_48 = arith.constant 0 : index
    %c0_49 = arith.constant 0 : index
    %c0_50 = arith.constant 0 : index
    %76 = vector.load %arg11[%c0_47, %c0_48, %c0_49, %c0_50] : memref<2x4x32x128xbf16, #tpu.memory_space<vmem>>, vector<1x4x32x128xbf16>
    %77 = vector.shape_cast %76 : vector<1x4x32x128xbf16> to vector<4x32x128xbf16>
    "tpu.trace_start"() <{level = 10 : i32, message = "hik,hkd->hid"}> : () -> ()
    %cst_51 = arith.constant dense<0.000000e+00> : vector<4x9x128xf32>
    %78 = tpu.matmul %75, %77, %cst_51 {dimension_numbers = #tpu.dot_dimension_numbers<[2], [1], [1], [2], [0, 0, 0, 1, 1, 2], [0], [0]>} : vector<4x9x32xbf16>, vector<4x32x128xbf16>, vector<4x9x128xf32> -> vector<4x9x128xf32>
    "tpu.trace_stop"() : () -> ()
    %cst_52 = arith.constant dense<0.000000e+00> : vector<9x128xf32>
    %79 = vector.multi_reduction <add>, %78, %cst_52 [0] : vector<4x9x128xf32> to vector<9x128xf32>
    %80 = arith.addf %17, %79 : vector<9x128xf32>
    %c0_53 = arith.constant 0 : index
    %c0_54 = arith.constant 0 : index
    %c0_55 = arith.constant 0 : index
    %81 = vector.load %arg12[%c0_53, %c0_54, %c0_55] : memref<2x1x128xf32, #tpu.memory_space<vmem>>, vector<1x1x128xf32>
    %82 = vector.shape_cast %81 : vector<1x1x128xf32> to vector<1x128xf32>
    %83 = vector.broadcast %82 : vector<1x128xf32> to vector<9x128xf32>
    %84 = arith.addf %80, %83 : vector<9x128xf32>
    %c0_56 = arith.constant 0 : index
    %c0_57 = arith.constant 0 : index
    %c0_58 = arith.constant 0 : index
    %85 = vector.load %arg13[%c0_56, %c0_57, %c0_58] : memref<2x1x128xf32, #tpu.memory_space<vmem>>, vector<1x1x128xf32>
    %86 = vector.shape_cast %85 : vector<1x1x128xf32> to vector<1x128xf32>
    %c0_59 = arith.constant 0 : index
    %c0_60 = arith.constant 0 : index
    %c0_61 = arith.constant 0 : index
    %87 = vector.load %arg14[%c0_59, %c0_60, %c0_61] : memref<2x1x128xf32, #tpu.memory_space<vmem>>, vector<1x1x128xf32>
    %88 = vector.shape_cast %87 : vector<1x1x128xf32> to vector<1x128xf32>
    %cst_62 = arith.constant dense<0.000000e+00> : vector<9xf32>
    %89 = vector.multi_reduction <add>, %84, %cst_62 [1] : vector<9x128xf32> to vector<9xf32>
    %90 = vector.shape_cast %89 : vector<9xf32> to vector<9x1xf32>
    %cst_63 = arith.constant 1.280000e+02 : f32
    %91 = vector.broadcast %cst_63 : f32 to vector<9x1xf32>
    %92 = arith.divf %90, %91 : vector<9x1xf32>
    %93 = vector.broadcast %92 : vector<9x1xf32> to vector<9x128xf32>
    %94 = arith.subf %84, %93 : vector<9x128xf32>
    %95 = arith.mulf %94, %94 : vector<9x128xf32>
    %cst_64 = arith.constant dense<0.000000e+00> : vector<9xf32>
    %96 = vector.multi_reduction <add>, %95, %cst_64 [1] : vector<9x128xf32> to vector<9xf32>
    %97 = vector.shape_cast %96 : vector<9xf32> to vector<9x1xf32>
    %cst_65 = arith.constant 1.280000e+02 : f32
    %98 = vector.broadcast %cst_65 : f32 to vector<9x1xf32>
    %99 = arith.divf %97, %98 : vector<9x1xf32>
    %100 = vector.broadcast %92 : vector<9x1xf32> to vector<9x128xf32>
    %101 = arith.subf %84, %100 : vector<9x128xf32>
    %cst_66 = arith.constant 9.99999974E-6 : f32
    %102 = vector.broadcast %cst_66 : f32 to vector<9x1xf32>
    %103 = arith.addf %99, %102 : vector<9x1xf32>
    %104 = math.rsqrt %103 : vector<9x1xf32>
    %105 = vector.broadcast %104 : vector<9x1xf32> to vector<9x128xf32>
    %106 = arith.mulf %101, %105 : vector<9x128xf32>
    %107 = vector.broadcast %86 : vector<1x128xf32> to vector<9x128xf32>
    %108 = arith.mulf %106, %107 : vector<9x128xf32>
    %109 = vector.broadcast %88 : vector<1x128xf32> to vector<9x128xf32>
    %110 = arith.addf %108, %109 : vector<9x128xf32>
    %111 = arith.truncf %110 : vector<9x128xf32> to vector<9x128xbf16>
    %c0_67 = arith.constant 0 : index
    %c0_68 = arith.constant 0 : index
    %c0_69 = arith.constant 0 : index
    %112 = vector.load %arg15[%c0_67, %c0_68, %c0_69] : memref<2x128x256xbf16, #tpu.memory_space<vmem>>, vector<1x128x256xbf16>
    %113 = vector.shape_cast %112 : vector<1x128x256xbf16> to vector<128x256xbf16>
    %cst_70 = arith.constant dense<0.000000e+00> : vector<9x256xf32>
    %114 = tpu.matmul %111, %113, %cst_70 {dimension_numbers = #tpu.dot_dimension_numbers<[1], [0], [0], [1], [0, 0, 1, 1], [], []>} : vector<9x128xbf16>, vector<128x256xbf16>, vector<9x256xf32> -> vector<9x256xf32>
    %c0_71 = arith.constant 0 : index
    %c0_72 = arith.constant 0 : index
    %c0_73 = arith.constant 0 : index
    %115 = vector.load %arg16[%c0_71, %c0_72, %c0_73] : memref<2x1x256xf32, #tpu.memory_space<vmem>>, vector<1x1x256xf32>
    %116 = vector.shape_cast %115 : vector<1x1x256xf32> to vector<1x256xf32>
    %117 = vector.broadcast %116 : vector<1x256xf32> to vector<9x256xf32>
    %118 = arith.addf %114, %117 : vector<9x256xf32>
    %cst_74 = arith.constant 5.000000e-01 : f32
    %119 = vector.broadcast %cst_74 : f32 to vector<9x256xf32>
    %120 = arith.mulf %119, %118 : vector<9x256xf32>
    %cst_75 = arith.constant 0.707106769 : f32
    %121 = vector.broadcast %cst_75 : f32 to vector<9x256xf32>
    %122 = arith.mulf %118, %121 : vector<9x256xf32>
    %123 = math.absf %122 : vector<9x256xf32>
    %cst_76 = arith.constant 0.327591091 : f32
    %124 = vector.broadcast %cst_76 : f32 to vector<9x256xf32>
    %125 = arith.mulf %124, %123 : vector<9x256xf32>
    %cst_77 = arith.constant 1.000000e+00 : f32
    %126 = vector.broadcast %cst_77 : f32 to vector<9x256xf32>
    %127 = arith.addf %126, %125 : vector<9x256xf32>
    %cst_78 = arith.constant 1.000000e+00 : f32
    %128 = vector.broadcast %cst_78 : f32 to vector<9x256xf32>
    %129 = arith.divf %128, %127 : vector<9x256xf32>
    %cst_79 = arith.constant 1.06140542 : f32
    %130 = vector.broadcast %cst_79 : f32 to vector<9x256xf32>
    %131 = arith.mulf %130, %129 : vector<9x256xf32>
    %cst_80 = arith.constant -1.45315206 : f32
    %132 = vector.broadcast %cst_80 : f32 to vector<9x256xf32>
    %133 = arith.addf %131, %132 : vector<9x256xf32>
    %134 = arith.mulf %133, %129 : vector<9x256xf32>
    %cst_81 = arith.constant 1.42141378 : f32
    %135 = vector.broadcast %cst_81 : f32 to vector<9x256xf32>
    %136 = arith.addf %134, %135 : vector<9x256xf32>
    %137 = arith.mulf %136, %129 : vector<9x256xf32>
    %cst_82 = arith.constant -0.284496725 : f32
    %138 = vector.broadcast %cst_82 : f32 to vector<9x256xf32>
    %139 = arith.addf %137, %138 : vector<9x256xf32>
    %140 = arith.mulf %139, %129 : vector<9x256xf32>
    %cst_83 = arith.constant 0.254829586 : f32
    %141 = vector.broadcast %cst_83 : f32 to vector<9x256xf32>
    %142 = arith.addf %140, %141 : vector<9x256xf32>
    %143 = arith.mulf %142, %129 : vector<9x256xf32>
    %144 = arith.mulf %123, %123 : vector<9x256xf32>
    %cst_84 = arith.constant 0.000000e+00 : f32
    %145 = vector.broadcast %cst_84 : f32 to vector<9x256xf32>
    %146 = arith.subf %145, %144 : vector<9x256xf32>
    %147 = math.exp %146 : vector<9x256xf32>
    %148 = arith.mulf %143, %147 : vector<9x256xf32>
    %cst_85 = arith.constant 1.000000e+00 : f32
    %149 = vector.broadcast %cst_85 : f32 to vector<9x256xf32>
    %150 = arith.subf %149, %148 : vector<9x256xf32>
    %cst_86 = arith.constant 0.000000e+00 : f32
    %151 = vector.broadcast %cst_86 : f32 to vector<9x256xf32>
    %152 = arith.cmpf olt, %122, %151 : vector<9x256xf32>
    %cst_87 = arith.constant 0.000000e+00 : f32
    %153 = vector.broadcast %cst_87 : f32 to vector<9x256xf32>
    %154 = arith.subf %153, %150 : vector<9x256xf32>
    %155 = arith.select %152, %154, %150 : vector<9x256xi1>, vector<9x256xf32>
    %cst_88 = arith.constant 1.000000e+00 : f32
    %156 = vector.broadcast %cst_88 : f32 to vector<9x256xf32>
    %157 = arith.addf %156, %155 : vector<9x256xf32>
    %158 = arith.mulf %120, %157 : vector<9x256xf32>
    %159 = arith.truncf %158 : vector<9x256xf32> to vector<9x256xbf16>
    %c0_89 = arith.constant 0 : index
    %c0_90 = arith.constant 0 : index
    %c0_91 = arith.constant 0 : index
    %160 = vector.load %arg17[%c0_89, %c0_90, %c0_91] : memref<2x256x128xbf16, #tpu.memory_space<vmem>>, vector<1x256x128xbf16>
    %161 = vector.shape_cast %160 : vector<1x256x128xbf16> to vector<256x128xbf16>
    %cst_92 = arith.constant dense<0.000000e+00> : vector<9x128xf32>
    %162 = tpu.matmul %159, %161, %cst_92 {dimension_numbers = #tpu.dot_dimension_numbers<[1], [0], [0], [1], [0, 0, 1, 1], [], []>} : vector<9x256xbf16>, vector<256x128xbf16>, vector<9x128xf32> -> vector<9x128xf32>
    %163 = arith.addf %84, %162 : vector<9x128xf32>
    %c0_93 = arith.constant 0 : index
    %c0_94 = arith.constant 0 : index
    %c0_95 = arith.constant 0 : index
    %164 = vector.load %arg18[%c0_93, %c0_94, %c0_95] : memref<2x1x128xf32, #tpu.memory_space<vmem>>, vector<1x1x128xf32>
    %165 = vector.shape_cast %164 : vector<1x1x128xf32> to vector<1x128xf32>
    %166 = vector.broadcast %165 : vector<1x128xf32> to vector<9x128xf32>
    %167 = arith.addf %163, %166 : vector<9x128xf32>
    %c1 = arith.constant 1 : index
    %c0_96 = arith.constant 0 : index
    %c0_97 = arith.constant 0 : index
    %168 = vector.load %arg6[%c1, %c0_96, %c0_97] : memref<2x1x128xf32, #tpu.memory_space<vmem>>, vector<1x1x128xf32>
    %169 = vector.shape_cast %168 : vector<1x1x128xf32> to vector<1x128xf32>
    %c1_98 = arith.constant 1 : index
    %c0_99 = arith.constant 0 : index
    %c0_100 = arith.constant 0 : index
    %170 = vector.load %arg7[%c1_98, %c0_99, %c0_100] : memref<2x1x128xf32, #tpu.memory_space<vmem>>, vector<1x1x128xf32>
    %171 = vector.shape_cast %170 : vector<1x1x128xf32> to vector<1x128xf32>
    %cst_101 = arith.constant dense<0.000000e+00> : vector<9xf32>
    %172 = vector.multi_reduction <add>, %167, %cst_101 [1] : vector<9x128xf32> to vector<9xf32>
    %173 = vector.shape_cast %172 : vector<9xf32> to vector<9x1xf32>
    %cst_102 = arith.constant 1.280000e+02 : f32
    %174 = vector.broadcast %cst_102 : f32 to vector<9x1xf32>
    %175 = arith.divf %173, %174 : vector<9x1xf32>
    %176 = vector.broadcast %175 : vector<9x1xf32> to vector<9x128xf32>
    %177 = arith.subf %167, %176 : vector<9x128xf32>
    %178 = arith.mulf %177, %177 : vector<9x128xf32>
    %cst_103 = arith.constant dense<0.000000e+00> : vector<9xf32>
    %179 = vector.multi_reduction <add>, %178, %cst_103 [1] : vector<9x128xf32> to vector<9xf32>
    %180 = vector.shape_cast %179 : vector<9xf32> to vector<9x1xf32>
    %cst_104 = arith.constant 1.280000e+02 : f32
    %181 = vector.broadcast %cst_104 : f32 to vector<9x1xf32>
    %182 = arith.divf %180, %181 : vector<9x1xf32>
    %183 = vector.broadcast %175 : vector<9x1xf32> to vector<9x128xf32>
    %184 = arith.subf %167, %183 : vector<9x128xf32>
    %cst_105 = arith.constant 9.99999974E-6 : f32
    %185 = vector.broadcast %cst_105 : f32 to vector<9x1xf32>
    %186 = arith.addf %182, %185 : vector<9x1xf32>
    %187 = math.rsqrt %186 : vector<9x1xf32>
    %188 = vector.broadcast %187 : vector<9x1xf32> to vector<9x128xf32>
    %189 = arith.mulf %184, %188 : vector<9x128xf32>
    %190 = vector.broadcast %169 : vector<1x128xf32> to vector<9x128xf32>
    %191 = arith.mulf %189, %190 : vector<9x128xf32>
    %192 = vector.broadcast %171 : vector<1x128xf32> to vector<9x128xf32>
    %193 = arith.addf %191, %192 : vector<9x128xf32>
    %194 = arith.truncf %193 : vector<9x128xf32> to vector<9x128xbf16>
    %195 = vector.shape_cast %194 : vector<9x128xbf16> to vector<1x9x128xbf16>
    %196 = vector.shape_cast %195 : vector<1x9x128xbf16> to vector<1x9x128xbf16>
    %197 = vector.broadcast %196 : vector<1x9x128xbf16> to vector<4x9x128xbf16>
    %c1_106 = arith.constant 1 : index
    %c0_107 = arith.constant 0 : index
    %c0_108 = arith.constant 0 : index
    %c0_109 = arith.constant 0 : index
    %198 = vector.load %arg8[%c1_106, %c0_107, %c0_108, %c0_109] : memref<2x4x128x32xbf16, #tpu.memory_space<vmem>>, vector<1x4x128x32xbf16>
    %199 = vector.shape_cast %198 : vector<1x4x128x32xbf16> to vector<4x128x32xbf16>
    "tpu.trace_start"() <{level = 10 : i32, message = "hnd,hdk->hnk"}> : () -> ()
    %cst_110 = arith.constant dense<0.000000e+00> : vector<4x9x32xf32>
    %200 = tpu.matmul %197, %199, %cst_110 {dimension_numbers = #tpu.dot_dimension_numbers<[2], [1], [1], [2], [0, 0, 0, 1, 1, 2], [0], [0]>} : vector<4x9x128xbf16>, vector<4x128x32xbf16>, vector<4x9x32xf32> -> vector<4x9x32xf32>
    "tpu.trace_stop"() : () -> ()
    %c1_111 = arith.constant 1 : index
    %c0_112 = arith.constant 0 : index
    %c0_113 = arith.constant 0 : index
    %c0_114 = arith.constant 0 : index
    %201 = vector.load %arg9[%c1_111, %c0_112, %c0_113, %c0_114] : memref<2x4x128x32xbf16, #tpu.memory_space<vmem>>, vector<1x4x128x32xbf16>
    %202 = vector.shape_cast %201 : vector<1x4x128x32xbf16> to vector<4x128x32xbf16>
    "tpu.trace_start"() <{level = 10 : i32, message = "hnd,hdk->hnk"}> : () -> ()
    %cst_115 = arith.constant dense<0.000000e+00> : vector<4x9x32xf32>
    %203 = tpu.matmul %197, %202, %cst_115 {dimension_numbers = #tpu.dot_dimension_numbers<[2], [1], [1], [2], [0, 0, 0, 1, 1, 2], [0], [0]>} : vector<4x9x128xbf16>, vector<4x128x32xbf16>, vector<4x9x32xf32> -> vector<4x9x32xf32>
    "tpu.trace_stop"() : () -> ()
    %c1_116 = arith.constant 1 : index
    %c0_117 = arith.constant 0 : index
    %c0_118 = arith.constant 0 : index
    %c0_119 = arith.constant 0 : index
    %204 = vector.load %arg10[%c1_116, %c0_117, %c0_118, %c0_119] : memref<2x4x128x32xbf16, #tpu.memory_space<vmem>>, vector<1x4x128x32xbf16>
    %205 = vector.shape_cast %204 : vector<1x4x128x32xbf16> to vector<4x128x32xbf16>
    "tpu.trace_start"() <{level = 10 : i32, message = "hnd,hdk->hnk"}> : () -> ()
    %cst_120 = arith.constant dense<0.000000e+00> : vector<4x9x32xf32>
    %206 = tpu.matmul %197, %205, %cst_120 {dimension_numbers = #tpu.dot_dimension_numbers<[2], [1], [1], [2], [0, 0, 0, 1, 1, 2], [0], [0]>} : vector<4x9x128xbf16>, vector<4x128x32xbf16>, vector<4x9x32xf32> -> vector<4x9x32xf32>
    "tpu.trace_stop"() : () -> ()
    %207 = arith.truncf %200 : vector<4x9x32xf32> to vector<4x9x32xbf16>
    %208 = arith.truncf %203 : vector<4x9x32xf32> to vector<4x9x32xbf16>
    "tpu.trace_start"() <{level = 10 : i32, message = "hik,hjk->hij"}> : () -> ()
    %cst_121 = arith.constant dense<0.000000e+00> : vector<4x9x9xf32>
    %209 = tpu.matmul %207, %208, %cst_121 {dimension_numbers = #tpu.dot_dimension_numbers<[2], [2], [1], [1], [0, 0, 0, 1, 1, 1], [0], [0]>} : vector<4x9x32xbf16>, vector<4x9x32xbf16>, vector<4x9x9xf32> -> vector<4x9x9xf32>
    "tpu.trace_stop"() : () -> ()
    %cst_122 = arith.constant 0.176776692 : f32
    %210 = vector.broadcast %cst_122 : f32 to vector<4x9x9xf32>
    %211 = arith.mulf %209, %210 : vector<4x9x9xf32>
    %cst_123 = arith.constant dense<0xFF800000> : vector<4x9xf32>
    %212 = vector.multi_reduction <maximumf>, %211, %cst_123 [2] : vector<4x9x9xf32> to vector<4x9xf32>
    %213 = vector.shape_cast %212 : vector<4x9xf32> to vector<4x9x1xf32>
    %214 = vector.broadcast %213 : vector<4x9x1xf32> to vector<4x9x9xf32>
    %215 = arith.subf %211, %214 : vector<4x9x9xf32>
    %216 = math.exp %215 : vector<4x9x9xf32>
    %cst_124 = arith.constant dense<0.000000e+00> : vector<4x9xf32>
    %217 = vector.multi_reduction <add>, %216, %cst_124 [2] : vector<4x9x9xf32> to vector<4x9xf32>
    %218 = vector.shape_cast %217 : vector<4x9xf32> to vector<4x9x1xf32>
    %219 = tpu.reciprocal %218 {approx = true} : vector<4x9x1xf32> -> vector<4x9x1xf32>
    %220 = vector.broadcast %219 : vector<4x9x1xf32> to vector<4x9x9xf32>
    %221 = arith.mulf %216, %220 : vector<4x9x9xf32>
    %222 = arith.truncf %221 : vector<4x9x9xf32> to vector<4x9x9xbf16>
    %223 = arith.truncf %206 : vector<4x9x32xf32> to vector<4x9x32xbf16>
    "tpu.trace_start"() <{level = 10 : i32, message = "hij,hjk->hik"}> : () -> ()
    %cst_125 = arith.constant dense<0.000000e+00> : vector<4x9x32xf32>
    %224 = tpu.matmul %222, %223, %cst_125 {dimension_numbers = #tpu.dot_dimension_numbers<[2], [1], [1], [2], [0, 0, 0, 1, 1, 2], [0], [0]>} : vector<4x9x9xbf16>, vector<4x9x32xbf16>, vector<4x9x32xf32> -> vector<4x9x32xf32>
    "tpu.trace_stop"() : () -> ()
    %225 = arith.truncf %224 : vector<4x9x32xf32> to vector<4x9x32xbf16>
    %c1_126 = arith.constant 1 : index
    %c0_127 = arith.constant 0 : index
    %c0_128 = arith.constant 0 : index
    %c0_129 = arith.constant 0 : index
    %226 = vector.load %arg11[%c1_126, %c0_127, %c0_128, %c0_129] : memref<2x4x32x128xbf16, #tpu.memory_space<vmem>>, vector<1x4x32x128xbf16>
    %227 = vector.shape_cast %226 : vector<1x4x32x128xbf16> to vector<4x32x128xbf16>
    "tpu.trace_start"() <{level = 10 : i32, message = "hik,hkd->hid"}> : () -> ()
    %cst_130 = arith.constant dense<0.000000e+00> : vector<4x9x128xf32>
    %228 = tpu.matmul %225, %227, %cst_130 {dimension_numbers = #tpu.dot_dimension_numbers<[2], [1], [1], [2], [0, 0, 0, 1, 1, 2], [0], [0]>} : vector<4x9x32xbf16>, vector<4x32x128xbf16>, vector<4x9x128xf32> -> vector<4x9x128xf32>
    "tpu.trace_stop"() : () -> ()
    %cst_131 = arith.constant dense<0.000000e+00> : vector<9x128xf32>
    %229 = vector.multi_reduction <add>, %228, %cst_131 [0] : vector<4x9x128xf32> to vector<9x128xf32>
    %230 = arith.addf %167, %229 : vector<9x128xf32>
    %c1_132 = arith.constant 1 : index
    %c0_133 = arith.constant 0 : index
    %c0_134 = arith.constant 0 : index
    %231 = vector.load %arg12[%c1_132, %c0_133, %c0_134] : memref<2x1x128xf32, #tpu.memory_space<vmem>>, vector<1x1x128xf32>
    %232 = vector.shape_cast %231 : vector<1x1x128xf32> to vector<1x128xf32>
    %233 = vector.broadcast %232 : vector<1x128xf32> to vector<9x128xf32>
    %234 = arith.addf %230, %233 : vector<9x128xf32>
    %c1_135 = arith.constant 1 : index
    %c0_136 = arith.constant 0 : index
    %c0_137 = arith.constant 0 : index
    %235 = vector.load %arg13[%c1_135, %c0_136, %c0_137] : memref<2x1x128xf32, #tpu.memory_space<vmem>>, vector<1x1x128xf32>
    %236 = vector.shape_cast %235 : vector<1x1x128xf32> to vector<1x128xf32>
    %c1_138 = arith.constant 1 : index
    %c0_139 = arith.constant 0 : index
    %c0_140 = arith.constant 0 : index
    %237 = vector.load %arg14[%c1_138, %c0_139, %c0_140] : memref<2x1x128xf32, #tpu.memory_space<vmem>>, vector<1x1x128xf32>
    %238 = vector.shape_cast %237 : vector<1x1x128xf32> to vector<1x128xf32>
    %cst_141 = arith.constant dense<0.000000e+00> : vector<9xf32>
    %239 = vector.multi_reduction <add>, %234, %cst_141 [1] : vector<9x128xf32> to vector<9xf32>
    %240 = vector.shape_cast %239 : vector<9xf32> to vector<9x1xf32>
    %cst_142 = arith.constant 1.280000e+02 : f32
    %241 = vector.broadcast %cst_142 : f32 to vector<9x1xf32>
    %242 = arith.divf %240, %241 : vector<9x1xf32>
    %243 = vector.broadcast %242 : vector<9x1xf32> to vector<9x128xf32>
    %244 = arith.subf %234, %243 : vector<9x128xf32>
    %245 = arith.mulf %244, %244 : vector<9x128xf32>
    %cst_143 = arith.constant dense<0.000000e+00> : vector<9xf32>
    %246 = vector.multi_reduction <add>, %245, %cst_143 [1] : vector<9x128xf32> to vector<9xf32>
    %247 = vector.shape_cast %246 : vector<9xf32> to vector<9x1xf32>
    %cst_144 = arith.constant 1.280000e+02 : f32
    %248 = vector.broadcast %cst_144 : f32 to vector<9x1xf32>
    %249 = arith.divf %247, %248 : vector<9x1xf32>
    %250 = vector.broadcast %242 : vector<9x1xf32> to vector<9x128xf32>
    %251 = arith.subf %234, %250 : vector<9x128xf32>
    %cst_145 = arith.constant 9.99999974E-6 : f32
    %252 = vector.broadcast %cst_145 : f32 to vector<9x1xf32>
    %253 = arith.addf %249, %252 : vector<9x1xf32>
    %254 = math.rsqrt %253 : vector<9x1xf32>
    %255 = vector.broadcast %254 : vector<9x1xf32> to vector<9x128xf32>
    %256 = arith.mulf %251, %255 : vector<9x128xf32>
    %257 = vector.broadcast %236 : vector<1x128xf32> to vector<9x128xf32>
    %258 = arith.mulf %256, %257 : vector<9x128xf32>
    %259 = vector.broadcast %238 : vector<1x128xf32> to vector<9x128xf32>
    %260 = arith.addf %258, %259 : vector<9x128xf32>
    %261 = arith.truncf %260 : vector<9x128xf32> to vector<9x128xbf16>
    %c1_146 = arith.constant 1 : index
    %c0_147 = arith.constant 0 : index
    %c0_148 = arith.constant 0 : index
    %262 = vector.load %arg15[%c1_146, %c0_147, %c0_148] : memref<2x128x256xbf16, #tpu.memory_space<vmem>>, vector<1x128x256xbf16>
    %263 = vector.shape_cast %262 : vector<1x128x256xbf16> to vector<128x256xbf16>
    %cst_149 = arith.constant dense<0.000000e+00> : vector<9x256xf32>
    %264 = tpu.matmul %261, %263, %cst_149 {dimension_numbers = #tpu.dot_dimension_numbers<[1], [0], [0], [1], [0, 0, 1, 1], [], []>} : vector<9x128xbf16>, vector<128x256xbf16>, vector<9x256xf32> -> vector<9x256xf32>
    %c1_150 = arith.constant 1 : index
    %c0_151 = arith.constant 0 : index
    %c0_152 = arith.constant 0 : index
    %265 = vector.load %arg16[%c1_150, %c0_151, %c0_152] : memref<2x1x256xf32, #tpu.memory_space<vmem>>, vector<1x1x256xf32>
    %266 = vector.shape_cast %265 : vector<1x1x256xf32> to vector<1x256xf32>
    %267 = vector.broadcast %266 : vector<1x256xf32> to vector<9x256xf32>
    %268 = arith.addf %264, %267 : vector<9x256xf32>
    %cst_153 = arith.constant 5.000000e-01 : f32
    %269 = vector.broadcast %cst_153 : f32 to vector<9x256xf32>
    %270 = arith.mulf %269, %268 : vector<9x256xf32>
    %cst_154 = arith.constant 0.707106769 : f32
    %271 = vector.broadcast %cst_154 : f32 to vector<9x256xf32>
    %272 = arith.mulf %268, %271 : vector<9x256xf32>
    %273 = math.absf %272 : vector<9x256xf32>
    %cst_155 = arith.constant 0.327591091 : f32
    %274 = vector.broadcast %cst_155 : f32 to vector<9x256xf32>
    %275 = arith.mulf %274, %273 : vector<9x256xf32>
    %cst_156 = arith.constant 1.000000e+00 : f32
    %276 = vector.broadcast %cst_156 : f32 to vector<9x256xf32>
    %277 = arith.addf %276, %275 : vector<9x256xf32>
    %cst_157 = arith.constant 1.000000e+00 : f32
    %278 = vector.broadcast %cst_157 : f32 to vector<9x256xf32>
    %279 = arith.divf %278, %277 : vector<9x256xf32>
    %cst_158 = arith.constant 1.06140542 : f32
    %280 = vector.broadcast %cst_158 : f32 to vector<9x256xf32>
    %281 = arith.mulf %280, %279 : vector<9x256xf32>
    %cst_159 = arith.constant -1.45315206 : f32
    %282 = vector.broadcast %cst_159 : f32 to vector<9x256xf32>
    %283 = arith.addf %281, %282 : vector<9x256xf32>
    %284 = arith.mulf %283, %279 : vector<9x256xf32>
    %cst_160 = arith.constant 1.42141378 : f32
    %285 = vector.broadcast %cst_160 : f32 to vector<9x256xf32>
    %286 = arith.addf %284, %285 : vector<9x256xf32>
    %287 = arith.mulf %286, %279 : vector<9x256xf32>
    %cst_161 = arith.constant -0.284496725 : f32
    %288 = vector.broadcast %cst_161 : f32 to vector<9x256xf32>
    %289 = arith.addf %287, %288 : vector<9x256xf32>
    %290 = arith.mulf %289, %279 : vector<9x256xf32>
    %cst_162 = arith.constant 0.254829586 : f32
    %291 = vector.broadcast %cst_162 : f32 to vector<9x256xf32>
    %292 = arith.addf %290, %291 : vector<9x256xf32>
    %293 = arith.mulf %292, %279 : vector<9x256xf32>
    %294 = arith.mulf %273, %273 : vector<9x256xf32>
    %cst_163 = arith.constant 0.000000e+00 : f32
    %295 = vector.broadcast %cst_163 : f32 to vector<9x256xf32>
    %296 = arith.subf %295, %294 : vector<9x256xf32>
    %297 = math.exp %296 : vector<9x256xf32>
    %298 = arith.mulf %293, %297 : vector<9x256xf32>
    %cst_164 = arith.constant 1.000000e+00 : f32
    %299 = vector.broadcast %cst_164 : f32 to vector<9x256xf32>
    %300 = arith.subf %299, %298 : vector<9x256xf32>
    %cst_165 = arith.constant 0.000000e+00 : f32
    %301 = vector.broadcast %cst_165 : f32 to vector<9x256xf32>
    %302 = arith.cmpf olt, %272, %301 : vector<9x256xf32>
    %cst_166 = arith.constant 0.000000e+00 : f32
    %303 = vector.broadcast %cst_166 : f32 to vector<9x256xf32>
    %304 = arith.subf %303, %300 : vector<9x256xf32>
    %305 = arith.select %302, %304, %300 : vector<9x256xi1>, vector<9x256xf32>
    %cst_167 = arith.constant 1.000000e+00 : f32
    %306 = vector.broadcast %cst_167 : f32 to vector<9x256xf32>
    %307 = arith.addf %306, %305 : vector<9x256xf32>
    %308 = arith.mulf %270, %307 : vector<9x256xf32>
    %309 = arith.truncf %308 : vector<9x256xf32> to vector<9x256xbf16>
    %c1_168 = arith.constant 1 : index
    %c0_169 = arith.constant 0 : index
    %c0_170 = arith.constant 0 : index
    %310 = vector.load %arg17[%c1_168, %c0_169, %c0_170] : memref<2x256x128xbf16, #tpu.memory_space<vmem>>, vector<1x256x128xbf16>
    %311 = vector.shape_cast %310 : vector<1x256x128xbf16> to vector<256x128xbf16>
    %cst_171 = arith.constant dense<0.000000e+00> : vector<9x128xf32>
    %312 = tpu.matmul %309, %311, %cst_171 {dimension_numbers = #tpu.dot_dimension_numbers<[1], [0], [0], [1], [0, 0, 1, 1], [], []>} : vector<9x256xbf16>, vector<256x128xbf16>, vector<9x128xf32> -> vector<9x128xf32>
    %313 = arith.addf %234, %312 : vector<9x128xf32>
    %c1_172 = arith.constant 1 : index
    %c0_173 = arith.constant 0 : index
    %c0_174 = arith.constant 0 : index
    %314 = vector.load %arg18[%c1_172, %c0_173, %c0_174] : memref<2x1x128xf32, #tpu.memory_space<vmem>>, vector<1x1x128xf32>
    %315 = vector.shape_cast %314 : vector<1x1x128xf32> to vector<1x128xf32>
    %316 = vector.broadcast %315 : vector<1x128xf32> to vector<9x128xf32>
    %317 = arith.addf %313, %316 : vector<9x128xf32>
    %318 = vector.extract_strided_slice %317 {offsets = [8, 0], sizes = [1, 128], strides = [1, 1]} : vector<9x128xf32> to vector<1x128xf32>
    %c0_175 = arith.constant 0 : index
    %c0_176 = arith.constant 0 : index
    %319 = vector.load %arg19[%c0_175, %c0_176] : memref<1x128xf32, #tpu.memory_space<vmem>>, vector<1x128xf32>
    %c0_177 = arith.constant 0 : index
    %c0_178 = arith.constant 0 : index
    %320 = vector.load %arg20[%c0_177, %c0_178] : memref<1x128xf32, #tpu.memory_space<vmem>>, vector<1x128xf32>
    %cst_179 = arith.constant dense<0.000000e+00> : vector<1xf32>
    %321 = vector.multi_reduction <add>, %318, %cst_179 [1] : vector<1x128xf32> to vector<1xf32>
    %322 = vector.shape_cast %321 : vector<1xf32> to vector<1x1xf32>
    %cst_180 = arith.constant 1.280000e+02 : f32
    %323 = vector.broadcast %cst_180 : f32 to vector<1x1xf32>
    %324 = arith.divf %322, %323 : vector<1x1xf32>
    %325 = vector.broadcast %324 : vector<1x1xf32> to vector<1x128xf32>
    %326 = arith.subf %318, %325 : vector<1x128xf32>
    %327 = arith.mulf %326, %326 : vector<1x128xf32>
    %cst_181 = arith.constant dense<0.000000e+00> : vector<1xf32>
    %328 = vector.multi_reduction <add>, %327, %cst_181 [1] : vector<1x128xf32> to vector<1xf32>
    %329 = vector.shape_cast %328 : vector<1xf32> to vector<1x1xf32>
    %cst_182 = arith.constant 1.280000e+02 : f32
    %330 = vector.broadcast %cst_182 : f32 to vector<1x1xf32>
    %331 = arith.divf %329, %330 : vector<1x1xf32>
    %332 = vector.broadcast %324 : vector<1x1xf32> to vector<1x128xf32>
    %333 = arith.subf %318, %332 : vector<1x128xf32>
    %cst_183 = arith.constant 9.99999974E-6 : f32
    %334 = vector.broadcast %cst_183 : f32 to vector<1x1xf32>
    %335 = arith.addf %331, %334 : vector<1x1xf32>
    %336 = math.rsqrt %335 : vector<1x1xf32>
    %337 = vector.broadcast %336 : vector<1x1xf32> to vector<1x128xf32>
    %338 = arith.mulf %333, %337 : vector<1x128xf32>
    %339 = arith.mulf %338, %319 : vector<1x128xf32>
    %340 = arith.addf %339, %320 : vector<1x128xf32>
    %341 = arith.truncf %340 : vector<1x128xf32> to vector<1x128xbf16>
    %c0_184 = arith.constant 0 : index
    %c0_185 = arith.constant 0 : index
    %342 = vector.load %arg21[%c0_184, %c0_185] : memref<128x256xbf16, #tpu.memory_space<vmem>>, vector<128x256xbf16>
    %cst_186 = arith.constant dense<0.000000e+00> : vector<1x256xf32>
    %343 = tpu.matmul %341, %342, %cst_186 {dimension_numbers = #tpu.dot_dimension_numbers<[1], [0], [0], [1], [0, 0, 1, 1], [], []>} : vector<1x128xbf16>, vector<128x256xbf16>, vector<1x256xf32> -> vector<1x256xf32>
    %c0_187 = arith.constant 0 : index
    %c0_188 = arith.constant 0 : index
    %344 = vector.load %arg22[%c0_187, %c0_188] : memref<1x256xf32, #tpu.memory_space<vmem>>, vector<1x256xf32>
    %345 = arith.addf %343, %344 : vector<1x256xf32>
    %cst_189 = arith.constant 5.000000e-01 : f32
    %346 = vector.broadcast %cst_189 : f32 to vector<1x256xf32>
    %347 = arith.mulf %346, %345 : vector<1x256xf32>
    %cst_190 = arith.constant 0.707106769 : f32
    %348 = vector.broadcast %cst_190 : f32 to vector<1x256xf32>
    %349 = arith.mulf %345, %348 : vector<1x256xf32>
    %350 = math.absf %349 : vector<1x256xf32>
    %cst_191 = arith.constant 0.327591091 : f32
    %351 = vector.broadcast %cst_191 : f32 to vector<1x256xf32>
    %352 = arith.mulf %351, %350 : vector<1x256xf32>
    %cst_192 = arith.constant 1.000000e+00 : f32
    %353 = vector.broadcast %cst_192 : f32 to vector<1x256xf32>
    %354 = arith.addf %353, %352 : vector<1x256xf32>
    %cst_193 = arith.constant 1.000000e+00 : f32
    %355 = vector.broadcast %cst_193 : f32 to vector<1x256xf32>
    %356 = arith.divf %355, %354 : vector<1x256xf32>
    %cst_194 = arith.constant 1.06140542 : f32
    %357 = vector.broadcast %cst_194 : f32 to vector<1x256xf32>
    %358 = arith.mulf %357, %356 : vector<1x256xf32>
    %cst_195 = arith.constant -1.45315206 : f32
    %359 = vector.broadcast %cst_195 : f32 to vector<1x256xf32>
    %360 = arith.addf %358, %359 : vector<1x256xf32>
    %361 = arith.mulf %360, %356 : vector<1x256xf32>
    %cst_196 = arith.constant 1.42141378 : f32
    %362 = vector.broadcast %cst_196 : f32 to vector<1x256xf32>
    %363 = arith.addf %361, %362 : vector<1x256xf32>
    %364 = arith.mulf %363, %356 : vector<1x256xf32>
    %cst_197 = arith.constant -0.284496725 : f32
    %365 = vector.broadcast %cst_197 : f32 to vector<1x256xf32>
    %366 = arith.addf %364, %365 : vector<1x256xf32>
    %367 = arith.mulf %366, %356 : vector<1x256xf32>
    %cst_198 = arith.constant 0.254829586 : f32
    %368 = vector.broadcast %cst_198 : f32 to vector<1x256xf32>
    %369 = arith.addf %367, %368 : vector<1x256xf32>
    %370 = arith.mulf %369, %356 : vector<1x256xf32>
    %371 = arith.mulf %350, %350 : vector<1x256xf32>
    %cst_199 = arith.constant 0.000000e+00 : f32
    %372 = vector.broadcast %cst_199 : f32 to vector<1x256xf32>
    %373 = arith.subf %372, %371 : vector<1x256xf32>
    %374 = math.exp %373 : vector<1x256xf32>
    %375 = arith.mulf %370, %374 : vector<1x256xf32>
    %cst_200 = arith.constant 1.000000e+00 : f32
    %376 = vector.broadcast %cst_200 : f32 to vector<1x256xf32>
    %377 = arith.subf %376, %375 : vector<1x256xf32>
    %cst_201 = arith.constant 0.000000e+00 : f32
    %378 = vector.broadcast %cst_201 : f32 to vector<1x256xf32>
    %379 = arith.cmpf olt, %349, %378 : vector<1x256xf32>
    %cst_202 = arith.constant 0.000000e+00 : f32
    %380 = vector.broadcast %cst_202 : f32 to vector<1x256xf32>
    %381 = arith.subf %380, %377 : vector<1x256xf32>
    %382 = arith.select %379, %381, %377 : vector<1x256xi1>, vector<1x256xf32>
    %cst_203 = arith.constant 1.000000e+00 : f32
    %383 = vector.broadcast %cst_203 : f32 to vector<1x256xf32>
    %384 = arith.addf %383, %382 : vector<1x256xf32>
    %385 = arith.mulf %347, %384 : vector<1x256xf32>
    %386 = arith.truncf %385 : vector<1x256xf32> to vector<1x256xbf16>
    %c0_204 = arith.constant 0 : index
    %c0_205 = arith.constant 0 : index
    %387 = vector.load %arg23[%c0_204, %c0_205] : memref<256x10xbf16, #tpu.memory_space<vmem>>, vector<256x10xbf16>
    %cst_206 = arith.constant dense<0.000000e+00> : vector<1x10xf32>
    %388 = tpu.matmul %386, %387, %cst_206 {dimension_numbers = #tpu.dot_dimension_numbers<[1], [0], [0], [1], [0, 0, 1, 1], [], []>} : vector<1x256xbf16>, vector<256x10xbf16>, vector<1x10xf32> -> vector<1x10xf32>
    %c0_207 = arith.constant 0 : index
    %c0_208 = arith.constant 0 : index
    %389 = vector.load %arg24[%c0_207, %c0_208] : memref<1x10xf32, #tpu.memory_space<vmem>>, vector<1x10xf32>
    %390 = arith.addf %388, %389 : vector<1x10xf32>
    %c0_209 = arith.constant 0 : index
    %c0_210 = arith.constant 0 : index
    %c0_211 = arith.constant 0 : index
    %391 = vector.load %arg25[%c0_209, %c0_210, %c0_211] : memref<1x1x10xf32, #tpu.memory_space<vmem>>, vector<1x1x10xf32>
    %392 = vector.shape_cast %391 : vector<1x1x10xf32> to vector<1x10xf32>
    %393 = vector.shape_cast %390 : vector<1x10xf32> to vector<1x1x10xf32>
    tpu.vector_store %arg25[%c0_209, %c0_210, %c0_211], %393 {strides = array<i32>} : memref<1x1x10xf32, #tpu.memory_space<vmem>>, vector<1x1x10xf32>,
    return
  }
  func.func @transform_0(%arg0: i32) -> (i32, i32, i32) {
    %c0_i32 = arith.constant 0 : i32
    %c0_i32_0 = arith.constant 0 : i32
    %c0_i32_1 = arith.constant 0 : i32
    return %arg0, %c0_i32, %c0_i32_0 : i32, i32, i32
  }
  func.func @transform_1(%arg0: i32) -> (i32, i32) {
    %c0_i32 = arith.constant 0 : i32
    %c0_i32_0 = arith.constant 0 : i32
    %c0_i32_1 = arith.constant 0 : i32
    return %c0_i32, %c0_i32_0 : i32, i32
  }
  func.func @transform_2(%arg0: i32) -> (i32, i32) {
    %c0_i32 = arith.constant 0 : i32
    %c0_i32_0 = arith.constant 0 : i32
    %c0_i32_1 = arith.constant 0 : i32
    return %c0_i32, %c0_i32_0 : i32, i32
  }
  func.func @transform_3(%arg0: i32) -> (i32, i32) {
    %c0_i32 = arith.constant 0 : i32
    %c0_i32_0 = arith.constant 0 : i32
    %c0_i32_1 = arith.constant 0 : i32
    return %c0_i32, %c0_i32_0 : i32, i32
  }
  func.func @transform_4(%arg0: i32) -> (i32, i32, i32) {
    %c0_i32 = arith.constant 0 : i32
    %c0_i32_0 = arith.constant 0 : i32
    %c0_i32_1 = arith.constant 0 : i32
    %c0_i32_2 = arith.constant 0 : i32
    return %c0_i32, %c0_i32_0, %c0_i32_1 : i32, i32, i32
  }
  func.func @transform_5(%arg0: i32) -> (i32, i32, i32) {
    %c0_i32 = arith.constant 0 : i32
    %c0_i32_0 = arith.constant 0 : i32
    %c0_i32_1 = arith.constant 0 : i32
    %c0_i32_2 = arith.constant 0 : i32
    return %c0_i32, %c0_i32_0, %c0_i32_1 : i32, i32, i32
  }
  func.func @transform_6(%arg0: i32) -> (i32, i32, i32) {
    %c0_i32 = arith.constant 0 : i32
    %c0_i32_0 = arith.constant 0 : i32
    %c0_i32_1 = arith.constant 0 : i32
    %c0_i32_2 = arith.constant 0 : i32
    return %c0_i32, %c0_i32_0, %c0_i32_1 : i32, i32, i32
  }
  func.func @transform_7(%arg0: i32) -> (i32, i32, i32, i32) {
    %c0_i32 = arith.constant 0 : i32
    %c0_i32_0 = arith.constant 0 : i32
    %c0_i32_1 = arith.constant 0 : i32
    %c0_i32_2 = arith.constant 0 : i32
    %c0_i32_3 = arith.constant 0 : i32
    return %c0_i32, %c0_i32_0, %c0_i32_1, %c0_i32_2 : i32, i32, i32, i32
  }
  func.func @transform_8(%arg0: i32) -> (i32, i32, i32, i32) {
    %c0_i32 = arith.constant 0 : i32
    %c0_i32_0 = arith.constant 0 : i32
    %c0_i32_1 = arith.constant 0 : i32
    %c0_i32_2 = arith.constant 0 : i32
    %c0_i32_3 = arith.constant 0 : i32
    return %c0_i32, %c0_i32_0, %c0_i32_1, %c0_i32_2 : i32, i32, i32, i32
  }
  func.func @transform_9(%arg0: i32) -> (i32, i32, i32, i32) {
    %c0_i32 = arith.constant 0 : i32
    %c0_i32_0 = arith.constant 0 : i32
    %c0_i32_1 = arith.constant 0 : i32
    %c0_i32_2 = arith.constant 0 : i32
    %c0_i32_3 = arith.constant 0 : i32
    return %c0_i32, %c0_i32_0, %c0_i32_1, %c0_i32_2 : i32, i32, i32, i32
  }
  func.func @transform_10(%arg0: i32) -> (i32, i32, i32, i32) {
    %c0_i32 = arith.constant 0 : i32
    %c0_i32_0 = arith.constant 0 : i32
    %c0_i32_1 = arith.constant 0 : i32
    %c0_i32_2 = arith.constant 0 : i32
    %c0_i32_3 = arith.constant 0 : i32
    return %c0_i32, %c0_i32_0, %c0_i32_1, %c0_i32_2 : i32, i32, i32, i32
  }
  func.func @transform_11(%arg0: i32) -> (i32, i32, i32) {
    %c0_i32 = arith.constant 0 : i32
    %c0_i32_0 = arith.constant 0 : i32
    %c0_i32_1 = arith.constant 0 : i32
    %c0_i32_2 = arith.constant 0 : i32
    return %c0_i32, %c0_i32_0, %c0_i32_1 : i32, i32, i32
  }
  func.func @transform_12(%arg0: i32) -> (i32, i32, i32) {
    %c0_i32 = arith.constant 0 : i32
    %c0_i32_0 = arith.constant 0 : i32
    %c0_i32_1 = arith.constant 0 : i32
    %c0_i32_2 = arith.constant 0 : i32
    return %c0_i32, %c0_i32_0, %c0_i32_1 : i32, i32, i32
  }
  func.func @transform_13(%arg0: i32) -> (i32, i32, i32) {
    %c0_i32 = arith.constant 0 : i32
    %c0_i32_0 = arith.constant 0 : i32
    %c0_i32_1 = arith.constant 0 : i32
    %c0_i32_2 = arith.constant 0 : i32
    return %c0_i32, %c0_i32_0, %c0_i32_1 : i32, i32, i32
  }
  func.func @transform_14(%arg0: i32) -> (i32, i32, i32) {
    %c0_i32 = arith.constant 0 : i32
    %c0_i32_0 = arith.constant 0 : i32
    %c0_i32_1 = arith.constant 0 : i32
    %c0_i32_2 = arith.constant 0 : i32
    return %c0_i32, %c0_i32_0, %c0_i32_1 : i32, i32, i32
  }
  func.func @transform_15(%arg0: i32) -> (i32, i32, i32) {
    %c0_i32 = arith.constant 0 : i32
    %c0_i32_0 = arith.constant 0 : i32
    %c0_i32_1 = arith.constant 0 : i32
    %c0_i32_2 = arith.constant 0 : i32
    return %c0_i32, %c0_i32_0, %c0_i32_1 : i32, i32, i32
  }
  func.func @transform_16(%arg0: i32) -> (i32, i32, i32) {
    %c0_i32 = arith.constant 0 : i32
    %c0_i32_0 = arith.constant 0 : i32
    %c0_i32_1 = arith.constant 0 : i32
    %c0_i32_2 = arith.constant 0 : i32
    return %c0_i32, %c0_i32_0, %c0_i32_1 : i32, i32, i32
  }
  func.func @transform_17(%arg0: i32) -> (i32, i32, i32) {
    %c0_i32 = arith.constant 0 : i32
    %c0_i32_0 = arith.constant 0 : i32
    %c0_i32_1 = arith.constant 0 : i32
    %c0_i32_2 = arith.constant 0 : i32
    return %c0_i32, %c0_i32_0, %c0_i32_1 : i32, i32, i32
  }
  func.func @transform_18(%arg0: i32) -> (i32, i32) {
    %c0_i32 = arith.constant 0 : i32
    %c0_i32_0 = arith.constant 0 : i32
    %c0_i32_1 = arith.constant 0 : i32
    return %c0_i32, %c0_i32_0 : i32, i32
  }
  func.func @transform_19(%arg0: i32) -> (i32, i32) {
    %c0_i32 = arith.constant 0 : i32
    %c0_i32_0 = arith.constant 0 : i32
    %c0_i32_1 = arith.constant 0 : i32
    return %c0_i32, %c0_i32_0 : i32, i32
  }
  func.func @transform_20(%arg0: i32) -> (i32, i32) {
    %c0_i32 = arith.constant 0 : i32
    %c0_i32_0 = arith.constant 0 : i32
    %c0_i32_1 = arith.constant 0 : i32
    return %c0_i32, %c0_i32_0 : i32, i32
  }
  func.func @transform_21(%arg0: i32) -> (i32, i32) {
    %c0_i32 = arith.constant 0 : i32
    %c0_i32_0 = arith.constant 0 : i32
    %c0_i32_1 = arith.constant 0 : i32
    return %c0_i32, %c0_i32_0 : i32, i32
  }
  func.func @transform_22(%arg0: i32) -> (i32, i32) {
    %c0_i32 = arith.constant 0 : i32
    %c0_i32_0 = arith.constant 0 : i32
    %c0_i32_1 = arith.constant 0 : i32
    return %c0_i32, %c0_i32_0 : i32, i32
  }
  func.func @transform_23(%arg0: i32) -> (i32, i32) {
    %c0_i32 = arith.constant 0 : i32
    %c0_i32_0 = arith.constant 0 : i32
    %c0_i32_1 = arith.constant 0 : i32
    return %c0_i32, %c0_i32_0 : i32, i32
  }
  func.func @transform_24(%arg0: i32) -> (i32, i32, i32) {
    %c0_i32 = arith.constant 0 : i32
    %c0_i32_0 = arith.constant 0 : i32
    %c0_i32_1 = arith.constant 0 : i32
    return %arg0, %c0_i32, %c0_i32_0 : i32, i32, i32
  }
}

</mosaic_0001>

<llo_original>
// kernel: tpu_custom_call.1
$region0: #{tpu_custom_call.1}
  #allocation0 [shape = 'u32[]', space=smem, size = 0x4, offset = 0x4, fixed_abs, tag = 'smem constant byte address 0x4 - core index']
  #allocation1 [shape = 'u32[72,128]{1,0:T(1,128)}', space=vmem, size = 0x9000, scoped, tag = 'internal scratch']
  #allocation2 [shape = 'f32[9,128]{1,0:T(8,128)}', space=vmem, size = 0x2000, scoped, tag = 'scratch operand']
  %s0 = inlined_call_operand.vmem [shape: f32[2,8,128], index: 0, kind: input, shape index: {}]
  %s1 = inlined_call_operand.vmem [shape: bf16[128,128], index: 1, kind: input, shape index: {}]
  %s2 = inlined_call_operand.vmem [shape: f32[1,128], index: 2, kind: input, shape index: {}]
  %s3 = inlined_call_operand.vmem [shape: f32[1,128], index: 3, kind: input, shape index: {}]
  %s4 = inlined_call_operand.vmem [shape: f32[1,9,128], index: 4, kind: input, shape index: {}]
  %s5 = inlined_call_operand.vmem [shape: f32[2,1,128], index: 5, kind: input, shape index: {}]
  %s6 = inlined_call_operand.vmem [shape: f32[2,1,128], index: 6, kind: input, shape index: {}]
  %s7 = inlined_call_operand.vmem [shape: bf16[2,4,128,32], index: 7, kind: input, shape index: {}]
  %s8 = inlined_call_operand.vmem [shape: bf16[2,4,128,32], index: 8, kind: input, shape index: {}]
  %s9 = inlined_call_operand.vmem [shape: bf16[2,4,128,32], index: 9, kind: input, shape index: {}]
  %s10 = inlined_call_operand.vmem [shape: bf16[2,4,32,128], index: 10, kind: input, shape index: {}]
  %s11 = inlined_call_operand.vmem [shape: f32[2,1,128], index: 11, kind: input, shape index: {}]
  %s12 = inlined_call_operand.vmem [shape: f32[2,1,128], index: 12, kind: input, shape index: {}]
  %s13 = inlined_call_operand.vmem [shape: f32[2,1,128], index: 13, kind: input, shape index: {}]
  %s14 = inlined_call_operand.vmem [shape: bf16[2,128,256], index: 14, kind: input, shape index: {}]
  %s15 = inlined_call_operand.vmem [shape: f32[2,1,256], index: 15, kind: input, shape index: {}]
  %s16 = inlined_call_operand.vmem [shape: bf16[2,256,128], index: 16, kind: input, shape index: {}]
  %s17 = inlined_call_operand.vmem [shape: f32[2,1,128], index: 17, kind: input, shape index: {}]
  %s18 = inlined_call_operand.vmem [shape: f32[1,128], index: 18, kind: input, shape index: {}]
  %s19 = inlined_call_operand.vmem [shape: f32[1,128], index: 19, kind: input, shape index: {}]
  %s20 = inlined_call_operand.vmem [shape: bf16[128,256], index: 20, kind: input, shape index: {}]
  %s21 = inlined_call_operand.vmem [shape: f32[1,256], index: 21, kind: input, shape index: {}]
  %s22 = inlined_call_operand.vmem [shape: bf16[256,10], index: 22, kind: input, shape index: {}]
  %s23 = inlined_call_operand.vmem [shape: f32[1,10], index: 23, kind: input, shape index: {}]
  %s24 = inlined_call_operand.hbm [shape: f32[2,1,10], index: 24, kind: output, shape index: {}]
  %s25 = sld [smem:[#allocation0]]
  $region129: #{tpu_custom_call.1} parent=0
    _
  %s27 = ssub.s32 1, %s25
  %s28 = scalar_select 0, %s27, %s25
  $region1: #{tpu_custom_call.1} parent=0
    #allocation3 [shape = 'u8[1024]{0}', space=vmem, size = 0x400, scoped, tag = 'output window, operand 0']
    #allocation4 [shape = 's32[2]{0}', space=sflag, size = 0x8, scoped, tag = 'scoped memory for tpu_custom_call.1']
    %29 = vsyncpa [#allocation4], 0
    %s30 = scalar_lea.sflag [#allocation4], 1
    %31 = vsyncpa %s30, 0
    loop: start=0, step=1, limit=4
    $region2: #{tpu_custom_call.1} parent=1 // loop_pre_header
      _
    $region3: #{tpu_custom_call.1} parent=1 // loop_header
      %s33 = sphi 0, %s37
      %p34 = scmp.ge.s32.totalorder %s33, 4
      %s43 = sphi 0, %s45
      %s46 = sphi 0, %s43
      %s47 = sphi 0, %s46
      %s63 = sphi 0, %s47
      %s67 = sphi 0, %s67
      %s69 = sphi 0, %s67
      %s70 = sphi 0, %s69
      %s84 = sphi 0, %s70
      %s88 = sphi 0, %s88
      %s90 = sphi 0, %s88
      %s91 = sphi 0, %s90
      %s105 = sphi 0, %s91
      %s109 = sphi 0, %s109
      %s111 = sphi 0, %s109
      %s112 = sphi 0, %s111
      %s126 = sphi 0, %s112
      %s130 = sphi 0, %s130
      %s132 = sphi 0, %s130
      %s133 = sphi 0, %s132
      %s147 = sphi 0, %s133
      %s151 = sphi 0, %s151
      %s153 = sphi 0, %s151
      %s154 = sphi 0, %s153
      %s168 = sphi 0, %s154
      %s172 = sphi 0, %s172
      %s174 = sphi 0, %s172
      %s175 = sphi 0, %s174
      %s189 = sphi 0, %s175
      %s193 = sphi 0, %s193
      %s195 = sphi 0, %s193
      %s196 = sphi 0, %s195
      %s210 = sphi 0, %s196
      %s214 = sphi 0, %s214
      %s216 = sphi 0, %s214
      %s217 = sphi 0, %s216
      %s231 = sphi 0, %s217
      %s235 = sphi 0, %s235
      %s237 = sphi 0, %s235
      %s238 = sphi 0, %s237
      %s252 = sphi 0, %s238
      %s256 = sphi 0, %s256
      %s258 = sphi 0, %s256
      %s259 = sphi 0, %s258
      %s273 = sphi 0, %s259
      %s277 = sphi 0, %s277
      %s279 = sphi 0, %s277
      %s280 = sphi 0, %s279
      %s294 = sphi 0, %s280
      %s298 = sphi 0, %s298
      %s300 = sphi 0, %s298
      %s301 = sphi 0, %s300
      %s315 = sphi 0, %s301
      %s319 = sphi 0, %s319
      %s321 = sphi 0, %s319
      %s322 = sphi 0, %s321
      %s336 = sphi 0, %s322
      %s340 = sphi 0, %s340
      %s342 = sphi 0, %s340
      %s343 = sphi 0, %s342
      %s357 = sphi 0, %s343
      %s361 = sphi 0, %s361
      %s363 = sphi 0, %s361
      %s364 = sphi 0, %s363
      %s378 = sphi 0, %s364
      %s382 = sphi 0, %s382
      %s384 = sphi 0, %s382
      %s385 = sphi 0, %s384
      %s399 = sphi 0, %s385
      %s403 = sphi 0, %s403
      %s405 = sphi 0, %s403
      %s406 = sphi 0, %s405
      %s420 = sphi 0, %s406
      %s424 = sphi 0, %s424
      %s426 = sphi 0, %s424
      %s427 = sphi 0, %s426
      %s441 = sphi 0, %s427
      %s445 = sphi 0, %s445
      %s447 = sphi 0, %s445
      %s448 = sphi 0, %s447
      %s462 = sphi 0, %s448
      %s466 = sphi 0, %s466
      %s468 = sphi 0, %s466
      %s469 = sphi 0, %s468
      %s483 = sphi 0, %s469
      %s487 = sphi 0, %s487
      %s489 = sphi 0, %s487
      %s490 = sphi 0, %s489
      %s504 = sphi 0, %s490
      %s508 = sphi 0, %s508
      %s510 = sphi 0, %s508
      %s511 = sphi 0, %s510
      %s525 = sphi 0, %s511
      %s529 = sphi 0, %s529
      %s531 = sphi 0, %s529
      %s532 = sphi 0, %s531
      %s546 = sphi 0, %s532
      %s552 = sphi 0, %s554
      %s555 = sphi 0, %s552
      %s556 = sphi 0, %s555
      %s572 = sphi 0, %s556
    $region4: #{tpu_custom_call.1} parent=1 // loop_header_branch
      %36 = sbr.rel (%p34) target = $region8
    $region5: #{tpu_custom_call.1} parent=1 // loop_body
      %s38 = ssub.s32 %s33, 1
      %s39 = ssub.s32 %s33, 2
      %s40 = sadd.s32 %s33, 1
      %s41 = ssub.s32 %s33, %s40
      %p42 = scmp.eq.s32.totalorder %s41, 0
      %s44 = sadd.s32 %s43, 1
      %s45 = scalar_select %p42, %s43, %s44
      %p48 = pneg %p42
      %p49 = scmp.eq.s32.totalorder %s33, 1
      %p50 = por %p48, %p49
      %p51 = scmp.ne.s32.totalorder %s43, %s46
      %p52 = scmp.eq.s32.totalorder %s33, 0
      %p53 = por %p51, %p52
      %p54 = scmp.ne.s32.totalorder %s43, %s46
      %p55 = scmp.eq.s32.totalorder %s38, 1
      %p56 = por %p54, %p55
      %p57 = scmp.ne.s32.totalorder %s46, %s47
      %p58 = scmp.eq.s32.totalorder %s38, 0
      %p59 = por %p57, %p58
      %p60 = scmp.ne.s32.totalorder %s46, %s47
      %p61 = scmp.eq.s32.totalorder %s39, 1
      %p62 = por %p60, %p61
      %p64 = scmp.ne.s32.totalorder %s47, %s63
      %p65 = scmp.eq.s32.totalorder %s39, 0
      %p66 = por %p64, %p65
      %s68 = sadd.s32 %s67, 1
      %p71 = scmp.eq.s32.totalorder %s33, 1
      %p72 = scmp.ne.s32.totalorder %s67, %s69
      %p73 = scmp.eq.s32.totalorder %s33, 0
      %p74 = por %p72, %p73
      %p75 = scmp.ne.s32.totalorder %s67, %s69
      %p76 = scmp.eq.s32.totalorder %s38, 1
      %p77 = por %p75, %p76
      %p78 = scmp.ne.s32.totalorder %s69, %s70
      %p79 = scmp.eq.s32.totalorder %s38, 0
      %p80 = por %p78, %p79
      %p81 = scmp.ne.s32.totalorder %s69, %s70
      %p82 = scmp.eq.s32.totalorder %s39, 1
      %p83 = por %p81, %p82
      %p85 = scmp.ne.s32.totalorder %s70, %s84
      %p86 = scmp.eq.s32.totalorder %s39, 0
      %p87 = por %p85, %p86
      %s89 = sadd.s32 %s88, 1
      %p92 = scmp.eq.s32.totalorder %s33, 1
      %p93 = scmp.ne.s32.totalorder %s88, %s90
      %p94 = scmp.eq.s32.totalorder %s33, 0
      %p95 = por %p93, %p94
      %p96 = scmp.ne.s32.totalorder %s88, %s90
      %p97 = scmp.eq.s32.totalorder %s38, 1
      %p98 = por %p96, %p97
      %p99 = scmp.ne.s32.totalorder %s90, %s91
      %p100 = scmp.eq.s32.totalorder %s38, 0
      %p101 = por %p99, %p100
      %p102 = scmp.ne.s32.totalorder %s90, %s91
      %p103 = scmp.eq.s32.totalorder %s39, 1
      %p104 = por %p102, %p103
      %p106 = scmp.ne.s32.totalorder %s91, %s105
      %p107 = scmp.eq.s32.totalorder %s39, 0
      %p108 = por %p106, %p107
      %s110 = sadd.s32 %s109, 1
      %p113 = scmp.eq.s32.totalorder %s33, 1
      %p114 = scmp.ne.s32.totalorder %s109, %s111
      %p115 = scmp.eq.s32.totalorder %s33, 0
      %p116 = por %p114, %p115
      %p117 = scmp.ne.s32.totalorder %s109, %s111
      %p118 = scmp.eq.s32.totalorder %s38, 1
      %p119 = por %p117, %p118
      %p120 = scmp.ne.s32.totalorder %s111, %s112
      %p121 = scmp.eq.s32.totalorder %s38, 0
      %p122 = por %p120, %p121
      %p123 = scmp.ne.s32.totalorder %s111, %s112
      %p124 = scmp.eq.s32.totalorder %s39, 1
      %p125 = por %p123, %p124
      %p127 = scmp.ne.s32.totalorder %s112, %s126
      %p128 = scmp.eq.s32.totalorder %s39, 0
      %p129 = por %p127, %p128
      %s131 = sadd.s32 %s130, 1
      %p134 = scmp.eq.s32.totalorder %s33, 1
      %p135 = scmp.ne.s32.totalorder %s130, %s132
      %p136 = scmp.eq.s32.totalorder %s33, 0
      %p137 = por %p135, %p136
      %p138 = scmp.ne.s32.totalorder %s130, %s132
      %p139 = scmp.eq.s32.totalorder %s38, 1
      %p140 = por %p138, %p139
      %p141 = scmp.ne.s32.totalorder %s132, %s133
      %p142 = scmp.eq.s32.totalorder %s38, 0
      %p143 = por %p141, %p142
      %p144 = scmp.ne.s32.totalorder %s132, %s133
      %p145 = scmp.eq.s32.totalorder %s39, 1
      %p146 = por %p144, %p145
      %p148 = scmp.ne.s32.totalorder %s133, %s147
      %p149 = scmp.eq.s32.totalorder %s39, 0
      %p150 = por %p148, %p149
      %s152 = sadd.s32 %s151, 1
      %p155 = scmp.eq.s32.totalorder %s33, 1
      %p156 = scmp.ne.s32.totalorder %s151, %s153
      %p157 = scmp.eq.s32.totalorder %s33, 0
      %p158 = por %p156, %p157
      %p159 = scmp.ne.s32.totalorder %s151, %s153
      %p160 = scmp.eq.s32.totalorder %s38, 1
      %p161 = por %p159, %p160
      %p162 = scmp.ne.s32.totalorder %s153, %s154
      %p163 = scmp.eq.s32.totalorder %s38, 0
      %p164 = por %p162, %p163
      %p165 = scmp.ne.s32.totalorder %s153, %s154
      %p166 = scmp.eq.s32.totalorder %s39, 1
      %p167 = por %p165, %p166
      %p169 = scmp.ne.s32.totalorder %s154, %s168
      %p170 = scmp.eq.s32.totalorder %s39, 0
      %p171 = por %p169, %p170
      %s173 = sadd.s32 %s172, 1
      %p176 = scmp.eq.s32.totalorder %s33, 1
      %p177 = scmp.ne.s32.totalorder %s172, %s174
      %p178 = scmp.eq.s32.totalorder %s33, 0
      %p179 = por %p177, %p178
      %p180 = scmp.ne.s32.totalorder %s172, %s174
      %p181 = scmp.eq.s32.totalorder %s38, 1
      %p182 = por %p180, %p181
      %p183 = scmp.ne.s32.totalorder %s174, %s175
      %p184 = scmp.eq.s32.totalorder %s38, 0
      %p185 = por %p183, %p184
      %p186 = scmp.ne.s32.totalorder %s174, %s175
      %p187 = scmp.eq.s32.totalorder %s39, 1
      %p188 = por %p186, %p187
      %p190 = scmp.ne.s32.totalorder %s175, %s189
      %p191 = scmp.eq.s32.totalorder %s39, 0
      %p192 = por %p190, %p191
      %s194 = sadd.s32 %s193, 1
      %p197 = scmp.eq.s32.totalorder %s33, 1
      %p198 = scmp.ne.s32.totalorder %s193, %s195
      %p199 = scmp.eq.s32.totalorder %s33, 0
      %p200 = por %p198, %p199
      %p201 = scmp.ne.s32.totalorder %s193, %s195
      %p202 = scmp.eq.s32.totalorder %s38, 1
      %p203 = por %p201, %p202
      %p204 = scmp.ne.s32.totalorder %s195, %s196
      %p205 = scmp.eq.s32.totalorder %s38, 0
      %p206 = por %p204, %p205
      %p207 = scmp.ne.s32.totalorder %s195, %s196
      %p208 = scmp.eq.s32.totalorder %s39, 1
      %p209 = por %p207, %p208
      %p211 = scmp.ne.s32.totalorder %s196, %s210
      %p212 = scmp.eq.s32.totalorder %s39, 0
      %p213 = por %p211, %p212
      %s215 = sadd.s32 %s214, 1
      %p218 = scmp.eq.s32.totalorder %s33, 1
      %p219 = scmp.ne.s32.totalorder %s214, %s216
      %p220 = scmp.eq.s32.totalorder %s33, 0
      %p221 = por %p219, %p220
      %p222 = scmp.ne.s32.totalorder %s214, %s216
      %p223 = scmp.eq.s32.totalorder %s38, 1
      %p224 = por %p222, %p223
      %p225 = scmp.ne.s32.totalorder %s216, %s217
      %p226 = scmp.eq.s32.totalorder %s38, 0
      %p227 = por %p225, %p226
      %p228 = scmp.ne.s32.totalorder %s216, %s217
      %p229 = scmp.eq.s32.totalorder %s39, 1
      %p230 = por %p228, %p229
      %p232 = scmp.ne.s32.totalorder %s217, %s231
      %p233 = scmp.eq.s32.totalorder %s39, 0
      %p234 = por %p232, %p233
      %s236 = sadd.s32 %s235, 1
      %p239 = scmp.eq.s32.totalorder %s33, 1
      %p240 = scmp.ne.s32.totalorder %s235, %s237
      %p241 = scmp.eq.s32.totalorder %s33, 0
      %p242 = por %p240, %p241
      %p243 = scmp.ne.s32.totalorder %s235, %s237
      %p244 = scmp.eq.s32.totalorder %s38, 1
      %p245 = por %p243, %p244
      %p246 = scmp.ne.s32.totalorder %s237, %s238
      %p247 = scmp.eq.s32.totalorder %s38, 0
      %p248 = por %p246, %p247
      %p249 = scmp.ne.s32.totalorder %s237, %s238
      %p250 = scmp.eq.s32.totalorder %s39, 1
      %p251 = por %p249, %p250
      %p253 = scmp.ne.s32.totalorder %s238, %s252
      %p254 = scmp.eq.s32.totalorder %s39, 0
      %p255 = por %p253, %p254
      %s257 = sadd.s32 %s256, 1
      %p260 = scmp.eq.s32.totalorder %s33, 1
      %p261 = scmp.ne.s32.totalorder %s256, %s258
      %p262 = scmp.eq.s32.totalorder %s33, 0
      %p263 = por %p261, %p262
      %p264 = scmp.ne.s32.totalorder %s256, %s258
      %p265 = scmp.eq.s32.totalorder %s38, 1
      %p266 = por %p264, %p265
      %p267 = scmp.ne.s32.totalorder %s258, %s259
      %p268 = scmp.eq.s32.totalorder %s38, 0
      %p269 = por %p267, %p268
      %p270 = scmp.ne.s32.totalorder %s258, %s259
      %p271 = scmp.eq.s32.totalorder %s39, 1
      %p272 = por %p270, %p271
      %p274 = scmp.ne.s32.totalorder %s259, %s273
      %p275 = scmp.eq.s32.totalorder %s39, 0
      %p276 = por %p274, %p275
      %s278 = sadd.s32 %s277, 1
      %p281 = scmp.eq.s32.totalorder %s33, 1
      %p282 = scmp.ne.s32.totalorder %s277, %s279
      %p283 = scmp.eq.s32.totalorder %s33, 0
      %p284 = por %p282, %p283
      %p285 = scmp.ne.s32.totalorder %s277, %s279
      %p286 = scmp.eq.s32.totalorder %s38, 1
      %p287 = por %p285, %p286
      %p288 = scmp.ne.s32.totalorder %s279, %s280
      %p289 = scmp.eq.s32.totalorder %s38, 0
      %p290 = por %p288, %p289
      %p291 = scmp.ne.s32.totalorder %s279, %s280
      %p292 = scmp.eq.s32.totalorder %s39, 1
      %p293 = por %p291, %p292
      %p295 = scmp.ne.s32.totalorder %s280, %s294
      %p296 = scmp.eq.s32.totalorder %s39, 0
      %p297 = por %p295, %p296
      %s299 = sadd.s32 %s298, 1
      %p302 = scmp.eq.s32.totalorder %s33, 1
      %p303 = scmp.ne.s32.totalorder %s298, %s300
      %p304 = scmp.eq.s32.totalorder %s33, 0
      %p305 = por %p303, %p304
      %p306 = scmp.ne.s32.totalorder %s298, %s300
      %p307 = scmp.eq.s32.totalorder %s38, 1
      %p308 = por %p306, %p307
      %p309 = scmp.ne.s32.totalorder %s300, %s301
      %p310 = scmp.eq.s32.totalorder %s38, 0
      %p311 = por %p309, %p310
      %p312 = scmp.ne.s32.totalorder %s300, %s301
      %p313 = scmp.eq.s32.totalorder %s39, 1
      %p314 = por %p312, %p313
      %p316 = scmp.ne.s32.totalorder %s301, %s315
      %p317 = scmp.eq.s32.totalorder %s39, 0
      %p318 = por %p316, %p317
      %s320 = sadd.s32 %s319, 1
      %p323 = scmp.eq.s32.totalorder %s33, 1
      %p324 = scmp.ne.s32.totalorder %s319, %s321
      %p325 = scmp.eq.s32.totalorder %s33, 0
      %p326 = por %p324, %p325
      %p327 = scmp.ne.s32.totalorder %s319, %s321
      %p328 = scmp.eq.s32.totalorder %s38, 1
      %p329 = por %p327, %p328
      %p330 = scmp.ne.s32.totalorder %s321, %s322
      %p331 = scmp.eq.s32.totalorder %s38, 0
      %p332 = por %p330, %p331
      %p333 = scmp.ne.s32.totalorder %s321, %s322
      %p334 = scmp.eq.s32.totalorder %s39, 1
      %p335 = por %p333, %p334
      %p337 = scmp.ne.s32.totalorder %s322, %s336
      %p338 = scmp.eq.s32.totalorder %s39, 0
      %p339 = por %p337, %p338
      %s341 = sadd.s32 %s340, 1
      %p344 = scmp.eq.s32.totalorder %s33, 1
      %p345 = scmp.ne.s32.totalorder %s340, %s342
      %p346 = scmp.eq.s32.totalorder %s33, 0
      %p347 = por %p345, %p346
      %p348 = scmp.ne.s32.totalorder %s340, %s342
      %p349 = scmp.eq.s32.totalorder %s38, 1
      %p350 = por %p348, %p349
      %p351 = scmp.ne.s32.totalorder %s342, %s343
      %p352 = scmp.eq.s32.totalorder %s38, 0
      %p353 = por %p351, %p352
      %p354 = scmp.ne.s32.totalorder %s342, %s343
      %p355 = scmp.eq.s32.totalorder %s39, 1
      %p356 = por %p354, %p355
      %p358 = scmp.ne.s32.totalorder %s343, %s357
      %p359 = scmp.eq.s32.totalorder %s39, 0
      %p360 = por %p358, %p359
      %s362 = sadd.s32 %s361, 1
      %p365 = scmp.eq.s32.totalorder %s33, 1
      %p366 = scmp.ne.s32.totalorder %s361, %s363
      %p367 = scmp.eq.s32.totalorder %s33, 0
      %p368 = por %p366, %p367
      %p369 = scmp.ne.s32.totalorder %s361, %s363
      %p370 = scmp.eq.s32.totalorder %s38, 1
      %p371 = por %p369, %p370
      %p372 = scmp.ne.s32.totalorder %s363, %s364
      %p373 = scmp.eq.s32.totalorder %s38, 0
      %p374 = por %p372, %p373
      %p375 = scmp.ne.s32.totalorder %s363, %s364
      %p376 = scmp.eq.s32.totalorder %s39, 1
      %p377 = por %p375, %p376
      %p379 = scmp.ne.s32.totalorder %s364, %s378
      %p380 = scmp.eq.s32.totalorder %s39, 0
      %p381 = por %p379, %p380
      %s383 = sadd.s32 %s382, 1
      %p386 = scmp.eq.s32.totalorder %s33, 1
      %p387 = scmp.ne.s32.totalorder %s382, %s384
      %p388 = scmp.eq.s32.totalorder %s33, 0
      %p389 = por %p387, %p388
      %p390 = scmp.ne.s32.totalorder %s382, %s384
      %p391 = scmp.eq.s32.totalorder %s38, 1
      %p392 = por %p390, %p391
      %p393 = scmp.ne.s32.totalorder %s384, %s385
      %p394 = scmp.eq.s32.totalorder %s38, 0
      %p395 = por %p393, %p394
      %p396 = scmp.ne.s32.totalorder %s384, %s385
      %p397 = scmp.eq.s32.totalorder %s39, 1
      %p398 = por %p396, %p397
      %p400 = scmp.ne.s32.totalorder %s385, %s399
      %p401 = scmp.eq.s32.totalorder %s39, 0
      %p402 = por %p400, %p401
      %s404 = sadd.s32 %s403, 1
      %p407 = scmp.eq.s32.totalorder %s33, 1
      %p408 = scmp.ne.s32.totalorder %s403, %s405
      %p409 = scmp.eq.s32.totalorder %s33, 0
      %p410 = por %p408, %p409
      %p411 = scmp.ne.s32.totalorder %s403, %s405
      %p412 = scmp.eq.s32.totalorder %s38, 1
      %p413 = por %p411, %p412
      %p414 = scmp.ne.s32.totalorder %s405, %s406
      %p415 = scmp.eq.s32.totalorder %s38, 0
      %p416 = por %p414, %p415
      %p417 = scmp.ne.s32.totalorder %s405, %s406
      %p418 = scmp.eq.s32.totalorder %s39, 1
      %p419 = por %p417, %p418
      %p421 = scmp.ne.s32.totalorder %s406, %s420
      %p422 = scmp.eq.s32.totalorder %s39, 0
      %p423 = por %p421, %p422
      %s425 = sadd.s32 %s424, 1
      %p428 = scmp.eq.s32.totalorder %s33, 1
      %p429 = scmp.ne.s32.totalorder %s424, %s426
      %p430 = scmp.eq.s32.totalorder %s33, 0
      %p431 = por %p429, %p430
      %p432 = scmp.ne.s32.totalorder %s424, %s426
      %p433 = scmp.eq.s32.totalorder %s38, 1
      %p434 = por %p432, %p433
      %p435 = scmp.ne.s32.totalorder %s426, %s427
      %p436 = scmp.eq.s32.totalorder %s38, 0
      %p437 = por %p435, %p436
      %p438 = scmp.ne.s32.totalorder %s426, %s427
      %p439 = scmp.eq.s32.totalorder %s39, 1
      %p440 = por %p438, %p439
      %p442 = scmp.ne.s32.totalorder %s427, %s441
      %p443 = scmp.eq.s32.totalorder %s39, 0
      %p444 = por %p442, %p443
      %s446 = sadd.s32 %s445, 1
      %p449 = scmp.eq.s32.totalorder %s33, 1
      %p450 = scmp.ne.s32.totalorder %s445, %s447
      %p451 = scmp.eq.s32.totalorder %s33, 0
      %p452 = por %p450, %p451
      %p453 = scmp.ne.s32.totalorder %s445, %s447
      %p454 = scmp.eq.s32.totalorder %s38, 1
      %p455 = por %p453, %p454
      %p456 = scmp.ne.s32.totalorder %s447, %s448
      %p457 = scmp.eq.s32.totalorder %s38, 0
      %p458 = por %p456, %p457
      %p459 = scmp.ne.s32.totalorder %s447, %s448
      %p460 = scmp.eq.s32.totalorder %s39, 1
      %p461 = por %p459, %p460
      %p463 = scmp.ne.s32.totalorder %s448, %s462
      %p464 = scmp.eq.s32.totalorder %s39, 0
      %p465 = por %p463, %p464
      %s467 = sadd.s32 %s466, 1
      %p470 = scmp.eq.s32.totalorder %s33, 1
      %p471 = scmp.ne.s32.totalorder %s466, %s468
      %p472 = scmp.eq.s32.totalorder %s33, 0
      %p473 = por %p471, %p472
      %p474 = scmp.ne.s32.totalorder %s466, %s468
      %p475 = scmp.eq.s32.totalorder %s38, 1
      %p476 = por %p474, %p475
      %p477 = scmp.ne.s32.totalorder %s468, %s469
      %p478 = scmp.eq.s32.totalorder %s38, 0
      %p479 = por %p477, %p478
      %p480 = scmp.ne.s32.totalorder %s468, %s469
      %p481 = scmp.eq.s32.totalorder %s39, 1
      %p482 = por %p480, %p481
      %p484 = scmp.ne.s32.totalorder %s469, %s483
      %p485 = scmp.eq.s32.totalorder %s39, 0
      %p486 = por %p484, %p485
      %s488 = sadd.s32 %s487, 1
      %p491 = scmp.eq.s32.totalorder %s33, 1
      %p492 = scmp.ne.s32.totalorder %s487, %s489
      %p493 = scmp.eq.s32.totalorder %s33, 0
      %p494 = por %p492, %p493
      %p495 = scmp.ne.s32.totalorder %s487, %s489
      %p496 = scmp.eq.s32.totalorder %s38, 1
      %p497 = por %p495, %p496
      %p498 = scmp.ne.s32.totalorder %s489, %s490
      %p499 = scmp.eq.s32.totalorder %s38, 0
      %p500 = por %p498, %p499
      %p501 = scmp.ne.s32.totalorder %s489, %s490
      %p502 = scmp.eq.s32.totalorder %s39, 1
      %p503 = por %p501, %p502
      %p505 = scmp.ne.s32.totalorder %s490, %s504
      %p506 = scmp.eq.s32.totalorder %s39, 0
      %p507 = por %p505, %p506
      %s509 = sadd.s32 %s508, 1
      %p512 = scmp.eq.s32.totalorder %s33, 1
      %p513 = scmp.ne.s32.totalorder %s508, %s510
      %p514 = scmp.eq.s32.totalorder %s33, 0
      %p515 = por %p513, %p514
      %p516 = scmp.ne.s32.totalorder %s508, %s510
      %p517 = scmp.eq.s32.totalorder %s38, 1
      %p518 = por %p516, %p517
      %p519 = scmp.ne.s32.totalorder %s510, %s511
      %p520 = scmp.eq.s32.totalorder %s38, 0
      %p521 = por %p519, %p520
      %p522 = scmp.ne.s32.totalorder %s510, %s511
      %p523 = scmp.eq.s32.totalorder %s39, 1
      %p524 = por %p522, %p523
      %p526 = scmp.ne.s32.totalorder %s511, %s525
      %p527 = scmp.eq.s32.totalorder %s39, 0
      %p528 = por %p526, %p527
      %s530 = sadd.s32 %s529, 1
      %p533 = scmp.eq.s32.totalorder %s33, 1
      %p534 = scmp.ne.s32.totalorder %s529, %s531
      %p535 = scmp.eq.s32.totalorder %s33, 0
      %p536 = por %p534, %p535
      %p537 = scmp.ne.s32.totalorder %s529, %s531
      %p538 = scmp.eq.s32.totalorder %s38, 1
      %p539 = por %p537, %p538
      %p540 = scmp.ne.s32.totalorder %s531, %s532
      %p541 = scmp.eq.s32.totalorder %s38, 0
      %p542 = por %p540, %p541
      %p543 = scmp.ne.s32.totalorder %s531, %s532
      %p544 = scmp.eq.s32.totalorder %s39, 1
      %p545 = por %p543, %p544
      %p547 = scmp.ne.s32.totalorder %s532, %s546
      %p548 = scmp.eq.s32.totalorder %s39, 0
      %p549 = por %p547, %p548
      %s550 = ssub.s32 %s33, %s40
      %p551 = scmp.eq.s32.totalorder %s550, 0
      %s553 = sadd.s32 %s552, 1
      %s554 = scalar_select %p551, %s552, %s553
      %p557 = pneg %p551
      %p558 = scmp.eq.s32.totalorder %s33, 1
      %p559 = por %p557, %p558
      %p560 = scmp.ne.s32.totalorder %s552, %s555
      %p561 = scmp.eq.s32.totalorder %s33, 0
      %p562 = por %p560, %p561
      %p563 = scmp.ne.s32.totalorder %s552, %s555
      %p564 = scmp.eq.s32.totalorder %s38, 1
      %p565 = por %p563, %p564
      %p566 = scmp.ne.s32.totalorder %s555, %s556
      %p567 = scmp.eq.s32.totalorder %s38, 0
      %p568 = por %p566, %p567
      %p569 = scmp.ne.s32.totalorder %s555, %s556
      %p570 = scmp.eq.s32.totalorder %s39, 1
      %p571 = por %p569, %p570
      %p573 = scmp.ne.s32.totalorder %s556, %s572
      %p574 = scmp.eq.s32.totalorder %s39, 0
      %p575 = por %p573, %p574
      %p576 = scmp.le.s32.totalorder 1, %s33
      %p577 = scmp.lt.s32.totalorder %s33, 3
      %p578 = pnand %p576, %p577
      %p579 = pneg %p578
      // Predicated region
      $region9: #{tpu_custom_call.1} parent=5 // pred_check
        _
      $region10: #{tpu_custom_call.1} parent=5 // pred_check_branch
        %581 = sbr.rel (%p578) target = $region12
      $region11: #{tpu_custom_call.1} parent=5 // pred_region
        %s582 = ssub.s32 %s33, 1
        // Predicated region
        $region13: #{tpu_custom_call.1} parent=11 // pred_check
          %p583 = pneg %p80
        $region14: #{tpu_custom_call.1} parent=11 // pred_check_branch
          %585 = sbr.rel (%p583) target = $region16
        $region15: #{tpu_custom_call.1} parent=11 // pred_region
          _
        $region16: #{tpu_custom_call.1} parent=11 // pred_fallthru
          _
        // Predicated region
        $region17: #{tpu_custom_call.1} parent=11 // pred_check
          %p586 = pneg %p101
        $region18: #{tpu_custom_call.1} parent=11 // pred_check_branch
          %588 = sbr.rel (%p586) target = $region20
        $region19: #{tpu_custom_call.1} parent=11 // pred_region
          _
        $region20: #{tpu_custom_call.1} parent=11 // pred_fallthru
          _
        // Predicated region
        $region21: #{tpu_custom_call.1} parent=11 // pred_check
          %p589 = pneg %p122
        $region22: #{tpu_custom_call.1} parent=11 // pred_check_branch
          %591 = sbr.rel (%p589) target = $region24
        $region23: #{tpu_custom_call.1} parent=11 // pred_region
          _
        $region24: #{tpu_custom_call.1} parent=11 // pred_fallthru
          _
        // Predicated region
        $region25: #{tpu_custom_call.1} parent=11 // pred_check
          %p592 = pneg %p143
        $region26: #{tpu_custom_call.1} parent=11 // pred_check_branch
          %594 = sbr.rel (%p592) target = $region28
        $region27: #{tpu_custom_call.1} parent=11 // pred_region
          _
        $region28: #{tpu_custom_call.1} parent=11 // pred_fallthru
          _
        // Predicated region
        $region29: #{tpu_custom_call.1} parent=11 // pred_check
          %p595 = pneg %p164
        $region30: #{tpu_custom_call.1} parent=11 // pred_check_branch
          %597 = sbr.rel (%p595) target = $region32
        $region31: #{tpu_custom_call.1} parent=11 // pred_region
          _
        $region32: #{tpu_custom_call.1} parent=11 // pred_fallthru
          _
        // Predicated region
        $region33: #{tpu_custom_call.1} parent=11 // pred_check
          %p598 = pneg %p185
        $region34: #{tpu_custom_call.1} parent=11 // pred_check_branch
          %600 = sbr.rel (%p598) target = $region36
        $region35: #{tpu_custom_call.1} parent=11 // pred_region
          _
        $region36: #{tpu_custom_call.1} parent=11 // pred_fallthru
          _
        // Predicated region
        $region37: #{tpu_custom_call.1} parent=11 // pred_check
          %p601 = pneg %p206
        $region38: #{tpu_custom_call.1} parent=11 // pred_check_branch
          %603 = sbr.rel (%p601) target = $region40
        $region39: #{tpu_custom_call.1} parent=11 // pred_region
          _
        $region40: #{tpu_custom_call.1} parent=11 // pred_fallthru
          _
        // Predicated region
        $region41: #{tpu_custom_call.1} parent=11 // pred_check
          %p604 = pneg %p227
        $region42: #{tpu_custom_call.1} parent=11 // pred_check_branch
          %606 = sbr.rel (%p604) target = $region44
        $region43: #{tpu_custom_call.1} parent=11 // pred_region
          _
        $region44: #{tpu_custom_call.1} parent=11 // pred_fallthru
          _
        // Predicated region
        $region45: #{tpu_custom_call.1} parent=11 // pred_check
          %p607 = pneg %p248
        $region46: #{tpu_custom_call.1} parent=11 // pred_check_branch
          %609 = sbr.rel (%p607) target = $region48
        $region47: #{tpu_custom_call.1} parent=11 // pred_region
          _
        $region48: #{tpu_custom_call.1} parent=11 // pred_fallthru
          _
        // Predicated region
        $region49: #{tpu_custom_call.1} parent=11 // pred_check
          %p610 = pneg %p269
        $region50: #{tpu_custom_call.1} parent=11 // pred_check_branch
          %612 = sbr.rel (%p610) target = $region52
        $region51: #{tpu_custom_call.1} parent=11 // pred_region
          _
        $region52: #{tpu_custom_call.1} parent=11 // pred_fallthru
          _
        // Predicated region
        $region53: #{tpu_custom_call.1} parent=11 // pred_check
          %p613 = pneg %p290
        $region54: #{tpu_custom_call.1} parent=11 // pred_check_branch
          %615 = sbr.rel (%p613) target = $region56
        $region55: #{tpu_custom_call.1} parent=11 // pred_region
          _
        $region56: #{tpu_custom_call.1} parent=11 // pred_fallthru
          _
        // Predicated region
        $region57: #{tpu_custom_call.1} parent=11 // pred_check
          %p616 = pneg %p311
        $region58: #{tpu_custom_call.1} parent=11 // pred_check_branch
          %618 = sbr.rel (%p616) target = $region60
        $region59: #{tpu_custom_call.1} parent=11 // pred_region
          _
        $region60: #{tpu_custom_call.1} parent=11 // pred_fallthru
          _
        // Predicated region
        $region61: #{tpu_custom_call.1} parent=11 // pred_check
          %p619 = pneg %p332
        $region62: #{tpu_custom_call.1} parent=11 // pred_check_branch
          %621 = sbr.rel (%p619) target = $region64
        $region63: #{tpu_custom_call.1} parent=11 // pred_region
          _
        $region64: #{tpu_custom_call.1} parent=11 // pred_fallthru
          _
        // Predicated region
        $region65: #{tpu_custom_call.1} parent=11 // pred_check
          %p622 = pneg %p353
        $region66: #{tpu_custom_call.1} parent=11 // pred_check_branch
          %624 = sbr.rel (%p622) target = $region68
        $region67: #{tpu_custom_call.1} parent=11 // pred_region
          _
        $region68: #{tpu_custom_call.1} parent=11 // pred_fallthru
          _
        // Predicated region
        $region69: #{tpu_custom_call.1} parent=11 // pred_check
          %p625 = pneg %p374
        $region70: #{tpu_custom_call.1} parent=11 // pred_check_branch
          %627 = sbr.rel (%p625) target = $region72
        $region71: #{tpu_custom_call.1} parent=11 // pred_region
          _
        $region72: #{tpu_custom_call.1} parent=11 // pred_fallthru
          _
        // Predicated region
        $region73: #{tpu_custom_call.1} parent=11 // pred_check
          %p628 = pneg %p395
        $region74: #{tpu_custom_call.1} parent=11 // pred_check_branch
          %630 = sbr.rel (%p628) target = $region76
        $region75: #{tpu_custom_call.1} parent=11 // pred_region
          _
        $region76: #{tpu_custom_call.1} parent=11 // pred_fallthru
          _
        // Predicated region
        $region77: #{tpu_custom_call.1} parent=11 // pred_check
          %p631 = pneg %p416
        $region78: #{tpu_custom_call.1} parent=11 // pred_check_branch
          %633 = sbr.rel (%p631) target = $region80
        $region79: #{tpu_custom_call.1} parent=11 // pred_region
          _
        $region80: #{tpu_custom_call.1} parent=11 // pred_fallthru
          _
        // Predicated region
        $region81: #{tpu_custom_call.1} parent=11 // pred_check
          %p634 = pneg %p437
        $region82: #{tpu_custom_call.1} parent=11 // pred_check_branch
          %636 = sbr.rel (%p634) target = $region84
        $region83: #{tpu_custom_call.1} parent=11 // pred_region
          _
        $region84: #{tpu_custom_call.1} parent=11 // pred_fallthru
          _
        // Predicated region
        $region85: #{tpu_custom_call.1} parent=11 // pred_check
          %p637 = pneg %p458
        $region86: #{tpu_custom_call.1} parent=11 // pred_check_branch
          %639 = sbr.rel (%p637) target = $region88
        $region87: #{tpu_custom_call.1} parent=11 // pred_region
          _
        $region88: #{tpu_custom_call.1} parent=11 // pred_fallthru
          _
        // Predicated region
        $region89: #{tpu_custom_call.1} parent=11 // pred_check
          %p640 = pneg %p479
        $region90: #{tpu_custom_call.1} parent=11 // pred_check_branch
          %642 = sbr.rel (%p640) target = $region92
        $region91: #{tpu_custom_call.1} parent=11 // pred_region
          _
        $region92: #{tpu_custom_call.1} parent=11 // pred_fallthru
          _
        // Predicated region
        $region93: #{tpu_custom_call.1} parent=11 // pred_check
          %p643 = pneg %p500
        $region94: #{tpu_custom_call.1} parent=11 // pred_check_branch
          %645 = sbr.rel (%p643) target = $region96
        $region95: #{tpu_custom_call.1} parent=11 // pred_region
          _
        $region96: #{tpu_custom_call.1} parent=11 // pred_fallthru
          _
        // Predicated region
        $region97: #{tpu_custom_call.1} parent=11 // pred_check
          %p646 = pneg %p521
        $region98: #{tpu_custom_call.1} parent=11 // pred_check_branch
          %648 = sbr.rel (%p646) target = $region100
        $region99: #{tpu_custom_call.1} parent=11 // pred_region
          _
        $region100: #{tpu_custom_call.1} parent=11 // pred_fallthru
          _
        // Predicated region
        $region101: #{tpu_custom_call.1} parent=11 // pred_check
          %p649 = pneg %p542
        $region102: #{tpu_custom_call.1} parent=11 // pred_check_branch
          %651 = sbr.rel (%p649) target = $region104
        $region103: #{tpu_custom_call.1} parent=11 // pred_region
          _
        $region104: #{tpu_custom_call.1} parent=11 // pred_fallthru
          _
      $region12: #{tpu_custom_call.1} parent=5 // pred_fallthru
        _
      %p652 = scmp.lt.s32.totalorder %s33, 2
      // Predicated region
      $region105: #{tpu_custom_call.1} parent=5 // pred_check
        %p653 = pneg %p652
      $region106: #{tpu_custom_call.1} parent=5 // pred_check_branch
        %655 = sbr.rel (%p653) target = $region108
      $region107: #{tpu_custom_call.1} parent=5 // pred_region
        // Predicated region
        $region109: #{tpu_custom_call.1} parent=107 // pred_check
          %p656 = pneg %p53
        $region110: #{tpu_custom_call.1} parent=107 // pred_check_branch
          %658 = sbr.rel (%p656) target = $region112
        $region111: #{tpu_custom_call.1} parent=107 // pred_region
          %p659 = scmp.lt.s32.totalorder %s33, 1
          %s660 = scalar_select %p659, %s33, 1
          %s661 = smul.addr %s660, 8
          %s662 = scalar_lea.vmem %s0, %s661
        $region112: #{tpu_custom_call.1} parent=107 // pred_fallthru
          _
      $region108: #{tpu_custom_call.1} parent=5 // pred_fallthru
        _
      %p663 = scmp.le.s32.totalorder 1, %s33
      %p664 = scmp.lt.s32.totalorder %s33, 3
      %p665 = pnand %p663, %p664
      %p666 = pneg %p665
      // Predicated region
      $region113: #{tpu_custom_call.1} parent=5 // pred_check
        _
      $region114: #{tpu_custom_call.1} parent=5 // pred_check_branch
        %668 = sbr.rel (%p665) target = $region116
      $region115: #{tpu_custom_call.1} parent=5 // pred_region
        %s669 = ssub.s32 %s33, 1
        %p670 = scmp.lt.s32.totalorder %s38, 1
        %s671 = scalar_select %p670, %s38, 1
        %s672 = smul.addr %s671, 8
        %s673 = scalar_lea.vmem %s0, %s672
        %p674 = pneg %p59
        %p675 = pneg %p56
        %p676 = pneg %p80
        %p677 = pneg %p77
        %p678 = pneg %p101
        %p679 = pneg %p98
        %p680 = pneg %p122
        %p681 = pneg %p119
        %p682 = pneg %p143
        %p683 = pneg %p140
        %p684 = pneg %p164
        %p685 = pneg %p161
        %p686 = pneg %p185
        %p687 = pneg %p182
        %p688 = pneg %p206
        %p689 = pneg %p203
        %p690 = pneg %p227
        %p691 = pneg %p224
        %p692 = pneg %p248
        %p693 = pneg %p245
        %p694 = pneg %p269
        %p695 = pneg %p266
        %p696 = pneg %p290
        %p697 = pneg %p287
        %p698 = pneg %p311
        %p699 = pneg %p308
        %p700 = pneg %p332
        %p701 = pneg %p329
        %p702 = pneg %p353
        %p703 = pneg %p350
        %p704 = pneg %p374
        %p705 = pneg %p371
        %p706 = pneg %p395
        %p707 = pneg %p392
        %p708 = pneg %p416
        %p709 = pneg %p413
        %p710 = pneg %p437
        %p711 = pneg %p434
        %p712 = pneg %p458
        %p713 = pneg %p455
        %p714 = pneg %p479
        %p715 = pneg %p476
        %p716 = pneg %p500
        %p717 = pneg %p497
        %p718 = pneg %p521
        %p719 = pneg %p518
        %p720 = pneg %p542
        %p721 = pneg %p539
        %p722 = pneg %p568
        %p723 = pneg %p565
        %s724 = sand.u32 %s555, 1
        %s725 = scalar_lea.sflag [#allocation4], %s724
        %s726 = sand.u32 %s555, 1
        %s727 = scalar_lea.vmem [#allocation3], %s726
        %p728 = scmp.lt.s32.totalorder %s38, 1
        %s729 = scalar_select %p728, %s38, 1
        %s730 = smul.addr %s729, 8
        %s731 = scalar_lea.vmem %s0, %s730
        %v733 = vld [vmem:[%s731] sm:$0xff]
        %v734 = vpack.c.bf16 %v733, %v733
        %v735 = vld [vmem:[%s1] sm:$0xf]
        %v736 = vld [vmem:[%s1 + $0x4] sm:$0xf]
        %v737 = vld [vmem:[%s1 + $0x8] sm:$0xf]
        %v738 = vld [vmem:[%s1 + $0xc] sm:$0xf]
        %v739 = vld [vmem:[%s1 + $0x10] sm:$0xf]
        %v740 = vld [vmem:[%s1 + $0x14] sm:$0xf]
        %v741 = vld [vmem:[%s1 + $0x18] sm:$0xf]
        %v742 = vld [vmem:[%s1 + $0x1c] sm:$0xf]
        %v743 = vld [vmem:[%s1 + $0x20] sm:$0xf]
        %v744 = vld [vmem:[%s1 + $0x24] sm:$0xf]
        %v745 = vld [vmem:[%s1 + $0x28] sm:$0xf]
        %v746 = vld [vmem:[%s1 + $0x2c] sm:$0xf]
        %v747 = vld [vmem:[%s1 + $0x30] sm:$0xf]
        %v748 = vld [vmem:[%s1 + $0x34] sm:$0xf]
        %v749 = vld [vmem:[%s1 + $0x38] sm:$0xf]
        %v750 = vld [vmem:[%s1 + $0x3c] sm:$0xf]
        %v751 = vld [vmem:[%s2] sm:$0x1]
        %v753 = vperm.slane %v751, 0
        %v771 = vunpack.c.l.b16 %v735
        %v772 = vunpack.c.l.b16 %v736
        %v773 = vunpack.c.l.b16 %v737
        %v774 = vunpack.c.l.b16 %v738
        %v775 = vunpack.c.l.b16 %v739
        %v776 = vunpack.c.l.b16 %v740
        %v777 = vunpack.c.l.b16 %v741
        %v778 = vunpack.c.l.b16 %v742
        %v779 = vunpack.c.l.b16 %v743
        %v780 = vunpack.c.l.b16 %v744
        %v781 = vunpack.c.l.b16 %v745
        %v782 = vunpack.c.l.b16 %v746
        %v783 = vunpack.c.l.b16 %v747
        %v784 = vunpack.c.l.b16 %v748
        %v785 = vunpack.c.l.b16 %v749
        %v786 = vunpack.c.l.b16 %v750
        %v787 = vpack.c.b16 %v772, %v771
        %v788 = vpack.c.b16 %v774, %v773
        %v789 = vpack.c.b16 %v776, %v775
        %v790 = vpack.c.b16 %v778, %v777
        %v791 = vpack.c.b16 %v780, %v779
        %v792 = vpack.c.b16 %v782, %v781
        %v793 = vpack.c.b16 %v784, %v783
        %v794 = vpack.c.b16 %v786, %v785
        %803 = vmatpush.bf16.msra.mxu0 %v794
        %804 = vmatpush.bf16.msra.mxu0 %v793
        %805 = vmatpush.bf16.msra.mxu0 %v792
        %806 = vmatpush.bf16.msra.mxu0 %v791
        %807 = vmatpush.bf16.msra.mxu0 %v790
        %808 = vmatpush.bf16.msra.mxu0 %v789
        %809 = vmatpush.bf16.msra.mxu0 %v788
        %810 = vmatpush.bf16.msra.mxu0 %v787
        %811 = vmatmul.bf16.gmra.mxu0 %v734
        %v812 = vpop.f32.mrf.mxu0
        %v813 = vadd.f32 %v753, %v812
        %v814 = vpop.f32.mrf.mxu0
        %815 = vdwg.mxu0
        %v816 = vld [vmem:[%s4] sm:$0xff]
        %v817 = vld [vmem:[%s4 + $0x8] sm:$0x1]
        %v818 = vadd.f32 %v813, %v816
        %819 = vst [vmem:[#allocation2] sm:$0xff] %v818
        %v820 = vld [vmem:[%s3] sm:$0x1]
        %v821 = vadd.f32 %v820, %v817
        %822 = vst [vmem:[#allocation2 + $0x8] sm:$0x1] %v821
        %v823 = vld [vmem:[#allocation2] sm:$0xff]
        %v824 = vld [vmem:[#allocation2 + $0x8] sm:$0x1]
        %v825 = vld [vmem:[%s5] sm:$0x1]
        %v826 = vld [vmem:[%s6] sm:$0x1]
        %827 = vadd.xlane.f32.xlu0 %v823
        %v828 = vpop.xlane.xlu0 %827
        %vm829 = vcmask 1040384
        %v830 = vsel %vm829, %v824, 0.0
        %831 = vadd.xlane.f32.xlu0 %v830
        %v832 = vpop.xlane.xlu0 %831
        %v833 = vrcp.pop 128.0
        %v834 = vmul.f32 128.0, %v833
        %v835 = vsub.f32 1.0, %v834
        %v836 = vmul.f32 %v833, %v835
        %v837 = vadd.f32 %v833, %v836
        %vm838 = vweird.f32 %v833
        %v839 = vsel %vm838, %v833, %v837
        %v840 = vmul.f32 %v828, %v839
        %v841 = vmul.f32 %v832, %v839
        %v842 = vsub.f32 %v823, %v840
        %v843 = vsub.f32 %v824, %v841
        %v844 = vmul.f32 %v842, %v842
        %v845 = vmul.f32 %v843, %v843
        %846 = vadd.xlane.f32.xlu0 %v844
        %v847 = vpop.xlane.xlu0 %846
        %v848 = vsel %vm829, %v845, 0.0
        %849 = vadd.xlane.f32.xlu0 %v848
        %v850 = vpop.xlane.xlu0 %849
        %v851 = vmul.f32 %v847, %v839
        %v852 = vmul.f32 %v850, %v839
        %v853 = vadd.f32 %v851, 1e-05
        %v854 = vadd.f32 %v852, 1e-05
        %v855 = vrsqrt.pop %v853
        %v856 = vmul.f32 %v855, %v853
        %v857 = vmul.f32 %v856, %v855
        %v858 = vmul.f32 0.5, %v857
        %v859 = vsub.f32 1.5, %v858
        %v860 = vmul.f32 %v855, %v859
        %vm861 = vweird.f32 %v853
        %vm862 = vweird.f32 %v855
        %vm863 = vmor %vm861, %vm862
        %v864 = vsel %vm863, %v855, %v860
        %v865 = vrsqrt.pop %v854
        %v866 = vmul.f32 %v865, %v854
        %v867 = vmul.f32 %v866, %v865
        %v868 = vmul.f32 0.5, %v867
        %v869 = vsub.f32 1.5, %v868
        %v870 = vmul.f32 %v865, %v869
        %vm871 = vweird.f32 %v854
        %vm872 = vweird.f32 %v865
        %vm873 = vmor %vm871, %vm872
        %v874 = vsel %vm873, %v865, %v870
        %v875 = vmul.f32 %v842, %v864
        %v876 = vmul.f32 %v843, %v874
        %v878 = vperm.slane %v825, 0
        %v880 = vmul.f32 %v875, %v878
        %v881 = vmul.f32 %v876, %v878
        %v883 = vperm.slane %v826, 0
        %v885 = vadd.f32 %v880, %v883
        %v886 = vadd.f32 %v881, %v883
        %v887 = vpack.c.bf16 %v885, %v885
        %v888 = vpack.c.bf16 %v886, %v886
        %v889 = vld [vmem:[%s7] sm:$0xf]
        %v890 = vld [vmem:[%s7 + $0x4] sm:$0xf]
        %v891 = vld [vmem:[%s7 + $0x8] sm:$0xf]
        %v892 = vld [vmem:[%s7 + $0xc] sm:$0xf]
        %v893 = vld [vmem:[%s7 + $0x10] sm:$0xf]
        %v894 = vld [vmem:[%s7 + $0x14] sm:$0xf]
        %v895 = vld [vmem:[%s7 + $0x18] sm:$0xf]
        %v896 = vld [vmem:[%s7 + $0x1c] sm:$0xf]
        %v897 = vld [vmem:[%s7 + $0x20] sm:$0xf]
        %v898 = vld [vmem:[%s7 + $0x24] sm:$0xf]
        %v899 = vld [vmem:[%s7 + $0x28] sm:$0xf]
        %v900 = vld [vmem:[%s7 + $0x2c] sm:$0xf]
        %v901 = vld [vmem:[%s7 + $0x30] sm:$0xf]
        %v902 = vld [vmem:[%s7 + $0x34] sm:$0xf]
        %v903 = vld [vmem:[%s7 + $0x38] sm:$0xf]
        %v904 = vld [vmem:[%s7 + $0x3c] sm:$0xf]
        %v905 = vld [vmem:[%s7 + $0x40] sm:$0xf]
        %v906 = vld [vmem:[%s7 + $0x44] sm:$0xf]
        %v907 = vld [vmem:[%s7 + $0x48] sm:$0xf]
        %v908 = vld [vmem:[%s7 + $0x4c] sm:$0xf]
        %v909 = vld [vmem:[%s7 + $0x50] sm:$0xf]
        %v910 = vld [vmem:[%s7 + $0x54] sm:$0xf]
        %v911 = vld [vmem:[%s7 + $0x58] sm:$0xf]
        %v912 = vld [vmem:[%s7 + $0x5c] sm:$0xf]
        %v913 = vld [vmem:[%s7 + $0x60] sm:$0xf]
        %v914 = vld [vmem:[%s7 + $0x64] sm:$0xf]
        %v915 = vld [vmem:[%s7 + $0x68] sm:$0xf]
        %v916 = vld [vmem:[%s7 + $0x6c] sm:$0xf]
        %v917 = vld [vmem:[%s7 + $0x70] sm:$0xf]
        %v918 = vld [vmem:[%s7 + $0x74] sm:$0xf]
        %v919 = vld [vmem:[%s7 + $0x78] sm:$0xf]
        %v920 = vld [vmem:[%s7 + $0x7c] sm:$0xf]
        %v921 = vld [vmem:[%s7 + $0x80] sm:$0xf]
        %v922 = vld [vmem:[%s7 + $0x84] sm:$0xf]
        %v923 = vld [vmem:[%s7 + $0x88] sm:$0xf]
        %v924 = vld [vmem:[%s7 + $0x8c] sm:$0xf]
        %v925 = vld [vmem:[%s7 + $0x90] sm:$0xf]
        %v926 = vld [vmem:[%s7 + $0x94] sm:$0xf]
        %v927 = vld [vmem:[%s7 + $0x98] sm:$0xf]
        %v928 = vld [vmem:[%s7 + $0x9c] sm:$0xf]
        %v929 = vld [vmem:[%s7 + $0xa0] sm:$0xf]
        %v930 = vld [vmem:[%s7 + $0xa4] sm:$0xf]
        %v931 = vld [vmem:[%s7 + $0xa8] sm:$0xf]
        %v932 = vld [vmem:[%s7 + $0xac] sm:$0xf]
        %v933 = vld [vmem:[%s7 + $0xb0] sm:$0xf]
        %v934 = vld [vmem:[%s7 + $0xb4] sm:$0xf]
        %v935 = vld [vmem:[%s7 + $0xb8] sm:$0xf]
        %v936 = vld [vmem:[%s7 + $0xbc] sm:$0xf]
        %v937 = vld [vmem:[%s7 + $0xc0] sm:$0xf]
        %v938 = vld [vmem:[%s7 + $0xc4] sm:$0xf]
        %v939 = vld [vmem:[%s7 + $0xc8] sm:$0xf]
        %v940 = vld [vmem:[%s7 + $0xcc] sm:$0xf]
        %v941 = vld [vmem:[%s7 + $0xd0] sm:$0xf]
        %v942 = vld [vmem:[%s7 + $0xd4] sm:$0xf]
        %v943 = vld [vmem:[%s7 + $0xd8] sm:$0xf]
        %v944 = vld [vmem:[%s7 + $0xdc] sm:$0xf]
        %v945 = vld [vmem:[%s7 + $0xe0] sm:$0xf]
        %v946 = vld [vmem:[%s7 + $0xe4] sm:$0xf]
        %v947 = vld [vmem:[%s7 + $0xe8] sm:$0xf]
        %v948 = vld [vmem:[%s7 + $0xec] sm:$0xf]
        %v949 = vld [vmem:[%s7 + $0xf0] sm:$0xf]
        %v950 = vld [vmem:[%s7 + $0xf4] sm:$0xf]
        %v951 = vld [vmem:[%s7 + $0xf8] sm:$0xf]
        %v952 = vld [vmem:[%s7 + $0xfc] sm:$0xf]
        %v955 = vunpack.c.l.b16 %v887
        %v956 = vunpack.c.l.b16 %v888
        %v957 = vpack.c.b16 %v956, %v955
        %v975 = vunpack.c.l.b16 %v889
        %v976 = vunpack.c.l.b16 %v890
        %v977 = vunpack.c.l.b16 %v891
        %v978 = vunpack.c.l.b16 %v892
        %v979 = vunpack.c.l.b16 %v893
        %v980 = vunpack.c.l.b16 %v894
        %v981 = vunpack.c.l.b16 %v895
        %v982 = vunpack.c.l.b16 %v896
        %v983 = vunpack.c.l.b16 %v897
        %v984 = vunpack.c.l.b16 %v898
        %v985 = vunpack.c.l.b16 %v899
        %v986 = vunpack.c.l.b16 %v900
        %v987 = vunpack.c.l.b16 %v901
        %v988 = vunpack.c.l.b16 %v902
        %v989 = vunpack.c.l.b16 %v903
        %v990 = vunpack.c.l.b16 %v904
        %v991 = vpack.c.b16 %v976, %v975
        %v992 = vpack.c.b16 %v978, %v977
        %v993 = vpack.c.b16 %v980, %v979
        %v994 = vpack.c.b16 %v982, %v981
        %v995 = vpack.c.b16 %v984, %v983
        %v996 = vpack.c.b16 %v986, %v985
        %v997 = vpack.c.b16 %v988, %v987
        %v998 = vpack.c.b16 %v990, %v989
        %1007 = vmatpush.bf16.msra.mxu0 %v998
        %1008 = vmatpush.bf16.msra.mxu0 %v997
        %1009 = vmatpush.bf16.msra.mxu0 %v996
        %1010 = vmatpush.bf16.msra.mxu0 %v995
        %1011 = vmatpush.bf16.msra.mxu0 %v994
        %1012 = vmatpush.bf16.msra.mxu0 %v993
        %1013 = vmatpush.bf16.msra.mxu0 %v992
        %1014 = vmatpush.bf16.msra.mxu0 %v991
        %1015 = vmatmul.bf16.gmra.mxu0 %v957
        %v1016 = vpop.f32.mrf.mxu0
        %v1017 = vadd.f32 0.0, %v1016
        %v1018 = vpop.f32.mrf.mxu0
        %v1019 = vadd.f32 0.0, %v1018
        %1020 = vdwg.mxu0
        %v1037 = vunpack.c.l.b16 %v905
        %v1038 = vunpack.c.l.b16 %v906
        %v1039 = vunpack.c.l.b16 %v907
        %v1040 = vunpack.c.l.b16 %v908
        %v1041 = vunpack.c.l.b16 %v909
        %v1042 = vunpack.c.l.b16 %v910
        %v1043 = vunpack.c.l.b16 %v911
        %v1044 = vunpack.c.l.b16 %v912
        %v1045 = vunpack.c.l.b16 %v913
        %v1046 = vunpack.c.l.b16 %v914
        %v1047 = vunpack.c.l.b16 %v915
        %v1048 = vunpack.c.l.b16 %v916
        %v1049 = vunpack.c.l.b16 %v917
        %v1050 = vunpack.c.l.b16 %v918
        %v1051 = vunpack.c.l.b16 %v919
        %v1052 = vunpack.c.l.b16 %v920
        %v1053 = vpack.c.b16 %v1038, %v1037
        %v1054 = vpack.c.b16 %v1040, %v1039
        %v1055 = vpack.c.b16 %v1042, %v1041
        %v1056 = vpack.c.b16 %v1044, %v1043
        %v1057 = vpack.c.b16 %v1046, %v1045
        %v1058 = vpack.c.b16 %v1048, %v1047
        %v1059 = vpack.c.b16 %v1050, %v1049
        %v1060 = vpack.c.b16 %v1052, %v1051
        %1069 = vmatpush.bf16.msra.mxu0 %v1060
        %1070 = vmatpush.bf16.msra.mxu0 %v1059
        %1071 = vmatpush.bf16.msra.mxu0 %v1058
        %1072 = vmatpush.bf16.msra.mxu0 %v1057
        %1073 = vmatpush.bf16.msra.mxu0 %v1056
        %1074 = vmatpush.bf16.msra.mxu0 %v1055
        %1075 = vmatpush.bf16.msra.mxu0 %v1054
        %1076 = vmatpush.bf16.msra.mxu0 %v1053
        %1077 = vmatmul.bf16.gmra.mxu0 %v957
        %v1078 = vpop.f32.mrf.mxu0
        %v1079 = vadd.f32 0.0, %v1078
        %v1080 = vpop.f32.mrf.mxu0
        %v1081 = vadd.f32 0.0, %v1080
        %1082 = vdwg.mxu0
        %v1099 = vunpack.c.l.b16 %v921
        %v1100 = vunpack.c.l.b16 %v922
        %v1101 = vunpack.c.l.b16 %v923
        %v1102 = vunpack.c.l.b16 %v924
        %v1103 = vunpack.c.l.b16 %v925
        %v1104 = vunpack.c.l.b16 %v926
        %v1105 = vunpack.c.l.b16 %v927
        %v1106 = vunpack.c.l.b16 %v928
        %v1107 = vunpack.c.l.b16 %v929
        %v1108 = vunpack.c.l.b16 %v930
        %v1109 = vunpack.c.l.b16 %v931
        %v1110 = vunpack.c.l.b16 %v932
        %v1111 = vunpack.c.l.b16 %v933
        %v1112 = vunpack.c.l.b16 %v934
        %v1113 = vunpack.c.l.b16 %v935
        %v1114 = vunpack.c.l.b16 %v936
        %v1115 = vpack.c.b16 %v1100, %v1099
        %v1116 = vpack.c.b16 %v1102, %v1101
        %v1117 = vpack.c.b16 %v1104, %v1103
        %v1118 = vpack.c.b16 %v1106, %v1105
        %v1119 = vpack.c.b16 %v1108, %v1107
        %v1120 = vpack.c.b16 %v1110, %v1109
        %v1121 = vpack.c.b16 %v1112, %v1111
        %v1122 = vpack.c.b16 %v1114, %v1113
        %1131 = vmatpush.bf16.msra.mxu0 %v1122
        %1132 = vmatpush.bf16.msra.mxu0 %v1121
        %1133 = vmatpush.bf16.msra.mxu0 %v1120
        %1134 = vmatpush.bf16.msra.mxu0 %v1119
        %1135 = vmatpush.bf16.msra.mxu0 %v1118
        %1136 = vmatpush.bf16.msra.mxu0 %v1117
        %1137 = vmatpush.bf16.msra.mxu0 %v1116
        %1138 = vmatpush.bf16.msra.mxu0 %v1115
        %1139 = vmatmul.bf16.gmra.mxu0 %v957
        %v1140 = vpop.f32.mrf.mxu0
        %v1141 = vadd.f32 0.0, %v1140
        %v1142 = vpop.f32.mrf.mxu0
        %v1143 = vadd.f32 0.0, %v1142
        %1144 = vdwg.mxu0
        %v1161 = vunpack.c.l.b16 %v937
        %v1162 = vunpack.c.l.b16 %v938
        %v1163 = vunpack.c.l.b16 %v939
        %v1164 = vunpack.c.l.b16 %v940
        %v1165 = vunpack.c.l.b16 %v941
        %v1166 = vunpack.c.l.b16 %v942
        %v1167 = vunpack.c.l.b16 %v943
        %v1168 = vunpack.c.l.b16 %v944
        %v1169 = vunpack.c.l.b16 %v945
        %v1170 = vunpack.c.l.b16 %v946
        %v1171 = vunpack.c.l.b16 %v947
        %v1172 = vunpack.c.l.b16 %v948
        %v1173 = vunpack.c.l.b16 %v949
        %v1174 = vunpack.c.l.b16 %v950
        %v1175 = vunpack.c.l.b16 %v951
        %v1176 = vunpack.c.l.b16 %v952
        %v1177 = vpack.c.b16 %v1162, %v1161
        %v1178 = vpack.c.b16 %v1164, %v1163
        %v1179 = vpack.c.b16 %v1166, %v1165
        %v1180 = vpack.c.b16 %v1168, %v1167
        %v1181 = vpack.c.b16 %v1170, %v1169
        %v1182 = vpack.c.b16 %v1172, %v1171
        %v1183 = vpack.c.b16 %v1174, %v1173
        %v1184 = vpack.c.b16 %v1176, %v1175
        %1193 = vmatpush.bf16.msra.mxu0 %v1184
        %1194 = vmatpush.bf16.msra.mxu0 %v1183
        %1195 = vmatpush.bf16.msra.mxu0 %v1182
        %1196 = vmatpush.bf16.msra.mxu0 %v1181
        %1197 = vmatpush.bf16.msra.mxu0 %v1180
        %1198 = vmatpush.bf16.msra.mxu0 %v1179
        %1199 = vmatpush.bf16.msra.mxu0 %v1178
        %1200 = vmatpush.bf16.msra.mxu0 %v1177
        %1201 = vmatmul.bf16.gmra.mxu0 %v957
        %v1202 = vpop.f32.mrf.mxu0
        %v1203 = vadd.f32 0.0, %v1202
        %v1204 = vpop.f32.mrf.mxu0
        %v1205 = vadd.f32 0.0, %v1204
        %1206 = vdwg.mxu0
        %v1207 = vld [vmem:[%s8] sm:$0xf]
        %v1208 = vld [vmem:[%s8 + $0x4] sm:$0xf]
        %v1209 = vld [vmem:[%s8 + $0x8] sm:$0xf]
        %v1210 = vld [vmem:[%s8 + $0xc] sm:$0xf]
        %v1211 = vld [vmem:[%s8 + $0x10] sm:$0xf]
        %v1212 = vld [vmem:[%s8 + $0x14] sm:$0xf]
        %v1213 = vld [vmem:[%s8 + $0x18] sm:$0xf]
        %v1214 = vld [vmem:[%s8 + $0x1c] sm:$0xf]
        %v1215 = vld [vmem:[%s8 + $0x20] sm:$0xf]
        %v1216 = vld [vmem:[%s8 + $0x24] sm:$0xf]
        %v1217 = vld [vmem:[%s8 + $0x28] sm:$0xf]
        %v1218 = vld [vmem:[%s8 + $0x2c] sm:$0xf]
        %v1219 = vld [vmem:[%s8 + $0x30] sm:$0xf]
        %v1220 = vld [vmem:[%s8 + $0x34] sm:$0xf]
        %v1221 = vld [vmem:[%s8 + $0x38] sm:$0xf]
        %v1222 = vld [vmem:[%s8 + $0x3c] sm:$0xf]
        %v1223 = vld [vmem:[%s8 + $0x40] sm:$0xf]
        %v1224 = vld [vmem:[%s8 + $0x44] sm:$0xf]
        %v1225 = vld [vmem:[%s8 + $0x48] sm:$0xf]
        %v1226 = vld [vmem:[%s8 + $0x4c] sm:$0xf]
        %v1227 = vld [vmem:[%s8 + $0x50] sm:$0xf]
        %v1228 = vld [vmem:[%s8 + $0x54] sm:$0xf]
        %v1229 = vld [vmem:[%s8 + $0x58] sm:$0xf]
        %v1230 = vld [vmem:[%s8 + $0x5c] sm:$0xf]
        %v1231 = vld [vmem:[%s8 + $0x60] sm:$0xf]
        %v1232 = vld [vmem:[%s8 + $0x64] sm:$0xf]
        %v1233 = vld [vmem:[%s8 + $0x68] sm:$0xf]
        %v1234 = vld [vmem:[%s8 + $0x6c] sm:$0xf]
        %v1235 = vld [vmem:[%s8 + $0x70] sm:$0xf]
        %v1236 = vld [vmem:[%s8 + $0x74] sm:$0xf]
        %v1237 = vld [vmem:[%s8 + $0x78] sm:$0xf]
        %v1238 = vld [vmem:[%s8 + $0x7c] sm:$0xf]
        %v1239 = vld [vmem:[%s8 + $0x80] sm:$0xf]
        %v1240 = vld [vmem:[%s8 + $0x84] sm:$0xf]
        %v1241 = vld [vmem:[%s8 + $0x88] sm:$0xf]
        %v1242 = vld [vmem:[%s8 + $0x8c] sm:$0xf]
        %v1243 = vld [vmem:[%s8 + $0x90] sm:$0xf]
        %v1244 = vld [vmem:[%s8 + $0x94] sm:$0xf]
        %v1245 = vld [vmem:[%s8 + $0x98] sm:$0xf]
        %v1246 = vld [vmem:[%s8 + $0x9c] sm:$0xf]
        %v1247 = vld [vmem:[%s8 + $0xa0] sm:$0xf]
        %v1248 = vld [vmem:[%s8 + $0xa4] sm:$0xf]
        %v1249 = vld [vmem:[%s8 + $0xa8] sm:$0xf]
        %v1250 = vld [vmem:[%s8 + $0xac] sm:$0xf]
        %v1251 = vld [vmem:[%s8 + $0xb0] sm:$0xf]
        %v1252 = vld [vmem:[%s8 + $0xb4] sm:$0xf]
        %v1253 = vld [vmem:[%s8 + $0xb8] sm:$0xf]
        %v1254 = vld [vmem:[%s8 + $0xbc] sm:$0xf]
        %v1255 = vld [vmem:[%s8 + $0xc0] sm:$0xf]
        %v1256 = vld [vmem:[%s8 + $0xc4] sm:$0xf]
        %v1257 = vld [vmem:[%s8 + $0xc8] sm:$0xf]
        %v1258 = vld [vmem:[%s8 + $0xcc] sm:$0xf]
        %v1259 = vld [vmem:[%s8 + $0xd0] sm:$0xf]
        %v1260 = vld [vmem:[%s8 + $0xd4] sm:$0xf]
        %v1261 = vld [vmem:[%s8 + $0xd8] sm:$0xf]
        %v1262 = vld [vmem:[%s8 + $0xdc] sm:$0xf]
        %v1263 = vld [vmem:[%s8 + $0xe0] sm:$0xf]
        %v1264 = vld [vmem:[%s8 + $0xe4] sm:$0xf]
        %v1265 = vld [vmem:[%s8 + $0xe8] sm:$0xf]
        %v1266 = vld [vmem:[%s8 + $0xec] sm:$0xf]
        %v1267 = vld [vmem:[%s8 + $0xf0] sm:$0xf]
        %v1268 = vld [vmem:[%s8 + $0xf4] sm:$0xf]
        %v1269 = vld [vmem:[%s8 + $0xf8] sm:$0xf]
        %v1270 = vld [vmem:[%s8 + $0xfc] sm:$0xf]
        %v1287 = vunpack.c.l.b16 %v1207
        %v1288 = vunpack.c.l.b16 %v1208
        %v1289 = vunpack.c.l.b16 %v1209
        %v1290 = vunpack.c.l.b16 %v1210
        %v1291 = vunpack.c.l.b16 %v1211
        %v1292 = vunpack.c.l.b16 %v1212
        %v1293 = vunpack.c.l.b16 %v1213
        %v1294 = vunpack.c.l.b16 %v1214
        %v1295 = vunpack.c.l.b16 %v1215
        %v1296 = vunpack.c.l.b16 %v1216
        %v1297 = vunpack.c.l.b16 %v1217
        %v1298 = vunpack.c.l.b16 %v1218
        %v1299 = vunpack.c.l.b16 %v1219
        %v1300 = vunpack.c.l.b16 %v1220
        %v1301 = vunpack.c.l.b16 %v1221
        %v1302 = vunpack.c.l.b16 %v1222
        %v1303 = vpack.c.b16 %v1288, %v1287
        %v1304 = vpack.c.b16 %v1290, %v1289
        %v1305 = vpack.c.b16 %v1292, %v1291
        %v1306 = vpack.c.b16 %v1294, %v1293
        %v1307 = vpack.c.b16 %v1296, %v1295
        %v1308 = vpack.c.b16 %v1298, %v1297
        %v1309 = vpack.c.b16 %v1300, %v1299
        %v1310 = vpack.c.b16 %v1302, %v1301
        %1319 = vmatpush.bf16.msra.mxu0 %v1310
        %1320 = vmatpush.bf16.msra.mxu0 %v1309
        %1321 = vmatpush.bf16.msra.mxu0 %v1308
        %1322 = vmatpush.bf16.msra.mxu0 %v1307
        %1323 = vmatpush.bf16.msra.mxu0 %v1306
        %1324 = vmatpush.bf16.msra.mxu0 %v1305
        %1325 = vmatpush.bf16.msra.mxu0 %v1304
        %1326 = vmatpush.bf16.msra.mxu0 %v1303
        %1327 = vmatmul.bf16.gmra.mxu0 %v957
        %v1328 = vpop.f32.mrf.mxu0
        %v1329 = vadd.f32 0.0, %v1328
        %v1330 = vpop.f32.mrf.mxu0
        %v1331 = vadd.f32 0.0, %v1330
        %1332 = vdwg.mxu0
        %v1349 = vunpack.c.l.b16 %v1223
        %v1350 = vunpack.c.l.b16 %v1224
        %v1351 = vunpack.c.l.b16 %v1225
        %v1352 = vunpack.c.l.b16 %v1226
        %v1353 = vunpack.c.l.b16 %v1227
        %v1354 = vunpack.c.l.b16 %v1228
        %v1355 = vunpack.c.l.b16 %v1229
        %v1356 = vunpack.c.l.b16 %v1230
        %v1357 = vunpack.c.l.b16 %v1231
        %v1358 = vunpack.c.l.b16 %v1232
        %v1359 = vunpack.c.l.b16 %v1233
        %v1360 = vunpack.c.l.b16 %v1234
        %v1361 = vunpack.c.l.b16 %v1235
        %v1362 = vunpack.c.l.b16 %v1236
        %v1363 = vunpack.c.l.b16 %v1237
        %v1364 = vunpack.c.l.b16 %v1238
        %v1365 = vpack.c.b16 %v1350, %v1349
        %v1366 = vpack.c.b16 %v1352, %v1351
        %v1367 = vpack.c.b16 %v1354, %v1353
        %v1368 = vpack.c.b16 %v1356, %v1355
        %v1369 = vpack.c.b16 %v1358, %v1357
        %v1370 = vpack.c.b16 %v1360, %v1359
        %v1371 = vpack.c.b16 %v1362, %v1361
        %v1372 = vpack.c.b16 %v1364, %v1363
        %1381 = vmatpush.bf16.msra.mxu0 %v1372
        %1382 = vmatpush.bf16.msra.mxu0 %v1371
        %1383 = vmatpush.bf16.msra.mxu0 %v1370
        %1384 = vmatpush.bf16.msra.mxu0 %v1369
        %1385 = vmatpush.bf16.msra.mxu0 %v1368
        %1386 = vmatpush.bf16.msra.mxu0 %v1367
        %1387 = vmatpush.bf16.msra.mxu0 %v1366
        %1388 = vmatpush.bf16.msra.mxu0 %v1365
        %1389 = vmatmul.bf16.gmra.mxu0 %v957
        %v1390 = vpop.f32.mrf.mxu0
        %v1391 = vadd.f32 0.0, %v1390
        %v1392 = vpop.f32.mrf.mxu0
        %v1393 = vadd.f32 0.0, %v1392
        %1394 = vdwg.mxu0
        %v1411 = vunpack.c.l.b16 %v1239
        %v1412 = vunpack.c.l.b16 %v1240
        %v1413 = vunpack.c.l.b16 %v1241
        %v1414 = vunpack.c.l.b16 %v1242
        %v1415 = vunpack.c.l.b16 %v1243
        %v1416 = vunpack.c.l.b16 %v1244
        %v1417 = vunpack.c.l.b16 %v1245
        %v1418 = vunpack.c.l.b16 %v1246
        %v1419 = vunpack.c.l.b16 %v1247
        %v1420 = vunpack.c.l.b16 %v1248
        %v1421 = vunpack.c.l.b16 %v1249
        %v1422 = vunpack.c.l.b16 %v1250
        %v1423 = vunpack.c.l.b16 %v1251
        %v1424 = vunpack.c.l.b16 %v1252
        %v1425 = vunpack.c.l.b16 %v1253
        %v1426 = vunpack.c.l.b16 %v1254
        %v1427 = vpack.c.b16 %v1412, %v1411
        %v1428 = vpack.c.b16 %v1414, %v1413
        %v1429 = vpack.c.b16 %v1416, %v1415
        %v1430 = vpack.c.b16 %v1418, %v1417
        %v1431 = vpack.c.b16 %v1420, %v1419
        %v1432 = vpack.c.b16 %v1422, %v1421
        %v1433 = vpack.c.b16 %v1424, %v1423
        %v1434 = vpack.c.b16 %v1426, %v1425
        %1443 = vmatpush.bf16.msra.mxu0 %v1434
        %1444 = vmatpush.bf16.msra.mxu0 %v1433
        %1445 = vmatpush.bf16.msra.mxu0 %v1432
        %1446 = vmatpush.bf16.msra.mxu0 %v1431
        %1447 = vmatpush.bf16.msra.mxu0 %v1430
        %1448 = vmatpush.bf16.msra.mxu0 %v1429
        %1449 = vmatpush.bf16.msra.mxu0 %v1428
        %1450 = vmatpush.bf16.msra.mxu0 %v1427
        %1451 = vmatmul.bf16.gmra.mxu0 %v957
        %v1452 = vpop.f32.mrf.mxu0
        %v1453 = vadd.f32 0.0, %v1452
        %v1454 = vpop.f32.mrf.mxu0
        %v1455 = vadd.f32 0.0, %v1454
        %1456 = vdwg.mxu0
        %v1473 = vunpack.c.l.b16 %v1255
        %v1474 = vunpack.c.l.b16 %v1256
        %v1475 = vunpack.c.l.b16 %v1257
        %v1476 = vunpack.c.l.b16 %v1258
        %v1477 = vunpack.c.l.b16 %v1259
        %v1478 = vunpack.c.l.b16 %v1260
        %v1479 = vunpack.c.l.b16 %v1261
        %v1480 = vunpack.c.l.b16 %v1262
        %v1481 = vunpack.c.l.b16 %v1263
        %v1482 = vunpack.c.l.b16 %v1264
        %v1483 = vunpack.c.l.b16 %v1265
        %v1484 = vunpack.c.l.b16 %v1266
        %v1485 = vunpack.c.l.b16 %v1267
        %v1486 = vunpack.c.l.b16 %v1268
        %v1487 = vunpack.c.l.b16 %v1269
        %v1488 = vunpack.c.l.b16 %v1270
        %v1489 = vpack.c.b16 %v1474, %v1473
        %v1490 = vpack.c.b16 %v1476, %v1475
        %v1491 = vpack.c.b16 %v1478, %v1477
        %v1492 = vpack.c.b16 %v1480, %v1479
        %v1493 = vpack.c.b16 %v1482, %v1481
        %v1494 = vpack.c.b16 %v1484, %v1483
        %v1495 = vpack.c.b16 %v1486, %v1485
        %v1496 = vpack.c.b16 %v1488, %v1487
        %1505 = vmatpush.bf16.msra.mxu0 %v1496
        %1506 = vmatpush.bf16.msra.mxu0 %v1495
        %1507 = vmatpush.bf16.msra.mxu0 %v1494
        %1508 = vmatpush.bf16.msra.mxu0 %v1493
        %1509 = vmatpush.bf16.msra.mxu0 %v1492
        %1510 = vmatpush.bf16.msra.mxu0 %v1491
        %1511 = vmatpush.bf16.msra.mxu0 %v1490
        %1512 = vmatpush.bf16.msra.mxu0 %v1489
        %1513 = vmatmul.bf16.gmra.mxu0 %v957
        %v1514 = vpop.f32.mrf.mxu0
        %v1515 = vadd.f32 0.0, %v1514
        %v1516 = vpop.f32.mrf.mxu0
        %v1517 = vadd.f32 0.0, %v1516
        %1518 = vdwg.mxu0
        %v1519 = vld [vmem:[%s9] sm:$0xf]
        %v1520 = vld [vmem:[%s9 + $0x4] sm:$0xf]
        %v1521 = vld [vmem:[%s9 + $0x8] sm:$0xf]
        %v1522 = vld [vmem:[%s9 + $0xc] sm:$0xf]
        %v1523 = vld [vmem:[%s9 + $0x10] sm:$0xf]
        %v1524 = vld [vmem:[%s9 + $0x14] sm:$0xf]
        %v1525 = vld [vmem:[%s9 + $0x18] sm:$0xf]
        %v1526 = vld [vmem:[%s9 + $0x1c] sm:$0xf]
        %v1527 = vld [vmem:[%s9 + $0x20] sm:$0xf]
        %v1528 = vld [vmem:[%s9 + $0x24] sm:$0xf]
        %v1529 = vld [vmem:[%s9 + $0x28] sm:$0xf]
        %v1530 = vld [vmem:[%s9 + $0x2c] sm:$0xf]
        %v1531 = vld [vmem:[%s9 + $0x30] sm:$0xf]
        %v1532 = vld [vmem:[%s9 + $0x34] sm:$0xf]
        %v1533 = vld [vmem:[%s9 + $0x38] sm:$0xf]
        %v1534 = vld [vmem:[%s9 + $0x3c] sm:$0xf]
        %v1535 = vld [vmem:[%s9 + $0x40] sm:$0xf]
        %v1536 = vld [vmem:[%s9 + $0x44] sm:$0xf]
        %v1537 = vld [vmem:[%s9 + $0x48] sm:$0xf]
        %v1538 = vld [vmem:[%s9 + $0x4c] sm:$0xf]
        %v1539 = vld [vmem:[%s9 + $0x50] sm:$0xf]
        %v1540 = vld [vmem:[%s9 + $0x54] sm:$0xf]
        %v1541 = vld [vmem:[%s9 + $0x58] sm:$0xf]
        %v1542 = vld [vmem:[%s9 + $0x5c] sm:$0xf]
        %v1543 = vld [vmem:[%s9 + $0x60] sm:$0xf]
        %v1544 = vld [vmem:[%s9 + $0x64] sm:$0xf]
        %v1545 = vld [vmem:[%s9 + $0x68] sm:$0xf]
        %v1546 = vld [vmem:[%s9 + $0x6c] sm:$0xf]
        %v1547 = vld [vmem:[%s9 + $0x70] sm:$0xf]
        %v1548 = vld [vmem:[%s9 + $0x74] sm:$0xf]
        %v1549 = vld [vmem:[%s9 + $0x78] sm:$0xf]
        %v1550 = vld [vmem:[%s9 + $0x7c] sm:$0xf]
        %v1551 = vld [vmem:[%s9 + $0x80] sm:$0xf]
        %v1552 = vld [vmem:[%s9 + $0x84] sm:$0xf]
        %v1553 = vld [vmem:[%s9 + $0x88] sm:$0xf]
        %v1554 = vld [vmem:[%s9 + $0x8c] sm:$0xf]
        %v1555 = vld [vmem:[%s9 + $0x90] sm:$0xf]
        %v1556 = vld [vmem:[%s9 + $0x94] sm:$0xf]
        %v1557 = vld [vmem:[%s9 + $0x98] sm:$0xf]
        %v1558 = vld [vmem:[%s9 + $0x9c] sm:$0xf]
        %v1559 = vld [vmem:[%s9 + $0xa0] sm:$0xf]
        %v1560 = vld [vmem:[%s9 + $0xa4] sm:$0xf]
        %v1561 = vld [vmem:[%s9 + $0xa8] sm:$0xf]
        %v1562 = vld [vmem:[%s9 + $0xac] sm:$0xf]
        %v1563 = vld [vmem:[%s9 + $0xb0] sm:$0xf]
        %v1564 = vld [vmem:[%s9 + $0xb4] sm:$0xf]
        %v1565 = vld [vmem:[%s9 + $0xb8] sm:$0xf]
        %v1566 = vld [vmem:[%s9 + $0xbc] sm:$0xf]
        %v1567 = vld [vmem:[%s9 + $0xc0] sm:$0xf]
        %v1568 = vld [vmem:[%s9 + $0xc4] sm:$0xf]
        %v1569 = vld [vmem:[%s9 + $0xc8] sm:$0xf]
        %v1570 = vld [vmem:[%s9 + $0xcc] sm:$0xf]
        %v1571 = vld [vmem:[%s9 + $0xd0] sm:$0xf]
        %v1572 = vld [vmem:[%s9 + $0xd4] sm:$0xf]
        %v1573 = vld [vmem:[%s9 + $0xd8] sm:$0xf]
        %v1574 = vld [vmem:[%s9 + $0xdc] sm:$0xf]
        %v1575 = vld [vmem:[%s9 + $0xe0] sm:$0xf]
        %v1576 = vld [vmem:[%s9 + $0xe4] sm:$0xf]
        %v1577 = vld [vmem:[%s9 + $0xe8] sm:$0xf]
        %v1578 = vld [vmem:[%s9 + $0xec] sm:$0xf]
        %v1579 = vld [vmem:[%s9 + $0xf0] sm:$0xf]
        %v1580 = vld [vmem:[%s9 + $0xf4] sm:$0xf]
        %v1581 = vld [vmem:[%s9 + $0xf8] sm:$0xf]
        %v1582 = vld [vmem:[%s9 + $0xfc] sm:$0xf]
        %v1599 = vunpack.c.l.b16 %v1519
        %v1600 = vunpack.c.l.b16 %v1520
        %v1601 = vunpack.c.l.b16 %v1521
        %v1602 = vunpack.c.l.b16 %v1522
        %v1603 = vunpack.c.l.b16 %v1523
        %v1604 = vunpack.c.l.b16 %v1524
        %v1605 = vunpack.c.l.b16 %v1525
        %v1606 = vunpack.c.l.b16 %v1526
        %v1607 = vunpack.c.l.b16 %v1527
        %v1608 = vunpack.c.l.b16 %v1528
        %v1609 = vunpack.c.l.b16 %v1529
        %v1610 = vunpack.c.l.b16 %v1530
        %v1611 = vunpack.c.l.b16 %v1531
        %v1612 = vunpack.c.l.b16 %v1532
        %v1613 = vunpack.c.l.b16 %v1533
        %v1614 = vunpack.c.l.b16 %v1534
        %v1615 = vpack.c.b16 %v1600, %v1599
        %v1616 = vpack.c.b16 %v1602, %v1601
        %v1617 = vpack.c.b16 %v1604, %v1603
        %v1618 = vpack.c.b16 %v1606, %v1605
        %v1619 = vpack.c.b16 %v1608, %v1607
        %v1620 = vpack.c.b16 %v1610, %v1609
        %v1621 = vpack.c.b16 %v1612, %v1611
        %v1622 = vpack.c.b16 %v1614, %v1613
        %1631 = vmatpush.bf16.msra.mxu0 %v1622
        %1632 = vmatpush.bf16.msra.mxu0 %v1621
        %1633 = vmatpush.bf16.msra.mxu0 %v1620
        %1634 = vmatpush.bf16.msra.mxu0 %v1619
        %1635 = vmatpush.bf16.msra.mxu0 %v1618
        %1636 = vmatpush.bf16.msra.mxu0 %v1617
        %1637 = vmatpush.bf16.msra.mxu0 %v1616
        %1638 = vmatpush.bf16.msra.mxu0 %v1615
        %1639 = vmatmul.bf16.gmra.mxu0 %v957
        %v1640 = vpop.f32.mrf.mxu0
        %v1641 = vadd.f32 0.0, %v1640
        %v1642 = vpop.f32.mrf.mxu0
        %v1643 = vadd.f32 0.0, %v1642
        %1644 = vdwg.mxu0
        %v1661 = vunpack.c.l.b16 %v1535
        %v1662 = vunpack.c.l.b16 %v1536
        %v1663 = vunpack.c.l.b16 %v1537
        %v1664 = vunpack.c.l.b16 %v1538
        %v1665 = vunpack.c.l.b16 %v1539
        %v1666 = vunpack.c.l.b16 %v1540
        %v1667 = vunpack.c.l.b16 %v1541
        %v1668 = vunpack.c.l.b16 %v1542
        %v1669 = vunpack.c.l.b16 %v1543
        %v1670 = vunpack.c.l.b16 %v1544
        %v1671 = vunpack.c.l.b16 %v1545
        %v1672 = vunpack.c.l.b16 %v1546
        %v1673 = vunpack.c.l.b16 %v1547
        %v1674 = vunpack.c.l.b16 %v1548
        %v1675 = vunpack.c.l.b16 %v1549
        %v1676 = vunpack.c.l.b16 %v1550
        %v1677 = vpack.c.b16 %v1662, %v1661
        %v1678 = vpack.c.b16 %v1664, %v1663
        %v1679 = vpack.c.b16 %v1666, %v1665
        %v1680 = vpack.c.b16 %v1668, %v1667
        %v1681 = vpack.c.b16 %v1670, %v1669
        %v1682 = vpack.c.b16 %v1672, %v1671
        %v1683 = vpack.c.b16 %v1674, %v1673
        %v1684 = vpack.c.b16 %v1676, %v1675
        %1693 = vmatpush.bf16.msra.mxu0 %v1684
        %1694 = vmatpush.bf16.msra.mxu0 %v1683
        %1695 = vmatpush.bf16.msra.mxu0 %v1682
        %1696 = vmatpush.bf16.msra.mxu0 %v1681
        %1697 = vmatpush.bf16.msra.mxu0 %v1680
        %1698 = vmatpush.bf16.msra.mxu0 %v1679
        %1699 = vmatpush.bf16.msra.mxu0 %v1678
        %1700 = vmatpush.bf16.msra.mxu0 %v1677
        %1701 = vmatmul.bf16.gmra.mxu0 %v957
        %v1702 = vpop.f32.mrf.mxu0
        %v1703 = vadd.f32 0.0, %v1702
        %v1704 = vpop.f32.mrf.mxu0
        %v1705 = vadd.f32 0.0, %v1704
        %1706 = vdwg.mxu0
        %v1723 = vunpack.c.l.b16 %v1551
        %v1724 = vunpack.c.l.b16 %v1552
        %v1725 = vunpack.c.l.b16 %v1553
        %v1726 = vunpack.c.l.b16 %v1554
        %v1727 = vunpack.c.l.b16 %v1555
        %v1728 = vunpack.c.l.b16 %v1556
        %v1729 = vunpack.c.l.b16 %v1557
        %v1730 = vunpack.c.l.b16 %v1558
        %v1731 = vunpack.c.l.b16 %v1559
        %v1732 = vunpack.c.l.b16 %v1560
        %v1733 = vunpack.c.l.b16 %v1561
        %v1734 = vunpack.c.l.b16 %v1562
        %v1735 = vunpack.c.l.b16 %v1563
        %v1736 = vunpack.c.l.b16 %v1564
        %v1737 = vunpack.c.l.b16 %v1565
        %v1738 = vunpack.c.l.b16 %v1566
        %v1739 = vpack.c.b16 %v1724, %v1723
        %v1740 = vpack.c.b16 %v1726, %v1725
        %v1741 = vpack.c.b16 %v1728, %v1727
        %v1742 = vpack.c.b16 %v1730, %v1729
        %v1743 = vpack.c.b16 %v1732, %v1731
        %v1744 = vpack.c.b16 %v1734, %v1733
        %v1745 = vpack.c.b16 %v1736, %v1735
        %v1746 = vpack.c.b16 %v1738, %v1737
        %1755 = vmatpush.bf16.msra.mxu0 %v1746
        %1756 = vmatpush.bf16.msra.mxu0 %v1745
        %1757 = vmatpush.bf16.msra.mxu0 %v1744
        %1758 = vmatpush.bf16.msra.mxu0 %v1743
        %1759 = vmatpush.bf16.msra.mxu0 %v1742
        %1760 = vmatpush.bf16.msra.mxu0 %v1741
        %1761 = vmatpush.bf16.msra.mxu0 %v1740
        %1762 = vmatpush.bf16.msra.mxu0 %v1739
        %1763 = vmatmul.bf16.gmra.mxu0 %v957
        %v1764 = vpop.f32.mrf.mxu0
        %v1765 = vadd.f32 0.0, %v1764
        %v1766 = vpop.f32.mrf.mxu0
        %v1767 = vadd.f32 0.0, %v1766
        %1768 = vdwg.mxu0
        %v1785 = vunpack.c.l.b16 %v1567
        %v1786 = vunpack.c.l.b16 %v1568
        %v1787 = vunpack.c.l.b16 %v1569
        %v1788 = vunpack.c.l.b16 %v1570
        %v1789 = vunpack.c.l.b16 %v1571
        %v1790 = vunpack.c.l.b16 %v1572
        %v1791 = vunpack.c.l.b16 %v1573
        %v1792 = vunpack.c.l.b16 %v1574
        %v1793 = vunpack.c.l.b16 %v1575
        %v1794 = vunpack.c.l.b16 %v1576
        %v1795 = vunpack.c.l.b16 %v1577
        %v1796 = vunpack.c.l.b16 %v1578
        %v1797 = vunpack.c.l.b16 %v1579
        %v1798 = vunpack.c.l.b16 %v1580
        %v1799 = vunpack.c.l.b16 %v1581
        %v1800 = vunpack.c.l.b16 %v1582
        %v1801 = vpack.c.b16 %v1786, %v1785
        %v1802 = vpack.c.b16 %v1788, %v1787
        %v1803 = vpack.c.b16 %v1790, %v1789
        %v1804 = vpack.c.b16 %v1792, %v1791
        %v1805 = vpack.c.b16 %v1794, %v1793
        %v1806 = vpack.c.b16 %v1796, %v1795
        %v1807 = vpack.c.b16 %v1798, %v1797
        %v1808 = vpack.c.b16 %v1800, %v1799
        %1817 = vmatpush.bf16.msra.mxu0 %v1808
        %1818 = vmatpush.bf16.msra.mxu0 %v1807
        %1819 = vmatpush.bf16.msra.mxu0 %v1806
        %1820 = vmatpush.bf16.msra.mxu0 %v1805
        %1821 = vmatpush.bf16.msra.mxu0 %v1804
        %1822 = vmatpush.bf16.msra.mxu0 %v1803
        %1823 = vmatpush.bf16.msra.mxu0 %v1802
        %1824 = vmatpush.bf16.msra.mxu0 %v1801
        %1825 = vmatmul.bf16.gmra.mxu0 %v957
        %v1826 = vpop.f32.mrf.mxu0
        %v1827 = vadd.f32 0.0, %v1826
        %v1828 = vpop.f32.mrf.mxu0
        %v1829 = vadd.f32 0.0, %v1828
        %1830 = vdwg.mxu0
        %v1831 = vpack.c.bf16 %v1017, %v1017
        %v1832 = vpack.c.bf16 %v1019, %v1019
        %v1833 = vpack.c.bf16 %v1079, %v1079
        %v1834 = vpack.c.bf16 %v1081, %v1081
        %v1835 = vpack.c.bf16 %v1141, %v1141
        %v1836 = vpack.c.bf16 %v1143, %v1143
        %v1837 = vpack.c.bf16 %v1203, %v1203
        %v1838 = vpack.c.bf16 %v1205, %v1205
        %v1839 = vpack.c.bf16 %v1329, %v1329
        %v1840 = vpack.c.bf16 %v1331, %v1331
        %v1841 = vpack.c.bf16 %v1391, %v1391
        %v1842 = vpack.c.bf16 %v1393, %v1393
        %v1843 = vpack.c.bf16 %v1453, %v1453
        %v1844 = vpack.c.bf16 %v1455, %v1455
        %v1845 = vpack.c.bf16 %v1515, %v1515
        %v1846 = vpack.c.bf16 %v1517, %v1517
        %v1849 = vunpack.c.l.b16 %v1831
        %v1850 = vunpack.c.l.b16 %v1832
        %v1851 = vpack.c.b16 %v1850, %v1849
        %v1854 = vunpack.c.l.b16 %v1839
        %v1855 = vunpack.c.l.b16 %v1840
        %v1856 = vpack.c.b16 %v1855, %v1854
        %vm1857 = vcmask 261120
        %v1859 = vsel %vm1857, %v1851, 0
        %v1862 = vsel %vm1857, %v1856, 0
        %1864 = vmatpush.bf16.xpose.msra.mxu0 0
        %1865 = vmatpush.bf16.xpose.msra.mxu0 0
        %1866 = vmatpush.bf16.xpose.msra.mxu0 0
        %1867 = vmatpush.bf16.xpose.msra.mxu0 0
        %1868 = vmatpush.bf16.xpose.msra.mxu0 0
        %1869 = vmatpush.bf16.xpose.msra.mxu0 0
        %1870 = vmatpush.bf16.xpose.msra.mxu0 0
        %1871 = vmatpush.bf16.xpose.msra.mxu0 %v1862
        %1872 = vmatmul.bf16.gmra.mxu0 %v1859
        %v1873 = vpop.f32.mrf.mxu0
        %v1874 = vadd.f32 0.0, %v1873
        %v1875 = vpop.f32.mrf.mxu0
        %v1876 = vadd.f32 0.0, %v1875
        %1877 = vdwg.mxu0
        %v1880 = vunpack.c.l.b16 %v1833
        %v1881 = vunpack.c.l.b16 %v1834
        %v1882 = vpack.c.b16 %v1881, %v1880
        %v1885 = vunpack.c.l.b16 %v1841
        %v1886 = vunpack.c.l.b16 %v1842
        %v1887 = vpack.c.b16 %v1886, %v1885
        %v1889 = vsel %vm1857, %v1882, 0
        %v1892 = vsel %vm1857, %v1887, 0
        %1894 = vmatpush.bf16.xpose.msra.mxu0 0
        %1895 = vmatpush.bf16.xpose.msra.mxu0 0
        %1896 = vmatpush.bf16.xpose.msra.mxu0 0
        %1897 = vmatpush.bf16.xpose.msra.mxu0 0
        %1898 = vmatpush.bf16.xpose.msra.mxu0 0
        %1899 = vmatpush.bf16.xpose.msra.mxu0 0
        %1900 = vmatpush.bf16.xpose.msra.mxu0 0
        %1901 = vmatpush.bf16.xpose.msra.mxu0 %v1892
        %1902 = vmatmul.bf16.gmra.mxu0 %v1889
        %v1903 = vpop.f32.mrf.mxu0
        %v1904 = vadd.f32 0.0, %v1903
        %v1905 = vpop.f32.mrf.mxu0
        %v1906 = vadd.f32 0.0, %v1905
        %1907 = vdwg.mxu0
        %v1910 = vunpack.c.l.b16 %v1835
        %v1911 = vunpack.c.l.b16 %v1836
        %v1912 = vpack.c.b16 %v1911, %v1910
        %v1915 = vunpack.c.l.b16 %v1843
        %v1916 = vunpack.c.l.b16 %v1844
        %v1917 = vpack.c.b16 %v1916, %v1915
        %v1919 = vsel %vm1857, %v1912, 0
        %v1922 = vsel %vm1857, %v1917, 0
        %1924 = vmatpush.bf16.xpose.msra.mxu0 0
        %1925 = vmatpush.bf16.xpose.msra.mxu0 0
        %1926 = vmatpush.bf16.xpose.msra.mxu0 0
        %1927 = vmatpush.bf16.xpose.msra.mxu0 0
        %1928 = vmatpush.bf16.xpose.msra.mxu0 0
        %1929 = vmatpush.bf16.xpose.msra.mxu0 0
        %1930 = vmatpush.bf16.xpose.msra.mxu0 0
        %1931 = vmatpush.bf16.xpose.msra.mxu0 %v1922
        %1932 = vmatmul.bf16.gmra.mxu0 %v1919
        %v1933 = vpop.f32.mrf.mxu0
        %v1934 = vadd.f32 0.0, %v1933
        %v1935 = vpop.f32.mrf.mxu0
        %v1936 = vadd.f32 0.0, %v1935
        %1937 = vdwg.mxu0
        %v1940 = vunpack.c.l.b16 %v1837
        %v1941 = vunpack.c.l.b16 %v1838
        %v1942 = vpack.c.b16 %v1941, %v1940
        %v1945 = vunpack.c.l.b16 %v1845
        %v1946 = vunpack.c.l.b16 %v1846
        %v1947 = vpack.c.b16 %v1946, %v1945
        %v1949 = vsel %vm1857, %v1942, 0
        %v1952 = vsel %vm1857, %v1947, 0
        %1954 = vmatpush.bf16.xpose.msra.mxu0 0
        %1955 = vmatpush.bf16.xpose.msra.mxu0 0
        %1956 = vmatpush.bf16.xpose.msra.mxu0 0
        %1957 = vmatpush.bf16.xpose.msra.mxu0 0
        %1958 = vmatpush.bf16.xpose.msra.mxu0 0
        %1959 = vmatpush.bf16.xpose.msra.mxu0 0
        %1960 = vmatpush.bf16.xpose.msra.mxu0 0
        %1961 = vmatpush.bf16.xpose.msra.mxu0 %v1952
        %1962 = vmatmul.bf16.gmra.mxu0 %v1949
        %v1963 = vpop.f32.mrf.mxu0
        %v1964 = vadd.f32 0.0, %v1963
        %v1965 = vpop.f32.mrf.mxu0
        %v1966 = vadd.f32 0.0, %v1965
        %1967 = vdwg.mxu0
        %v1968 = vmul.f32 %v1874, 0.17677669
        %v1969 = vmul.f32 %v1876, 0.17677669
        %v1970 = vmul.f32 %v1904, 0.17677669
        %v1971 = vmul.f32 %v1906, 0.17677669
        %v1972 = vmul.f32 %v1934, 0.17677669
        %v1973 = vmul.f32 %v1936, 0.17677669
        %v1974 = vmul.f32 %v1964, 0.17677669
        %v1975 = vmul.f32 %v1966, 0.17677669
        %vm1976 = vcmask 72704
        %v1977 = vsel %vm1976, %v1968, -inf
        %1978 = vmax.xlane.f32.xlu0 %v1977
        %v1979 = vpop.xlane.xlu0 %1978
        %vm1980 = vcmask 65536
        %v1981 = vsel %vm1980, %v1969, -inf
        %1982 = vmax.xlane.f32.xlu0 %v1981
        %v1983 = vpop.xlane.xlu0 %1982
        %v1984 = vsel %vm1976, %v1970, -inf
        %1985 = vmax.xlane.f32.xlu0 %v1984
        %v1986 = vpop.xlane.xlu0 %1985
        %v1987 = vsel %vm1980, %v1971, -inf
        %1988 = vmax.xlane.f32.xlu0 %v1987
        %v1989 = vpop.xlane.xlu0 %1988
        %v1990 = vsel %vm1976, %v1972, -inf
        %1991 = vmax.xlane.f32.xlu0 %v1990
        %v1992 = vpop.xlane.xlu0 %1991
        %v1993 = vsel %vm1980, %v1973, -inf
        %1994 = vmax.xlane.f32.xlu0 %v1993
        %v1995 = vpop.xlane.xlu0 %1994
        %v1996 = vsel %vm1976, %v1974, -inf
        %1997 = vmax.xlane.f32.xlu0 %v1996
        %v1998 = vpop.xlane.xlu0 %1997
        %v1999 = vsel %vm1980, %v1975, -inf
        %2000 = vmax.xlane.f32.xlu0 %v1999
        %v2001 = vpop.xlane.xlu0 %2000
        %v2002 = vsub.f32 %v1968, %v1979
        %v2003 = vsub.f32 %v1969, %v1983
        %v2004 = vsub.f32 %v1970, %v1986
        %v2005 = vsub.f32 %v1971, %v1989
        %v2006 = vsub.f32 %v1972, %v1992
        %v2007 = vsub.f32 %v1973, %v1995
        %v2008 = vsub.f32 %v1974, %v1998
        %v2009 = vsub.f32 %v1975, %v2001
        %v2010 = vmul.f32 %v2002, 1.442695
        %v2011 = vpow.pop %v2010
        %v2012 = vmul.f32 %v2003, 1.442695
        %v2013 = vpow.pop %v2012
        %v2014 = vmul.f32 %v2004, 1.442695
        %v2015 = vpow.pop %v2014
        %v2016 = vmul.f32 %v2005, 1.442695
        %v2017 = vpow.pop %v2016
        %v2018 = vmul.f32 %v2006, 1.442695
        %v2019 = vpow.pop %v2018
        %v2020 = vmul.f32 %v2007, 1.442695
        %v2021 = vpow.pop %v2020
        %v2022 = vmul.f32 %v2008, 1.442695
        %v2023 = vpow.pop %v2022
        %v2024 = vmul.f32 %v2009, 1.442695
        %v2025 = vpow.pop %v2024
        %v2026 = vsel %vm1976, %v2011, 0.0
        %2027 = vadd.xlane.f32.xlu0 %v2026
        %v2028 = vpop.xlane.xlu0 %2027
        %v2029 = vsel %vm1980, %v2013, 0.0
        %2030 = vadd.xlane.f32.xlu0 %v2029
        %v2031 = vpop.xlane.xlu0 %2030
        %v2032 = vsel %vm1976, %v2015, 0.0
        %2033 = vadd.xlane.f32.xlu0 %v2032
        %v2034 = vpop.xlane.xlu0 %2033
        %v2035 = vsel %vm1980, %v2017, 0.0
        %2036 = vadd.xlane.f32.xlu0 %v2035
        %v2037 = vpop.xlane.xlu0 %2036
        %v2038 = vsel %vm1976, %v2019, 0.0
        %2039 = vadd.xlane.f32.xlu0 %v2038
        %v2040 = vpop.xlane.xlu0 %2039
        %v2041 = vsel %vm1980, %v2021, 0.0
        %2042 = vadd.xlane.f32.xlu0 %v2041
        %v2043 = vpop.xlane.xlu0 %2042
        %v2044 = vsel %vm1976, %v2023, 0.0
        %2045 = vadd.xlane.f32.xlu0 %v2044
        %v2046 = vpop.xlane.xlu0 %2045
        %v2047 = vsel %vm1980, %v2025, 0.0
        %2048 = vadd.xlane.f32.xlu0 %v2047
        %v2049 = vpop.xlane.xlu0 %2048
        %v2050 = vrcp.pop %v2028
        %v2051 = vrcp.pop %v2031
        %v2052 = vrcp.pop %v2034
        %v2053 = vrcp.pop %v2037
        %v2054 = vrcp.pop %v2040
        %v2055 = vrcp.pop %v2043
        %v2056 = vrcp.pop %v2046
        %v2057 = vrcp.pop %v2049
        %v2058 = vmul.f32 %v2011, %v2050
        %v2059 = vmul.f32 %v2013, %v2051
        %v2060 = vmul.f32 %v2015, %v2052
        %v2061 = vmul.f32 %v2017, %v2053
        %v2062 = vmul.f32 %v2019, %v2054
        %v2063 = vmul.f32 %v2021, %v2055
        %v2064 = vmul.f32 %v2023, %v2056
        %v2065 = vmul.f32 %v2025, %v2057
        %v2066 = vpack.c.bf16 %v2058, %v2058
        %v2067 = vpack.c.bf16 %v2059, %v2059
        %v2068 = vpack.c.bf16 %v2060, %v2060
        %v2069 = vpack.c.bf16 %v2061, %v2061
        %v2070 = vpack.c.bf16 %v2062, %v2062
        %v2071 = vpack.c.bf16 %v2063, %v2063
        %v2072 = vpack.c.bf16 %v2064, %v2064
        %v2073 = vpack.c.bf16 %v2065, %v2065
        %v2074 = vpack.c.bf16 %v1641, %v1641
        %v2075 = vpack.c.bf16 %v1643, %v1643
        %v2076 = vpack.c.bf16 %v1703, %v1703
        %v2077 = vpack.c.bf16 %v1705, %v1705
        %v2078 = vpack.c.bf16 %v1765, %v1765
        %v2079 = vpack.c.bf16 %v1767, %v1767
        %v2080 = vpack.c.bf16 %v1827, %v1827
        %v2081 = vpack.c.bf16 %v1829, %v1829
        %v2084 = vunpack.c.l.b16 %v2066
        %v2085 = vunpack.c.l.b16 %v2067
        %v2086 = vpack.c.b16 %v2085, %v2084
        %v2089 = vunpack.c.l.b16 %v2074
        %v2090 = vunpack.c.l.b16 %v2075
        %v2091 = vpack.c.b16 %v2090, %v2089
        %v2093 = vsel %vm1976, %v2086, 0
        %vm2095 = vcmask 1043456
        %vm2096 = vcmask 1044480
        %v2097 = vsel %vm2095, 4294967295, 65535
        %v2098 = vsel %vm2096, %v2097, 0
        %v2100 = vand.u32 %v2091, %v2098
        %2102 = vmatpush.bf16.msra.mxu0 0
        %2103 = vmatpush.bf16.msra.mxu0 0
        %2104 = vmatpush.bf16.msra.mxu0 0
        %2105 = vmatpush.bf16.msra.mxu0 0
        %2106 = vmatpush.bf16.msra.mxu0 0
        %2107 = vmatpush.bf16.msra.mxu0 0
        %2108 = vmatpush.bf16.msra.mxu0 0
        %2109 = vmatpush.bf16.msra.mxu0 %v2100
        %2110 = vmatmul.bf16.gmra.mxu0 %v2093
        %v2111 = vpop.f32.mrf.mxu0
        %v2112 = vadd.f32 0.0, %v2111
        %v2113 = vpop.f32.mrf.mxu0
        %v2114 = vadd.f32 0.0, %v2113
        %2115 = vdwg.mxu0
        %v2118 = vunpack.c.l.b16 %v2068
        %v2119 = vunpack.c.l.b16 %v2069
        %v2120 = vpack.c.b16 %v2119, %v2118
        %v2123 = vunpack.c.l.b16 %v2076
        %v2124 = vunpack.c.l.b16 %v2077
        %v2125 = vpack.c.b16 %v2124, %v2123
        %v2127 = vsel %vm1976, %v2120, 0
        %v2130 = vand.u32 %v2125, %v2098
        %2132 = vmatpush.bf16.msra.mxu0 0
        %2133 = vmatpush.bf16.msra.mxu0 0
        %2134 = vmatpush.bf16.msra.mxu0 0
        %2135 = vmatpush.bf16.msra.mxu0 0
        %2136 = vmatpush.bf16.msra.mxu0 0
        %2137 = vmatpush.bf16.msra.mxu0 0
        %2138 = vmatpush.bf16.msra.mxu0 0
        %2139 = vmatpush.bf16.msra.mxu0 %v2130
        %2140 = vmatmul.bf16.gmra.mxu0 %v2127
        %v2141 = vpop.f32.mrf.mxu0
        %v2142 = vadd.f32 0.0, %v2141
        %v2143 = vpop.f32.mrf.mxu0
        %v2144 = vadd.f32 0.0, %v2143
        %2145 = vdwg.mxu0
        %v2148 = vunpack.c.l.b16 %v2070
        %v2149 = vunpack.c.l.b16 %v2071
        %v2150 = vpack.c.b16 %v2149, %v2148
        %v2153 = vunpack.c.l.b16 %v2078
        %v2154 = vunpack.c.l.b16 %v2079
        %v2155 = vpack.c.b16 %v2154, %v2153
        %v2157 = vsel %vm1976, %v2150, 0
        %v2160 = vand.u32 %v2155, %v2098
        %2162 = vmatpush.bf16.msra.mxu0 0
        %2163 = vmatpush.bf16.msra.mxu0 0
        %2164 = vmatpush.bf16.msra.mxu0 0
        %2165 = vmatpush.bf16.msra.mxu0 0
        %2166 = vmatpush.bf16.msra.mxu0 0
        %2167 = vmatpush.bf16.msra.mxu0 0
        %2168 = vmatpush.bf16.msra.mxu0 0
        %2169 = vmatpush.bf16.msra.mxu0 %v2160
        %2170 = vmatmul.bf16.gmra.mxu0 %v2157
        %v2171 = vpop.f32.mrf.mxu0
        %v2172 = vadd.f32 0.0, %v2171
        %v2173 = vpop.f32.mrf.mxu0
        %v2174 = vadd.f32 0.0, %v2173
        %2175 = vdwg.mxu0
        %v2178 = vunpack.c.l.b16 %v2072
        %v2179 = vunpack.c.l.b16 %v2073
        %v2180 = vpack.c.b16 %v2179, %v2178
        %v2183 = vunpack.c.l.b16 %v2080
        %v2184 = vunpack.c.l.b16 %v2081
        %v2185 = vpack.c.b16 %v2184, %v2183
        %v2187 = vsel %vm1976, %v2180, 0
        %v2190 = vand.u32 %v2185, %v2098
        %2192 = vmatpush.bf16.msra.mxu0 0
        %2193 = vmatpush.bf16.msra.mxu0 0
        %2194 = vmatpush.bf16.msra.mxu0 0
        %2195 = vmatpush.bf16.msra.mxu0 0
        %2196 = vmatpush.bf16.msra.mxu0 0
        %2197 = vmatpush.bf16.msra.mxu0 0
        %2198 = vmatpush.bf16.msra.mxu0 0
        %2199 = vmatpush.bf16.msra.mxu0 %v2190
        %2200 = vmatmul.bf16.gmra.mxu0 %v2187
        %v2201 = vpop.f32.mrf.mxu0
        %v2202 = vadd.f32 0.0, %v2201
        %v2203 = vpop.f32.mrf.mxu0
        %v2204 = vadd.f32 0.0, %v2203
        %2205 = vdwg.mxu0
        %v2206 = vpack.c.bf16 %v2112, %v2112
        %v2207 = vpack.c.bf16 %v2114, %v2114
        %v2208 = vpack.c.bf16 %v2142, %v2142
        %v2209 = vpack.c.bf16 %v2144, %v2144
        %v2210 = vpack.c.bf16 %v2172, %v2172
        %v2211 = vpack.c.bf16 %v2174, %v2174
        %v2212 = vpack.c.bf16 %v2202, %v2202
        %v2213 = vpack.c.bf16 %v2204, %v2204
        %v2214 = vld [vmem:[%s10] sm:$0xf]
        %v2215 = vld [vmem:[%s10 + $0x4] sm:$0xf]
        %v2216 = vld [vmem:[%s10 + $0x8] sm:$0xf]
        %v2217 = vld [vmem:[%s10 + $0xc] sm:$0xf]
        %v2218 = vld [vmem:[%s10 + $0x10] sm:$0xf]
        %v2219 = vld [vmem:[%s10 + $0x14] sm:$0xf]
        %v2220 = vld [vmem:[%s10 + $0x18] sm:$0xf]
        %v2221 = vld [vmem:[%s10 + $0x1c] sm:$0xf]
        %v2222 = vld [vmem:[%s10 + $0x20] sm:$0xf]
        %v2223 = vld [vmem:[%s10 + $0x24] sm:$0xf]
        %v2224 = vld [vmem:[%s10 + $0x28] sm:$0xf]
        %v2225 = vld [vmem:[%s10 + $0x2c] sm:$0xf]
        %v2226 = vld [vmem:[%s10 + $0x30] sm:$0xf]
        %v2227 = vld [vmem:[%s10 + $0x34] sm:$0xf]
        %v2228 = vld [vmem:[%s10 + $0x38] sm:$0xf]
        %v2229 = vld [vmem:[%s10 + $0x3c] sm:$0xf]
        %v2232 = vunpack.c.l.b16 %v2206
        %v2233 = vunpack.c.l.b16 %v2207
        %v2234 = vpack.c.b16 %v2233, %v2232
        %v2239 = vunpack.c.l.b16 %v2214
        %v2240 = vunpack.c.l.b16 %v2215
        %v2241 = vunpack.c.l.b16 %v2216
        %v2242 = vunpack.c.l.b16 %v2217
        %v2243 = vpack.c.b16 %v2240, %v2239
        %v2244 = vpack.c.b16 %v2242, %v2241
        %v2248 = vsel %vm1857, %v2234, 0
        %2250 = vmatpush.bf16.msra.mxu0 0
        %2251 = vmatpush.bf16.msra.mxu0 0
        %2252 = vmatpush.bf16.msra.mxu0 0
        %2253 = vmatpush.bf16.msra.mxu0 0
        %2254 = vmatpush.bf16.msra.mxu0 0
        %2255 = vmatpush.bf16.msra.mxu0 0
        %2256 = vmatpush.bf16.msra.mxu0 %v2244
        %2257 = vmatpush.bf16.msra.mxu0 %v2243
        %2258 = vmatmul.bf16.gmra.mxu0 %v2248
        %v2259 = vpop.f32.mrf.mxu0
        %v2260 = vadd.f32 0.0, %v2259
        %v2261 = vpop.f32.mrf.mxu0
        %v2262 = vadd.f32 0.0, %v2261
        %2263 = vdwg.mxu0
        %v2266 = vunpack.c.l.b16 %v2208
        %v2267 = vunpack.c.l.b16 %v2209
        %v2268 = vpack.c.b16 %v2267, %v2266
        %v2273 = vunpack.c.l.b16 %v2218
        %v2274 = vunpack.c.l.b16 %v2219
        %v2275 = vunpack.c.l.b16 %v2220
        %v2276 = vunpack.c.l.b16 %v2221
        %v2277 = vpack.c.b16 %v2274, %v2273
        %v2278 = vpack.c.b16 %v2276, %v2275
        %v2282 = vsel %vm1857, %v2268, 0
        %2284 = vmatpush.bf16.msra.mxu0 0
        %2285 = vmatpush.bf16.msra.mxu0 0
        %2286 = vmatpush.bf16.msra.mxu0 0
        %2287 = vmatpush.bf16.msra.mxu0 0
        %2288 = vmatpush.bf16.msra.mxu0 0
        %2289 = vmatpush.bf16.msra.mxu0 0
        %2290 = vmatpush.bf16.msra.mxu0 %v2278
        %2291 = vmatpush.bf16.msra.mxu0 %v2277
        %2292 = vmatmul.bf16.gmra.mxu0 %v2282
        %v2293 = vpop.f32.mrf.mxu0
        %v2294 = vadd.f32 0.0, %v2293
        %v2295 = vpop.f32.mrf.mxu0
        %v2296 = vadd.f32 0.0, %v2295
        %2297 = vdwg.mxu0
        %v2300 = vunpack.c.l.b16 %v2210
        %v2301 = vunpack.c.l.b16 %v2211
        %v2302 = vpack.c.b16 %v2301, %v2300
        %v2307 = vunpack.c.l.b16 %v2222
        %v2308 = vunpack.c.l.b16 %v2223
        %v2309 = vunpack.c.l.b16 %v2224
        %v2310 = vunpack.c.l.b16 %v2225
        %v2311 = vpack.c.b16 %v2308, %v2307
        %v2312 = vpack.c.b16 %v2310, %v2309
        %v2316 = vsel %vm1857, %v2302, 0
        %2318 = vmatpush.bf16.msra.mxu0 0
        %2319 = vmatpush.bf16.msra.mxu0 0
        %2320 = vmatpush.bf16.msra.mxu0 0
        %2321 = vmatpush.bf16.msra.mxu0 0
        %2322 = vmatpush.bf16.msra.mxu0 0
        %2323 = vmatpush.bf16.msra.mxu0 0
        %2324 = vmatpush.bf16.msra.mxu0 %v2312
        %2325 = vmatpush.bf16.msra.mxu0 %v2311
        %2326 = vmatmul.bf16.gmra.mxu0 %v2316
        %v2327 = vpop.f32.mrf.mxu0
        %v2328 = vadd.f32 0.0, %v2327
        %v2329 = vpop.f32.mrf.mxu0
        %v2330 = vadd.f32 0.0, %v2329
        %2331 = vdwg.mxu0
        %v2334 = vunpack.c.l.b16 %v2212
        %v2335 = vunpack.c.l.b16 %v2213
        %v2336 = vpack.c.b16 %v2335, %v2334
        %v2341 = vunpack.c.l.b16 %v2226
        %v2342 = vunpack.c.l.b16 %v2227
        %v2343 = vunpack.c.l.b16 %v2228
        %v2344 = vunpack.c.l.b16 %v2229
        %v2345 = vpack.c.b16 %v2342, %v2341
        %v2346 = vpack.c.b16 %v2344, %v2343
        %v2350 = vsel %vm1857, %v2336, 0
        %2352 = vmatpush.bf16.msra.mxu0 0
        %2353 = vmatpush.bf16.msra.mxu0 0
        %2354 = vmatpush.bf16.msra.mxu0 0
        %2355 = vmatpush.bf16.msra.mxu0 0
        %2356 = vmatpush.bf16.msra.mxu0 0
        %2357 = vmatpush.bf16.msra.mxu0 0
        %2358 = vmatpush.bf16.msra.mxu0 %v2346
        %2359 = vmatpush.bf16.msra.mxu0 %v2345
        %2360 = vmatmul.bf16.gmra.mxu0 %v2350
        %v2361 = vpop.f32.mrf.mxu0
        %v2362 = vadd.f32 0.0, %v2361
        %v2363 = vpop.f32.mrf.mxu0
        %v2364 = vadd.f32 0.0, %v2363
        %2365 = vdwg.mxu0
        %v2366 = vadd.f32 %v2260, %v2294
        %v2367 = vadd.f32 %v2366, %v2328
        %v2368 = vadd.f32 %v2367, %v2362
        %v2369 = vsel %vm829, %v2262, 0.0
        %v2370 = vsel %vm829, %v2296, 0.0
        %v2371 = vadd.f32 %v2369, %v2370
        %v2372 = vsel %vm829, %v2330, 0.0
        %v2373 = vadd.f32 %v2371, %v2372
        %v2374 = vsel %vm829, %v2364, 0.0
        %v2375 = vadd.f32 %v2373, %v2374
        %v2376 = vadd.f32 %v823, %v2368
        %v2377 = vadd.f32 %v824, %v2375
        %v2378 = vld [vmem:[%s11] sm:$0x1]
        %v2380 = vperm.slane %v2378, 0
        %v2382 = vadd.f32 %v2376, %v2380
        %v2383 = vadd.f32 %v2377, %v2380
        %v2384 = vld [vmem:[%s12] sm:$0x1]
        %v2385 = vld [vmem:[%s13] sm:$0x1]
        %2386 = vadd.xlane.f32.xlu0 %v2382
        %v2387 = vpop.xlane.xlu0 %2386
        %v2388 = vsel %vm829, %v2383, 0.0
        %2389 = vadd.xlane.f32.xlu0 %v2388
        %v2390 = vpop.xlane.xlu0 %2389
        %v2391 = vmul.f32 %v2387, %v839
        %v2392 = vmul.f32 %v2390, %v839
        %v2393 = vsub.f32 %v2382, %v2391
        %v2394 = vsub.f32 %v2383, %v2392
        %v2395 = vmul.f32 %v2393, %v2393
        %v2396 = vmul.f32 %v2394, %v2394
        %2397 = vadd.xlane.f32.xlu0 %v2395
        %v2398 = vpop.xlane.xlu0 %2397
        %v2399 = vsel %vm829, %v2396, 0.0
        %2400 = vadd.xlane.f32.xlu0 %v2399
        %v2401 = vpop.xlane.xlu0 %2400
        %v2402 = vmul.f32 %v2398, %v839
        %v2403 = vmul.f32 %v2401, %v839
        %v2404 = vadd.f32 %v2402, 1e-05
        %v2405 = vadd.f32 %v2403, 1e-05
        %v2406 = vrsqrt.pop %v2404
        %v2407 = vmul.f32 %v2406, %v2404
        %v2408 = vmul.f32 %v2407, %v2406
        %v2409 = vmul.f32 0.5, %v2408
        %v2410 = vsub.f32 1.5, %v2409
        %v2411 = vmul.f32 %v2406, %v2410
        %vm2412 = vweird.f32 %v2404
        %vm2413 = vweird.f32 %v2406
        %vm2414 = vmor %vm2412, %vm2413
        %v2415 = vsel %vm2414, %v2406, %v2411
        %v2416 = vrsqrt.pop %v2405
        %v2417 = vmul.f32 %v2416, %v2405
        %v2418 = vmul.f32 %v2417, %v2416
        %v2419 = vmul.f32 0.5, %v2418
        %v2420 = vsub.f32 1.5, %v2419
        %v2421 = vmul.f32 %v2416, %v2420
        %vm2422 = vweird.f32 %v2405
        %vm2423 = vweird.f32 %v2416
        %vm2424 = vmor %vm2422, %vm2423
        %v2425 = vsel %vm2424, %v2416, %v2421
        %v2426 = vmul.f32 %v2393, %v2415
        %v2427 = vmul.f32 %v2394, %v2425
        %v2429 = vperm.slane %v2384, 0
        %v2431 = vmul.f32 %v2426, %v2429
        %v2432 = vmul.f32 %v2427, %v2429
        %v2434 = vperm.slane %v2385, 0
        %v2436 = vadd.f32 %v2431, %v2434
        %v2437 = vadd.f32 %v2432, %v2434
        %v2438 = vpack.c.bf16 %v2437, %v2436
        %v2439 = vld [vmem:[%s14] sm:$0xff]
        %v2440 = vld [vmem:[%s14 + $0x8] sm:$0xff]
        %v2441 = vld [vmem:[%s14 + $0x10] sm:$0xff]
        %v2442 = vld [vmem:[%s14 + $0x18] sm:$0xff]
        %v2443 = vld [vmem:[%s14 + $0x20] sm:$0xff]
        %v2444 = vld [vmem:[%s14 + $0x28] sm:$0xff]
        %v2445 = vld [vmem:[%s14 + $0x30] sm:$0xff]
        %v2446 = vld [vmem:[%s14 + $0x38] sm:$0xff]
        %v2447 = vld [vmem:[%s14 + $0x40] sm:$0xff]
        %v2448 = vld [vmem:[%s14 + $0x48] sm:$0xff]
        %v2449 = vld [vmem:[%s14 + $0x50] sm:$0xff]
        %v2450 = vld [vmem:[%s14 + $0x58] sm:$0xff]
        %v2451 = vld [vmem:[%s14 + $0x60] sm:$0xff]
        %v2452 = vld [vmem:[%s14 + $0x68] sm:$0xff]
        %v2453 = vld [vmem:[%s14 + $0x70] sm:$0xff]
        %v2454 = vld [vmem:[%s14 + $0x78] sm:$0xff]
        %v2455 = vld [vmem:[%s15] sm:$0x3]
        %v2457 = vperm.slane %v2455, 0
        %v2458 = vperm.slane %v2455, 1
        %v2477 = vunpack.c.l.b16 %v2439
        %v2478 = vunpack.c.h.b16 %v2439
        %v2479 = vunpack.c.l.b16 %v2440
        %v2480 = vunpack.c.h.b16 %v2440
        %v2481 = vunpack.c.l.b16 %v2441
        %v2482 = vunpack.c.h.b16 %v2441
        %v2483 = vunpack.c.l.b16 %v2442
        %v2484 = vunpack.c.h.b16 %v2442
        %v2485 = vunpack.c.l.b16 %v2443
        %v2486 = vunpack.c.h.b16 %v2443
        %v2487 = vunpack.c.l.b16 %v2444
        %v2488 = vunpack.c.h.b16 %v2444
        %v2489 = vunpack.c.l.b16 %v2445
        %v2490 = vunpack.c.h.b16 %v2445
        %v2491 = vunpack.c.l.b16 %v2446
        %v2492 = vunpack.c.h.b16 %v2446
        %v2493 = vunpack.c.l.b16 %v2447
        %v2494 = vunpack.c.h.b16 %v2447
        %v2495 = vunpack.c.l.b16 %v2448
        %v2496 = vunpack.c.h.b16 %v2448
        %v2497 = vunpack.c.l.b16 %v2449
        %v2498 = vunpack.c.h.b16 %v2449
        %v2499 = vunpack.c.l.b16 %v2450
        %v2500 = vunpack.c.h.b16 %v2450
        %v2501 = vunpack.c.l.b16 %v2451
        %v2502 = vunpack.c.h.b16 %v2451
        %v2503 = vunpack.c.l.b16 %v2452
        %v2504 = vunpack.c.h.b16 %v2452
        %v2505 = vunpack.c.l.b16 %v2453
        %v2506 = vunpack.c.h.b16 %v2453
        %v2507 = vunpack.c.l.b16 %v2454
        %v2508 = vunpack.c.h.b16 %v2454
        %v2509 = vpack.c.b16 %v2479, %v2477
        %v2510 = vpack.c.b16 %v2480, %v2478
        %v2511 = vpack.c.b16 %v2483, %v2481
        %v2512 = vpack.c.b16 %v2484, %v2482
        %v2513 = vpack.c.b16 %v2487, %v2485
        %v2514 = vpack.c.b16 %v2488, %v2486
        %v2515 = vpack.c.b16 %v2491, %v2489
        %v2516 = vpack.c.b16 %v2492, %v2490
        %v2517 = vpack.c.b16 %v2495, %v2493
        %v2518 = vpack.c.b16 %v2496, %v2494
        %v2519 = vpack.c.b16 %v2499, %v2497
        %v2520 = vpack.c.b16 %v2500, %v2498
        %v2521 = vpack.c.b16 %v2503, %v2501
        %v2522 = vpack.c.b16 %v2504, %v2502
        %v2523 = vpack.c.b16 %v2507, %v2505
        %v2524 = vpack.c.b16 %v2508, %v2506
        %2541 = vmatpush.bf16.msra.mxu0 %v2523
        %2542 = vmatpush.bf16.msra.mxu0 %v2521
        %2543 = vmatpush.bf16.msra.mxu0 %v2519
        %2544 = vmatpush.bf16.msra.mxu0 %v2517
        %2545 = vmatpush.bf16.msra.mxu0 %v2515
        %2546 = vmatpush.bf16.msra.mxu0 %v2513
        %2547 = vmatpush.bf16.msra.mxu0 %v2511
        %2548 = vmatpush.bf16.msra.mxu0 %v2509
        %2549 = vmatmul.bf16.gmra.mxu0 %v2438
        %v2550 = vpop.f32.mrf.mxu0
        %v2551 = vadd.f32 %v2457, %v2550
        %v2552 = vpop.f32.mrf.mxu0
        %v2553 = vadd.f32 %v2457, %v2552
        %2554 = vdwg.mxu0
        %2555 = vmatpush.bf16.msra.mxu0 %v2524
        %2556 = vmatpush.bf16.msra.mxu0 %v2522
        %2557 = vmatpush.bf16.msra.mxu0 %v2520
        %2558 = vmatpush.bf16.msra.mxu0 %v2518
        %2559 = vmatpush.bf16.msra.mxu0 %v2516
        %2560 = vmatpush.bf16.msra.mxu0 %v2514
        %2561 = vmatpush.bf16.msra.mxu0 %v2512
        %2562 = vmatpush.bf16.msra.mxu0 %v2510
        %2563 = vmatmul.bf16.gmra.mxu0 %v2438
        %v2564 = vpop.f32.mrf.mxu0
        %v2565 = vadd.f32 %v2458, %v2564
        %v2566 = vpop.f32.mrf.mxu0
        %v2567 = vadd.f32 %v2458, %v2566
        %2568 = vdwg.mxu0
        %v2569 = vmul.f32 %v2551, 0.5
        %v2570 = vmul.f32 %v2565, 0.5
        %v2571 = vmul.f32 %v2553, 0.5
        %v2572 = vmul.f32 %v2567, 0.5
        %v2573 = vmul.f32 %v2551, 0.70710677
        %v2574 = vmul.f32 %v2565, 0.70710677
        %v2575 = vmul.f32 %v2553, 0.70710677
        %v2576 = vmul.f32 %v2567, 0.70710677
        %v2577 = vand.u32 2147483647, %v2573
        %v2578 = vand.u32 2147483647, %v2574
        %v2579 = vand.u32 2147483647, %v2575
        %v2580 = vand.u32 2147483647, %v2576
        %v2581 = vmul.f32 %v2577, 0.3275911
        %v2582 = vmul.f32 %v2578, 0.3275911
        %v2583 = vmul.f32 %v2579, 0.3275911
        %v2584 = vmul.f32 %v2580, 0.3275911
        %v2585 = vadd.f32 %v2581, 1.0
        %v2586 = vadd.f32 %v2582, 1.0
        %v2587 = vadd.f32 %v2583, 1.0
        %v2588 = vadd.f32 %v2584, 1.0
        %v2589 = vrcp.pop %v2585
        %v2590 = vmul.f32 %v2585, %v2589
        %v2591 = vsub.f32 1.0, %v2590
        %v2592 = vmul.f32 %v2589, %v2591
        %v2593 = vadd.f32 %v2589, %v2592
        %vm2594 = vweird.f32 %v2585
        %vm2595 = vweird.f32 %v2589
        %vm2596 = vmor %vm2594, %vm2595
        %v2597 = vsel %vm2596, %v2589, %v2593
        %v2598 = vand.u32 2147483647, %v2585
        %vm2599 = vcmp.eq.f32.partialorder %v2598, 8.507059e+37
        %v2600 = vand.u32 %v2585, 2147483648
        %v2601 = vor.u32 1.1754944e-38, %v2600
        %v2602 = vsel %vm2599, %v2601, %v2597
        %v2603 = vmul.f32 1.0, %v2602
        %v2604 = vrcp.pop %v2586
        %v2605 = vmul.f32 %v2586, %v2604
        %v2606 = vsub.f32 1.0, %v2605
        %v2607 = vmul.f32 %v2604, %v2606
        %v2608 = vadd.f32 %v2604, %v2607
        %vm2609 = vweird.f32 %v2586
        %vm2610 = vweird.f32 %v2604
        %vm2611 = vmor %vm2609, %vm2610
        %v2612 = vsel %vm2611, %v2604, %v2608
        %v2613 = vand.u32 2147483647, %v2586
        %vm2614 = vcmp.eq.f32.partialorder %v2613, 8.507059e+37
        %v2615 = vand.u32 %v2586, 2147483648
        %v2616 = vor.u32 1.1754944e-38, %v2615
        %v2617 = vsel %vm2614, %v2616, %v2612
        %v2618 = vmul.f32 1.0, %v2617
        %v2619 = vrcp.pop %v2587
        %v2620 = vmul.f32 %v2587, %v2619
        %v2621 = vsub.f32 1.0, %v2620
        %v2622 = vmul.f32 %v2619, %v2621
        %v2623 = vadd.f32 %v2619, %v2622
        %vm2624 = vweird.f32 %v2587
        %vm2625 = vweird.f32 %v2619
        %vm2626 = vmor %vm2624, %vm2625
        %v2627 = vsel %vm2626, %v2619, %v2623
        %v2628 = vand.u32 2147483647, %v2587
        %vm2629 = vcmp.eq.f32.partialorder %v2628, 8.507059e+37
        %v2630 = vand.u32 %v2587, 2147483648
        %v2631 = vor.u32 1.1754944e-38, %v2630
        %v2632 = vsel %vm2629, %v2631, %v2627
        %v2633 = vmul.f32 1.0, %v2632
        %v2634 = vrcp.pop %v2588
        %v2635 = vmul.f32 %v2588, %v2634
        %v2636 = vsub.f32 1.0, %v2635
        %v2637 = vmul.f32 %v2634, %v2636
        %v2638 = vadd.f32 %v2634, %v2637
        %vm2639 = vweird.f32 %v2588
        %vm2640 = vweird.f32 %v2634
        %vm2641 = vmor %vm2639, %vm2640
        %v2642 = vsel %vm2641, %v2634, %v2638
        %v2643 = vand.u32 2147483647, %v2588
        %vm2644 = vcmp.eq.f32.partialorder %v2643, 8.507059e+37
        %v2645 = vand.u32 %v2588, 2147483648
        %v2646 = vor.u32 1.1754944e-38, %v2645
        %v2647 = vsel %vm2644, %v2646, %v2642
        %v2648 = vmul.f32 1.0, %v2647
        %v2649 = vmul.f32 %v2603, 1.0614054
        %v2650 = vmul.f32 %v2618, 1.0614054
        %v2651 = vmul.f32 %v2633, 1.0614054
        %v2652 = vmul.f32 %v2648, 1.0614054
        %v2653 = vadd.f32 %v2649, -1.4531521
        %v2654 = vadd.f32 %v2650, -1.4531521
        %v2655 = vadd.f32 %v2651, -1.4531521
        %v2656 = vadd.f32 %v2652, -1.4531521
        %v2657 = vmul.f32 %v2653, %v2603
        %v2658 = vmul.f32 %v2654, %v2618
        %v2659 = vmul.f32 %v2655, %v2633
        %v2660 = vmul.f32 %v2656, %v2648
        %v2661 = vadd.f32 %v2657, 1.4214138
        %v2662 = vadd.f32 %v2658, 1.4214138
        %v2663 = vadd.f32 %v2659, 1.4214138
        %v2664 = vadd.f32 %v2660, 1.4214138
        %v2665 = vmul.f32 %v2661, %v2603
        %v2666 = vmul.f32 %v2662, %v2618
        %v2667 = vmul.f32 %v2663, %v2633
        %v2668 = vmul.f32 %v2664, %v2648
        %v2669 = vadd.f32 %v2665, -0.28449672
        %v2670 = vadd.f32 %v2666, -0.28449672
        %v2671 = vadd.f32 %v2667, -0.28449672
        %v2672 = vadd.f32 %v2668, -0.28449672
        %v2673 = vmul.f32 %v2669, %v2603
        %v2674 = vmul.f32 %v2670, %v2618
        %v2675 = vmul.f32 %v2671, %v2633
        %v2676 = vmul.f32 %v2672, %v2648
        %v2677 = vadd.f32 %v2673, 0.2548296
        %v2678 = vadd.f32 %v2674, 0.2548296
        %v2679 = vadd.f32 %v2675, 0.2548296
        %v2680 = vadd.f32 %v2676, 0.2548296
        %v2681 = vmul.f32 %v2677, %v2603
        %v2682 = vmul.f32 %v2678, %v2618
        %v2683 = vmul.f32 %v2679, %v2633
        %v2684 = vmul.f32 %v2680, %v2648
        %v2685 = vmul.f32 %v2577, %v2577
        %v2686 = vmul.f32 %v2578, %v2578
        %v2687 = vmul.f32 %v2579, %v2579
        %v2688 = vmul.f32 %v2580, %v2580
        %v2689 = vsub.f32 0.0, %v2685
        %v2690 = vsub.f32 0.0, %v2686
        %v2691 = vsub.f32 0.0, %v2687
        %v2692 = vsub.f32 0.0, %v2688
        %v2693 = vmul.f32 %v2689, 1.442695
        %v2694 = vpow.pop %v2693
        %v2695 = vmul.f32 %v2690, 1.442695
        %v2696 = vpow.pop %v2695
        %v2697 = vmul.f32 %v2691, 1.442695
        %v2698 = vpow.pop %v2697
        %v2699 = vmul.f32 %v2692, 1.442695
        %v2700 = vpow.pop %v2699
        %v2701 = vmul.f32 %v2681, %v2694
        %v2702 = vmul.f32 %v2682, %v2696
        %v2703 = vmul.f32 %v2683, %v2698
        %v2704 = vmul.f32 %v2684, %v2700
        %v2705 = vsub.f32 1.0, %v2701
        %v2706 = vsub.f32 1.0, %v2702
        %v2707 = vsub.f32 1.0, %v2703
        %v2708 = vsub.f32 1.0, %v2704
        %vm2709 = vcmp.lt.f32.partialorder %v2573, 0.0
        %vm2710 = vcmp.lt.f32.partialorder %v2574, 0.0
        %vm2711 = vcmp.lt.f32.partialorder %v2575, 0.0
        %vm2712 = vcmp.lt.f32.partialorder %v2576, 0.0
        %v2713 = vsub.f32 0.0, %v2705
        %v2714 = vsub.f32 0.0, %v2706
        %v2715 = vsub.f32 0.0, %v2707
        %v2716 = vsub.f32 0.0, %v2708
        %v2717 = vsel %vm2709, %v2713, %v2705
        %v2718 = vsel %vm2710, %v2714, %v2706
        %v2719 = vsel %vm2711, %v2715, %v2707
        %v2720 = vsel %vm2712, %v2716, %v2708
        %v2721 = vadd.f32 %v2717, 1.0
        %v2722 = vadd.f32 %v2718, 1.0
        %v2723 = vadd.f32 %v2719, 1.0
        %v2724 = vadd.f32 %v2720, 1.0
        %v2725 = vmul.f32 %v2569, %v2721
        %v2726 = vmul.f32 %v2570, %v2722
        %v2727 = vmul.f32 %v2571, %v2723
        %v2728 = vmul.f32 %v2572, %v2724
        %v2729 = vpack.c.bf16 %v2727, %v2725
        %v2730 = vpack.c.bf16 %v2728, %v2726
        %v2731 = vld [vmem:[%s16] sm:$0xf]
        %v2732 = vld [vmem:[%s16 + $0x4] sm:$0xf]
        %v2733 = vld [vmem:[%s16 + $0x8] sm:$0xf]
        %v2734 = vld [vmem:[%s16 + $0xc] sm:$0xf]
        %v2735 = vld [vmem:[%s16 + $0x10] sm:$0xf]
        %v2736 = vld [vmem:[%s16 + $0x14] sm:$0xf]
        %v2737 = vld [vmem:[%s16 + $0x18] sm:$0xf]
        %v2738 = vld [vmem:[%s16 + $0x1c] sm:$0xf]
        %v2739 = vld [vmem:[%s16 + $0x20] sm:$0xf]
        %v2740 = vld [vmem:[%s16 + $0x24] sm:$0xf]
        %v2741 = vld [vmem:[%s16 + $0x28] sm:$0xf]
        %v2742 = vld [vmem:[%s16 + $0x2c] sm:$0xf]
        %v2743 = vld [vmem:[%s16 + $0x30] sm:$0xf]
        %v2744 = vld [vmem:[%s16 + $0x34] sm:$0xf]
        %v2745 = vld [vmem:[%s16 + $0x38] sm:$0xf]
        %v2746 = vld [vmem:[%s16 + $0x3c] sm:$0xf]
        %v2747 = vld [vmem:[%s16 + $0x40] sm:$0xf]
        %v2748 = vld [vmem:[%s16 + $0x44] sm:$0xf]
        %v2749 = vld [vmem:[%s16 + $0x48] sm:$0xf]
        %v2750 = vld [vmem:[%s16 + $0x4c] sm:$0xf]
        %v2751 = vld [vmem:[%s16 + $0x50] sm:$0xf]
        %v2752 = vld [vmem:[%s16 + $0x54] sm:$0xf]
        %v2753 = vld [vmem:[%s16 + $0x58] sm:$0xf]
        %v2754 = vld [vmem:[%s16 + $0x5c] sm:$0xf]
        %v2755 = vld [vmem:[%s16 + $0x60] sm:$0xf]
        %v2756 = vld [vmem:[%s16 + $0x64] sm:$0xf]
        %v2757 = vld [vmem:[%s16 + $0x68] sm:$0xf]
        %v2758 = vld [vmem:[%s16 + $0x6c] sm:$0xf]
        %v2759 = vld [vmem:[%s16 + $0x70] sm:$0xf]
        %v2760 = vld [vmem:[%s16 + $0x74] sm:$0xf]
        %v2761 = vld [vmem:[%s16 + $0x78] sm:$0xf]
        %v2762 = vld [vmem:[%s16 + $0x7c] sm:$0xf]
        %v2795 = vunpack.c.l.b16 %v2731
        %v2796 = vunpack.c.l.b16 %v2732
        %v2797 = vunpack.c.l.b16 %v2733
        %v2798 = vunpack.c.l.b16 %v2734
        %v2799 = vunpack.c.l.b16 %v2735
        %v2800 = vunpack.c.l.b16 %v2736
        %v2801 = vunpack.c.l.b16 %v2737
        %v2802 = vunpack.c.l.b16 %v2738
        %v2803 = vunpack.c.l.b16 %v2739
        %v2804 = vunpack.c.l.b16 %v2740
        %v2805 = vunpack.c.l.b16 %v2741
        %v2806 = vunpack.c.l.b16 %v2742
        %v2807 = vunpack.c.l.b16 %v2743
        %v2808 = vunpack.c.l.b16 %v2744
        %v2809 = vunpack.c.l.b16 %v2745
        %v2810 = vunpack.c.l.b16 %v2746
        %v2811 = vunpack.c.l.b16 %v2747
        %v2812 = vunpack.c.l.b16 %v2748
        %v2813 = vunpack.c.l.b16 %v2749
        %v2814 = vunpack.c.l.b16 %v2750
        %v2815 = vunpack.c.l.b16 %v2751
        %v2816 = vunpack.c.l.b16 %v2752
        %v2817 = vunpack.c.l.b16 %v2753
        %v2818 = vunpack.c.l.b16 %v2754
        %v2819 = vunpack.c.l.b16 %v2755
        %v2820 = vunpack.c.l.b16 %v2756
        %v2821 = vunpack.c.l.b16 %v2757
        %v2822 = vunpack.c.l.b16 %v2758
        %v2823 = vunpack.c.l.b16 %v2759
        %v2824 = vunpack.c.l.b16 %v2760
        %v2825 = vunpack.c.l.b16 %v2761
        %v2826 = vunpack.c.l.b16 %v2762
        %v2827 = vpack.c.b16 %v2796, %v2795
        %v2828 = vpack.c.b16 %v2798, %v2797
        %v2829 = vpack.c.b16 %v2800, %v2799
        %v2830 = vpack.c.b16 %v2802, %v2801
        %v2831 = vpack.c.b16 %v2804, %v2803
        %v2832 = vpack.c.b16 %v2806, %v2805
        %v2833 = vpack.c.b16 %v2808, %v2807
        %v2834 = vpack.c.b16 %v2810, %v2809
        %v2835 = vpack.c.b16 %v2812, %v2811
        %v2836 = vpack.c.b16 %v2814, %v2813
        %v2837 = vpack.c.b16 %v2816, %v2815
        %v2838 = vpack.c.b16 %v2818, %v2817
        %v2839 = vpack.c.b16 %v2820, %v2819
        %v2840 = vpack.c.b16 %v2822, %v2821
        %v2841 = vpack.c.b16 %v2824, %v2823
        %v2842 = vpack.c.b16 %v2826, %v2825
        %2859 = vmatpush.bf16.msra.mxu0 %v2834
        %2860 = vmatpush.bf16.msra.mxu0 %v2833
        %2861 = vmatpush.bf16.msra.mxu0 %v2832
        %2862 = vmatpush.bf16.msra.mxu0 %v2831
        %2863 = vmatpush.bf16.msra.mxu0 %v2830
        %2864 = vmatpush.bf16.msra.mxu0 %v2829
        %2865 = vmatpush.bf16.msra.mxu0 %v2828
        %2866 = vmatpush.bf16.msra.mxu0 %v2827
        %2867 = vmatmul.bf16.gmra.mxu0 %v2729
        %v2868 = vpop.f32.mrf.mxu0
        %v2869 = vadd.f32 0.0, %v2868
        %v2870 = vpop.f32.mrf.mxu0
        %v2871 = vadd.f32 0.0, %v2870
        %2872 = vdwg.mxu0
        %2873 = vmatpush.bf16.msra.mxu0 %v2842
        %2874 = vmatpush.bf16.msra.mxu0 %v2841
        %2875 = vmatpush.bf16.msra.mxu0 %v2840
        %2876 = vmatpush.bf16.msra.mxu0 %v2839
        %2877 = vmatpush.bf16.msra.mxu0 %v2838
        %2878 = vmatpush.bf16.msra.mxu0 %v2837
        %2879 = vmatpush.bf16.msra.mxu0 %v2836
        %2880 = vmatpush.bf16.msra.mxu0 %v2835
        %2881 = vmatmul.bf16.gmra.mxu0 %v2730
        %v2882 = vpop.f32.mrf.mxu0
        %v2883 = vadd.f32 %v2869, %v2882
        %v2884 = vpop.f32.mrf.mxu0
        %v2885 = vadd.f32 %v2871, %v2884
        %2886 = vdwg.mxu0
        %v2887 = vadd.f32 %v2382, %v2883
        %v2888 = vadd.f32 %v2383, %v2885
        %v2889 = vld [vmem:[%s17] sm:$0x1]
        %v2891 = vperm.slane %v2889, 0
        %v2893 = vadd.f32 %v2887, %v2891
        %v2894 = vadd.f32 %v2888, %v2891
        %s2895 = scalar_lea.vmem %s5, 1
        %v2896 = vld [vmem:[%s2895] sm:$0x1]
        %s2897 = scalar_lea.vmem %s6, 1
        %v2898 = vld [vmem:[%s2897] sm:$0x1]
        %2899 = vadd.xlane.f32.xlu0 %v2893
        %v2900 = vpop.xlane.xlu0 %2899
        %v2901 = vsel %vm829, %v2894, 0.0
        %2902 = vadd.xlane.f32.xlu0 %v2901
        %v2903 = vpop.xlane.xlu0 %2902
        %v2904 = vmul.f32 %v2900, %v839
        %v2905 = vmul.f32 %v2903, %v839
        %v2906 = vsub.f32 %v2893, %v2904
        %v2907 = vsub.f32 %v2894, %v2905
        %v2908 = vmul.f32 %v2906, %v2906
        %v2909 = vmul.f32 %v2907, %v2907
        %2910 = vadd.xlane.f32.xlu0 %v2908
        %v2911 = vpop.xlane.xlu0 %2910
        %v2912 = vsel %vm829, %v2909, 0.0
        %2913 = vadd.xlane.f32.xlu0 %v2912
        %v2914 = vpop.xlane.xlu0 %2913
        %v2915 = vmul.f32 %v2911, %v839
        %v2916 = vmul.f32 %v2914, %v839
        %v2917 = vadd.f32 %v2915, 1e-05
        %v2918 = vadd.f32 %v2916, 1e-05
        %v2919 = vrsqrt.pop %v2917
        %v2920 = vmul.f32 %v2919, %v2917
        %v2921 = vmul.f32 %v2920, %v2919
        %v2922 = vmul.f32 0.5, %v2921
        %v2923 = vsub.f32 1.5, %v2922
        %v2924 = vmul.f32 %v2919, %v2923
        %vm2925 = vweird.f32 %v2917
        %vm2926 = vweird.f32 %v2919
        %vm2927 = vmor %vm2925, %vm2926
        %v2928 = vsel %vm2927, %v2919, %v2924
        %v2929 = vrsqrt.pop %v2918
        %v2930 = vmul.f32 %v2929, %v2918
        %v2931 = vmul.f32 %v2930, %v2929
        %v2932 = vmul.f32 0.5, %v2931
        %v2933 = vsub.f32 1.5, %v2932
        %v2934 = vmul.f32 %v2929, %v2933
        %vm2935 = vweird.f32 %v2918
        %vm2936 = vweird.f32 %v2929
        %vm2937 = vmor %vm2935, %vm2936
        %v2938 = vsel %vm2937, %v2929, %v2934
        %v2939 = vmul.f32 %v2906, %v2928
        %v2940 = vmul.f32 %v2907, %v2938
        %v2942 = vperm.slane %v2896, 0
        %v2944 = vmul.f32 %v2939, %v2942
        %v2945 = vmul.f32 %v2940, %v2942
        %v2947 = vperm.slane %v2898, 0
        %v2949 = vadd.f32 %v2944, %v2947
        %v2950 = vadd.f32 %v2945, %v2947
        %v2951 = vpack.c.bf16 %v2949, %v2949
        %v2952 = vpack.c.bf16 %v2950, %v2950
        %s2953 = scalar_lea.vmem %s7, 256
        %v2954 = vld [vmem:[%s2953] sm:$0xf]
        %v2955 = vld [vmem:[%s2953 + $0x4] sm:$0xf]
        %v2956 = vld [vmem:[%s2953 + $0x8] sm:$0xf]
        %v2957 = vld [vmem:[%s2953 + $0xc] sm:$0xf]
        %v2958 = vld [vmem:[%s2953 + $0x10] sm:$0xf]
        %v2959 = vld [vmem:[%s2953 + $0x14] sm:$0xf]
        %v2960 = vld [vmem:[%s2953 + $0x18] sm:$0xf]
        %v2961 = vld [vmem:[%s2953 + $0x1c] sm:$0xf]
        %v2962 = vld [vmem:[%s2953 + $0x20] sm:$0xf]
        %v2963 = vld [vmem:[%s2953 + $0x24] sm:$0xf]
        %v2964 = vld [vmem:[%s2953 + $0x28] sm:$0xf]
        %v2965 = vld [vmem:[%s2953 + $0x2c] sm:$0xf]
        %v2966 = vld [vmem:[%s2953 + $0x30] sm:$0xf]
        %v2967 = vld [vmem:[%s2953 + $0x34] sm:$0xf]
        %v2968 = vld [vmem:[%s2953 + $0x38] sm:$0xf]
        %v2969 = vld [vmem:[%s2953 + $0x3c] sm:$0xf]
        %v2970 = vld [vmem:[%s2953 + $0x40] sm:$0xf]
        %v2971 = vld [vmem:[%s2953 + $0x44] sm:$0xf]
        %v2972 = vld [vmem:[%s2953 + $0x48] sm:$0xf]
        %v2973 = vld [vmem:[%s2953 + $0x4c] sm:$0xf]
        %v2974 = vld [vmem:[%s2953 + $0x50] sm:$0xf]
        %v2975 = vld [vmem:[%s2953 + $0x54] sm:$0xf]
        %v2976 = vld [vmem:[%s2953 + $0x58] sm:$0xf]
        %v2977 = vld [vmem:[%s2953 + $0x5c] sm:$0xf]
        %v2978 = vld [vmem:[%s2953 + $0x60] sm:$0xf]
        %v2979 = vld [vmem:[%s2953 + $0x64] sm:$0xf]
        %v2980 = vld [vmem:[%s2953 + $0x68] sm:$0xf]
        %v2981 = vld [vmem:[%s2953 + $0x6c] sm:$0xf]
        %v2982 = vld [vmem:[%s2953 + $0x70] sm:$0xf]
        %v2983 = vld [vmem:[%s2953 + $0x74] sm:$0xf]
        %v2984 = vld [vmem:[%s2953 + $0x78] sm:$0xf]
        %v2985 = vld [vmem:[%s2953 + $0x7c] sm:$0xf]
        %v2986 = vld [vmem:[%s2953 + $0x80] sm:$0xf]
        %v2987 = vld [vmem:[%s2953 + $0x84] sm:$0xf]
        %v2988 = vld [vmem:[%s2953 + $0x88] sm:$0xf]
        %v2989 = vld [vmem:[%s2953 + $0x8c] sm:$0xf]
        %v2990 = vld [vmem:[%s2953 + $0x90] sm:$0xf]
        %v2991 = vld [vmem:[%s2953 + $0x94] sm:$0xf]
        %v2992 = vld [vmem:[%s2953 + $0x98] sm:$0xf]
        %v2993 = vld [vmem:[%s2953 + $0x9c] sm:$0xf]
        %v2994 = vld [vmem:[%s2953 + $0xa0] sm:$0xf]
        %v2995 = vld [vmem:[%s2953 + $0xa4] sm:$0xf]
        %v2996 = vld [vmem:[%s2953 + $0xa8] sm:$0xf]
        %v2997 = vld [vmem:[%s2953 + $0xac] sm:$0xf]
        %v2998 = vld [vmem:[%s2953 + $0xb0] sm:$0xf]
        %v2999 = vld [vmem:[%s2953 + $0xb4] sm:$0xf]
        %v3000 = vld [vmem:[%s2953 + $0xb8] sm:$0xf]
        %v3001 = vld [vmem:[%s2953 + $0xbc] sm:$0xf]
        %v3002 = vld [vmem:[%s2953 + $0xc0] sm:$0xf]
        %v3003 = vld [vmem:[%s2953 + $0xc4] sm:$0xf]
        %v3004 = vld [vmem:[%s2953 + $0xc8] sm:$0xf]
        %v3005 = vld [vmem:[%s2953 + $0xcc] sm:$0xf]
        %v3006 = vld [vmem:[%s2953 + $0xd0] sm:$0xf]
        %v3007 = vld [vmem:[%s2953 + $0xd4] sm:$0xf]
        %v3008 = vld [vmem:[%s2953 + $0xd8] sm:$0xf]
        %v3009 = vld [vmem:[%s2953 + $0xdc] sm:$0xf]
        %v3010 = vld [vmem:[%s2953 + $0xe0] sm:$0xf]
        %v3011 = vld [vmem:[%s2953 + $0xe4] sm:$0xf]
        %v3012 = vld [vmem:[%s2953 + $0xe8] sm:$0xf]
        %v3013 = vld [vmem:[%s2953 + $0xec] sm:$0xf]
        %v3014 = vld [vmem:[%s2953 + $0xf0] sm:$0xf]
        %v3015 = vld [vmem:[%s2953 + $0xf4] sm:$0xf]
        %v3016 = vld [vmem:[%s2953 + $0xf8] sm:$0xf]
        %v3017 = vld [vmem:[%s2953 + $0xfc] sm:$0xf]
        %v3020 = vunpack.c.l.b16 %v2951
        %v3021 = vunpack.c.l.b16 %v2952
        %v3022 = vpack.c.b16 %v3021, %v3020
        %v3040 = vunpack.c.l.b16 %v2954
        %v3041 = vunpack.c.l.b16 %v2955
        %v3042 = vunpack.c.l.b16 %v2956
        %v3043 = vunpack.c.l.b16 %v2957
        %v3044 = vunpack.c.l.b16 %v2958
        %v3045 = vunpack.c.l.b16 %v2959
        %v3046 = vunpack.c.l.b16 %v2960
        %v3047 = vunpack.c.l.b16 %v2961
        %v3048 = vunpack.c.l.b16 %v2962
        %v3049 = vunpack.c.l.b16 %v2963
        %v3050 = vunpack.c.l.b16 %v2964
        %v3051 = vunpack.c.l.b16 %v2965
        %v3052 = vunpack.c.l.b16 %v2966
        %v3053 = vunpack.c.l.b16 %v2967
        %v3054 = vunpack.c.l.b16 %v2968
        %v3055 = vunpack.c.l.b16 %v2969
        %v3056 = vpack.c.b16 %v3041, %v3040
        %v3057 = vpack.c.b16 %v3043, %v3042
        %v3058 = vpack.c.b16 %v3045, %v3044
        %v3059 = vpack.c.b16 %v3047, %v3046
        %v3060 = vpack.c.b16 %v3049, %v3048
        %v3061 = vpack.c.b16 %v3051, %v3050
        %v3062 = vpack.c.b16 %v3053, %v3052
        %v3063 = vpack.c.b16 %v3055, %v3054
        %3072 = vmatpush.bf16.msra.mxu0 %v3063
        %3073 = vmatpush.bf16.msra.mxu0 %v3062
        %3074 = vmatpush.bf16.msra.mxu0 %v3061
        %3075 = vmatpush.bf16.msra.mxu0 %v3060
        %3076 = vmatpush.bf16.msra.mxu0 %v3059
        %3077 = vmatpush.bf16.msra.mxu0 %v3058
        %3078 = vmatpush.bf16.msra.mxu0 %v3057
        %3079 = vmatpush.bf16.msra.mxu0 %v3056
        %3080 = vmatmul.bf16.gmra.mxu0 %v3022
        %v3081 = vpop.f32.mrf.mxu0
        %v3082 = vadd.f32 0.0, %v3081
        %v3083 = vpop.f32.mrf.mxu0
        %v3084 = vadd.f32 0.0, %v3083
        %3085 = vdwg.mxu0
        %v3102 = vunpack.c.l.b16 %v2970
        %v3103 = vunpack.c.l.b16 %v2971
        %v3104 = vunpack.c.l.b16 %v2972
        %v3105 = vunpack.c.l.b16 %v2973
        %v3106 = vunpack.c.l.b16 %v2974
        %v3107 = vunpack.c.l.b16 %v2975
        %v3108 = vunpack.c.l.b16 %v2976
        %v3109 = vunpack.c.l.b16 %v2977
        %v3110 = vunpack.c.l.b16 %v2978
        %v3111 = vunpack.c.l.b16 %v2979
        %v3112 = vunpack.c.l.b16 %v2980
        %v3113 = vunpack.c.l.b16 %v2981
        %v3114 = vunpack.c.l.b16 %v2982
        %v3115 = vunpack.c.l.b16 %v2983
        %v3116 = vunpack.c.l.b16 %v2984
        %v3117 = vunpack.c.l.b16 %v2985
        %v3118 = vpack.c.b16 %v3103, %v3102
        %v3119 = vpack.c.b16 %v3105, %v3104
        %v3120 = vpack.c.b16 %v3107, %v3106
        %v3121 = vpack.c.b16 %v3109, %v3108
        %v3122 = vpack.c.b16 %v3111, %v3110
        %v3123 = vpack.c.b16 %v3113, %v3112
        %v3124 = vpack.c.b16 %v3115, %v3114
        %v3125 = vpack.c.b16 %v3117, %v3116
        %3134 = vmatpush.bf16.msra.mxu0 %v3125
        %3135 = vmatpush.bf16.msra.mxu0 %v3124
        %3136 = vmatpush.bf16.msra.mxu0 %v3123
        %3137 = vmatpush.bf16.msra.mxu0 %v3122
        %3138 = vmatpush.bf16.msra.mxu0 %v3121
        %3139 = vmatpush.bf16.msra.mxu0 %v3120
        %3140 = vmatpush.bf16.msra.mxu0 %v3119
        %3141 = vmatpush.bf16.msra.mxu0 %v3118
        %3142 = vmatmul.bf16.gmra.mxu0 %v3022
        %v3143 = vpop.f32.mrf.mxu0
        %v3144 = vadd.f32 0.0, %v3143
        %v3145 = vpop.f32.mrf.mxu0
        %v3146 = vadd.f32 0.0, %v3145
        %3147 = vdwg.mxu0
        %v3164 = vunpack.c.l.b16 %v2986
        %v3165 = vunpack.c.l.b16 %v2987
        %v3166 = vunpack.c.l.b16 %v2988
        %v3167 = vunpack.c.l.b16 %v2989
        %v3168 = vunpack.c.l.b16 %v2990
        %v3169 = vunpack.c.l.b16 %v2991
        %v3170 = vunpack.c.l.b16 %v2992
        %v3171 = vunpack.c.l.b16 %v2993
        %v3172 = vunpack.c.l.b16 %v2994
        %v3173 = vunpack.c.l.b16 %v2995
        %v3174 = vunpack.c.l.b16 %v2996
        %v3175 = vunpack.c.l.b16 %v2997
        %v3176 = vunpack.c.l.b16 %v2998
        %v3177 = vunpack.c.l.b16 %v2999
        %v3178 = vunpack.c.l.b16 %v3000
        %v3179 = vunpack.c.l.b16 %v3001
        %v3180 = vpack.c.b16 %v3165, %v3164
        %v3181 = vpack.c.b16 %v3167, %v3166
        %v3182 = vpack.c.b16 %v3169, %v3168
        %v3183 = vpack.c.b16 %v3171, %v3170
        %v3184 = vpack.c.b16 %v3173, %v3172
        %v3185 = vpack.c.b16 %v3175, %v3174
        %v3186 = vpack.c.b16 %v3177, %v3176
        %v3187 = vpack.c.b16 %v3179, %v3178
        %3196 = vmatpush.bf16.msra.mxu0 %v3187
        %3197 = vmatpush.bf16.msra.mxu0 %v3186
        %3198 = vmatpush.bf16.msra.mxu0 %v3185
        %3199 = vmatpush.bf16.msra.mxu0 %v3184
        %3200 = vmatpush.bf16.msra.mxu0 %v3183
        %3201 = vmatpush.bf16.msra.mxu0 %v3182
        %3202 = vmatpush.bf16.msra.mxu0 %v3181
        %3203 = vmatpush.bf16.msra.mxu0 %v3180
        %3204 = vmatmul.bf16.gmra.mxu0 %v3022
        %v3205 = vpop.f32.mrf.mxu0
        %v3206 = vadd.f32 0.0, %v3205
        %v3207 = vpop.f32.mrf.mxu0
        %v3208 = vadd.f32 0.0, %v3207
        %3209 = vdwg.mxu0
        %v3226 = vunpack.c.l.b16 %v3002
        %v3227 = vunpack.c.l.b16 %v3003
        %v3228 = vunpack.c.l.b16 %v3004
        %v3229 = vunpack.c.l.b16 %v3005
        %v3230 = vunpack.c.l.b16 %v3006
        %v3231 = vunpack.c.l.b16 %v3007
        %v3232 = vunpack.c.l.b16 %v3008
        %v3233 = vunpack.c.l.b16 %v3009
        %v3234 = vunpack.c.l.b16 %v3010
        %v3235 = vunpack.c.l.b16 %v3011
        %v3236 = vunpack.c.l.b16 %v3012
        %v3237 = vunpack.c.l.b16 %v3013
        %v3238 = vunpack.c.l.b16 %v3014
        %v3239 = vunpack.c.l.b16 %v3015
        %v3240 = vunpack.c.l.b16 %v3016
        %v3241 = vunpack.c.l.b16 %v3017
        %v3242 = vpack.c.b16 %v3227, %v3226
        %v3243 = vpack.c.b16 %v3229, %v3228
        %v3244 = vpack.c.b16 %v3231, %v3230
        %v3245 = vpack.c.b16 %v3233, %v3232
        %v3246 = vpack.c.b16 %v3235, %v3234
        %v3247 = vpack.c.b16 %v3237, %v3236
        %v3248 = vpack.c.b16 %v3239, %v3238
        %v3249 = vpack.c.b16 %v3241, %v3240
        %3258 = vmatpush.bf16.msra.mxu0 %v3249
        %3259 = vmatpush.bf16.msra.mxu0 %v3248
        %3260 = vmatpush.bf16.msra.mxu0 %v3247
        %3261 = vmatpush.bf16.msra.mxu0 %v3246
        %3262 = vmatpush.bf16.msra.mxu0 %v3245
        %3263 = vmatpush.bf16.msra.mxu0 %v3244
        %3264 = vmatpush.bf16.msra.mxu0 %v3243
        %3265 = vmatpush.bf16.msra.mxu0 %v3242
        %3266 = vmatmul.bf16.gmra.mxu0 %v3022
        %v3267 = vpop.f32.mrf.mxu0
        %v3268 = vadd.f32 0.0, %v3267
        %v3269 = vpop.f32.mrf.mxu0
        %v3270 = vadd.f32 0.0, %v3269
        %3271 = vdwg.mxu0
        %s3272 = scalar_lea.vmem %s8, 256
        %v3273 = vld [vmem:[%s3272] sm:$0xf]
        %v3274 = vld [vmem:[%s3272 + $0x4] sm:$0xf]
        %v3275 = vld [vmem:[%s3272 + $0x8] sm:$0xf]
        %v3276 = vld [vmem:[%s3272 + $0xc] sm:$0xf]
        %v3277 = vld [vmem:[%s3272 + $0x10] sm:$0xf]
        %v3278 = vld [vmem:[%s3272 + $0x14] sm:$0xf]
        %v3279 = vld [vmem:[%s3272 + $0x18] sm:$0xf]
        %v3280 = vld [vmem:[%s3272 + $0x1c] sm:$0xf]
        %v3281 = vld [vmem:[%s3272 + $0x20] sm:$0xf]
        %v3282 = vld [vmem:[%s3272 + $0x24] sm:$0xf]
        %v3283 = vld [vmem:[%s3272 + $0x28] sm:$0xf]
        %v3284 = vld [vmem:[%s3272 + $0x2c] sm:$0xf]
        %v3285 = vld [vmem:[%s3272 + $0x30] sm:$0xf]
        %v3286 = vld [vmem:[%s3272 + $0x34] sm:$0xf]
        %v3287 = vld [vmem:[%s3272 + $0x38] sm:$0xf]
        %v3288 = vld [vmem:[%s3272 + $0x3c] sm:$0xf]
        %v3289 = vld [vmem:[%s3272 + $0x40] sm:$0xf]
        %v3290 = vld [vmem:[%s3272 + $0x44] sm:$0xf]
        %v3291 = vld [vmem:[%s3272 + $0x48] sm:$0xf]
        %v3292 = vld [vmem:[%s3272 + $0x4c] sm:$0xf]
        %v3293 = vld [vmem:[%s3272 + $0x50] sm:$0xf]
        %v3294 = vld [vmem:[%s3272 + $0x54] sm:$0xf]
        %v3295 = vld [vmem:[%s3272 + $0x58] sm:$0xf]
        %v3296 = vld [vmem:[%s3272 + $0x5c] sm:$0xf]
        %v3297 = vld [vmem:[%s3272 + $0x60] sm:$0xf]
        %v3298 = vld [vmem:[%s3272 + $0x64] sm:$0xf]
        %v3299 = vld [vmem:[%s3272 + $0x68] sm:$0xf]
        %v3300 = vld [vmem:[%s3272 + $0x6c] sm:$0xf]
        %v3301 = vld [vmem:[%s3272 + $0x70] sm:$0xf]
        %v3302 = vld [vmem:[%s3272 + $0x74] sm:$0xf]
        %v3303 = vld [vmem:[%s3272 + $0x78] sm:$0xf]
        %v3304 = vld [vmem:[%s3272 + $0x7c] sm:$0xf]
        %v3305 = vld [vmem:[%s3272 + $0x80] sm:$0xf]
        %v3306 = vld [vmem:[%s3272 + $0x84] sm:$0xf]
        %v3307 = vld [vmem:[%s3272 + $0x88] sm:$0xf]
        %v3308 = vld [vmem:[%s3272 + $0x8c] sm:$0xf]
        %v3309 = vld [vmem:[%s3272 + $0x90] sm:$0xf]
        %v3310 = vld [vmem:[%s3272 + $0x94] sm:$0xf]
        %v3311 = vld [vmem:[%s3272 + $0x98] sm:$0xf]
        %v3312 = vld [vmem:[%s3272 + $0x9c] sm:$0xf]
        %v3313 = vld [vmem:[%s3272 + $0xa0] sm:$0xf]
        %v3314 = vld [vmem:[%s3272 + $0xa4] sm:$0xf]
        %v3315 = vld [vmem:[%s3272 + $0xa8] sm:$0xf]
        %v3316 = vld [vmem:[%s3272 + $0xac] sm:$0xf]
        %v3317 = vld [vmem:[%s3272 + $0xb0] sm:$0xf]
        %v3318 = vld [vmem:[%s3272 + $0xb4] sm:$0xf]
        %v3319 = vld [vmem:[%s3272 + $0xb8] sm:$0xf]
        %v3320 = vld [vmem:[%s3272 + $0xbc] sm:$0xf]
        %v3321 = vld [vmem:[%s3272 + $0xc0] sm:$0xf]
        %v3322 = vld [vmem:[%s3272 + $0xc4] sm:$0xf]
        %v3323 = vld [vmem:[%s3272 + $0xc8] sm:$0xf]
        %v3324 = vld [vmem:[%s3272 + $0xcc] sm:$0xf]
        %v3325 = vld [vmem:[%s3272 + $0xd0] sm:$0xf]
        %v3326 = vld [vmem:[%s3272 + $0xd4] sm:$0xf]
        %v3327 = vld [vmem:[%s3272 + $0xd8] sm:$0xf]
        %v3328 = vld [vmem:[%s3272 + $0xdc] sm:$0xf]
        %v3329 = vld [vmem:[%s3272 + $0xe0] sm:$0xf]
        %v3330 = vld [vmem:[%s3272 + $0xe4] sm:$0xf]
        %v3331 = vld [vmem:[%s3272 + $0xe8] sm:$0xf]
        %v3332 = vld [vmem:[%s3272 + $0xec] sm:$0xf]
        %v3333 = vld [vmem:[%s3272 + $0xf0] sm:$0xf]
        %v3334 = vld [vmem:[%s3272 + $0xf4] sm:$0xf]
        %v3335 = vld [vmem:[%s3272 + $0xf8] sm:$0xf]
        %v3336 = vld [vmem:[%s3272 + $0xfc] sm:$0xf]
        %v3353 = vunpack.c.l.b16 %v3273
        %v3354 = vunpack.c.l.b16 %v3274
        %v3355 = vunpack.c.l.b16 %v3275
        %v3356 = vunpack.c.l.b16 %v3276
        %v3357 = vunpack.c.l.b16 %v3277
        %v3358 = vunpack.c.l.b16 %v3278
        %v3359 = vunpack.c.l.b16 %v3279
        %v3360 = vunpack.c.l.b16 %v3280
        %v3361 = vunpack.c.l.b16 %v3281
        %v3362 = vunpack.c.l.b16 %v3282
        %v3363 = vunpack.c.l.b16 %v3283
        %v3364 = vunpack.c.l.b16 %v3284
        %v3365 = vunpack.c.l.b16 %v3285
        %v3366 = vunpack.c.l.b16 %v3286
        %v3367 = vunpack.c.l.b16 %v3287
        %v3368 = vunpack.c.l.b16 %v3288
        %v3369 = vpack.c.b16 %v3354, %v3353
        %v3370 = vpack.c.b16 %v3356, %v3355
        %v3371 = vpack.c.b16 %v3358, %v3357
        %v3372 = vpack.c.b16 %v3360, %v3359
        %v3373 = vpack.c.b16 %v3362, %v3361
        %v3374 = vpack.c.b16 %v3364, %v3363
        %v3375 = vpack.c.b16 %v3366, %v3365
        %v3376 = vpack.c.b16 %v3368, %v3367
        %3385 = vmatpush.bf16.msra.mxu0 %v3376
        %3386 = vmatpush.bf16.msra.mxu0 %v3375
        %3387 = vmatpush.bf16.msra.mxu0 %v3374
        %3388 = vmatpush.bf16.msra.mxu0 %v3373
        %3389 = vmatpush.bf16.msra.mxu0 %v3372
        %3390 = vmatpush.bf16.msra.mxu0 %v3371
        %3391 = vmatpush.bf16.msra.mxu0 %v3370
        %3392 = vmatpush.bf16.msra.mxu0 %v3369
        %3393 = vmatmul.bf16.gmra.mxu0 %v3022
        %v3394 = vpop.f32.mrf.mxu0
        %v3395 = vadd.f32 0.0, %v3394
        %v3396 = vpop.f32.mrf.mxu0
        %v3397 = vadd.f32 0.0, %v3396
        %3398 = vdwg.mxu0
        %v3415 = vunpack.c.l.b16 %v3289
        %v3416 = vunpack.c.l.b16 %v3290
        %v3417 = vunpack.c.l.b16 %v3291
        %v3418 = vunpack.c.l.b16 %v3292
        %v3419 = vunpack.c.l.b16 %v3293
        %v3420 = vunpack.c.l.b16 %v3294
        %v3421 = vunpack.c.l.b16 %v3295
        %v3422 = vunpack.c.l.b16 %v3296
        %v3423 = vunpack.c.l.b16 %v3297
        %v3424 = vunpack.c.l.b16 %v3298
        %v3425 = vunpack.c.l.b16 %v3299
        %v3426 = vunpack.c.l.b16 %v3300
        %v3427 = vunpack.c.l.b16 %v3301
        %v3428 = vunpack.c.l.b16 %v3302
        %v3429 = vunpack.c.l.b16 %v3303
        %v3430 = vunpack.c.l.b16 %v3304
        %v3431 = vpack.c.b16 %v3416, %v3415
        %v3432 = vpack.c.b16 %v3418, %v3417
        %v3433 = vpack.c.b16 %v3420, %v3419
        %v3434 = vpack.c.b16 %v3422, %v3421
        %v3435 = vpack.c.b16 %v3424, %v3423
        %v3436 = vpack.c.b16 %v3426, %v3425
        %v3437 = vpack.c.b16 %v3428, %v3427
        %v3438 = vpack.c.b16 %v3430, %v3429
        %3447 = vmatpush.bf16.msra.mxu0 %v3438
        %3448 = vmatpush.bf16.msra.mxu0 %v3437
        %3449 = vmatpush.bf16.msra.mxu0 %v3436
        %3450 = vmatpush.bf16.msra.mxu0 %v3435
        %3451 = vmatpush.bf16.msra.mxu0 %v3434
        %3452 = vmatpush.bf16.msra.mxu0 %v3433
        %3453 = vmatpush.bf16.msra.mxu0 %v3432
        %3454 = vmatpush.bf16.msra.mxu0 %v3431
        %3455 = vmatmul.bf16.gmra.mxu0 %v3022
        %v3456 = vpop.f32.mrf.mxu0
        %v3457 = vadd.f32 0.0, %v3456
        %v3458 = vpop.f32.mrf.mxu0
        %v3459 = vadd.f32 0.0, %v3458
        %3460 = vdwg.mxu0
        %v3477 = vunpack.c.l.b16 %v3305
        %v3478 = vunpack.c.l.b16 %v3306
        %v3479 = vunpack.c.l.b16 %v3307
        %v3480 = vunpack.c.l.b16 %v3308
        %v3481 = vunpack.c.l.b16 %v3309
        %v3482 = vunpack.c.l.b16 %v3310
        %v3483 = vunpack.c.l.b16 %v3311
        %v3484 = vunpack.c.l.b16 %v3312
        %v3485 = vunpack.c.l.b16 %v3313
        %v3486 = vunpack.c.l.b16 %v3314
        %v3487 = vunpack.c.l.b16 %v3315
        %v3488 = vunpack.c.l.b16 %v3316
        %v3489 = vunpack.c.l.b16 %v3317
        %v3490 = vunpack.c.l.b16 %v3318
        %v3491 = vunpack.c.l.b16 %v3319
        %v3492 = vunpack.c.l.b16 %v3320
        %v3493 = vpack.c.b16 %v3478, %v3477
        %v3494 = vpack.c.b16 %v3480, %v3479
        %v3495 = vpack.c.b16 %v3482, %v3481
        %v3496 = vpack.c.b16 %v3484, %v3483
        %v3497 = vpack.c.b16 %v3486, %v3485
        %v3498 = vpack.c.b16 %v3488, %v3487
        %v3499 = vpack.c.b16 %v3490, %v3489
        %v3500 = vpack.c.b16 %v3492, %v3491
        %3509 = vmatpush.bf16.msra.mxu0 %v3500
        %3510 = vmatpush.bf16.msra.mxu0 %v3499
        %3511 = vmatpush.bf16.msra.mxu0 %v3498
        %3512 = vmatpush.bf16.msra.mxu0 %v3497
        %3513 = vmatpush.bf16.msra.mxu0 %v3496
        %3514 = vmatpush.bf16.msra.mxu0 %v3495
        %3515 = vmatpush.bf16.msra.mxu0 %v3494
        %3516 = vmatpush.bf16.msra.mxu0 %v3493
        %3517 = vmatmul.bf16.gmra.mxu0 %v3022
        %v3518 = vpop.f32.mrf.mxu0
        %v3519 = vadd.f32 0.0, %v3518
        %v3520 = vpop.f32.mrf.mxu0
        %v3521 = vadd.f32 0.0, %v3520
        %3522 = vdwg.mxu0
        %v3539 = vunpack.c.l.b16 %v3321
        %v3540 = vunpack.c.l.b16 %v3322
        %v3541 = vunpack.c.l.b16 %v3323
        %v3542 = vunpack.c.l.b16 %v3324
        %v3543 = vunpack.c.l.b16 %v3325
        %v3544 = vunpack.c.l.b16 %v3326
        %v3545 = vunpack.c.l.b16 %v3327
        %v3546 = vunpack.c.l.b16 %v3328
        %v3547 = vunpack.c.l.b16 %v3329
        %v3548 = vunpack.c.l.b16 %v3330
        %v3549 = vunpack.c.l.b16 %v3331
        %v3550 = vunpack.c.l.b16 %v3332
        %v3551 = vunpack.c.l.b16 %v3333
        %v3552 = vunpack.c.l.b16 %v3334
        %v3553 = vunpack.c.l.b16 %v3335
        %v3554 = vunpack.c.l.b16 %v3336
        %v3555 = vpack.c.b16 %v3540, %v3539
        %v3556 = vpack.c.b16 %v3542, %v3541
        %v3557 = vpack.c.b16 %v3544, %v3543
        %v3558 = vpack.c.b16 %v3546, %v3545
        %v3559 = vpack.c.b16 %v3548, %v3547
        %v3560 = vpack.c.b16 %v3550, %v3549
        %v3561 = vpack.c.b16 %v3552, %v3551
        %v3562 = vpack.c.b16 %v3554, %v3553
        %3571 = vmatpush.bf16.msra.mxu0 %v3562
        %3572 = vmatpush.bf16.msra.mxu0 %v3561
        %3573 = vmatpush.bf16.msra.mxu0 %v3560
        %3574 = vmatpush.bf16.msra.mxu0 %v3559
        %3575 = vmatpush.bf16.msra.mxu0 %v3558
        %3576 = vmatpush.bf16.msra.mxu0 %v3557
        %3577 = vmatpush.bf16.msra.mxu0 %v3556
        %3578 = vmatpush.bf16.msra.mxu0 %v3555
        %3579 = vmatmul.bf16.gmra.mxu0 %v3022
        %v3580 = vpop.f32.mrf.mxu0
        %v3581 = vadd.f32 0.0, %v3580
        %v3582 = vpop.f32.mrf.mxu0
        %v3583 = vadd.f32 0.0, %v3582
        %3584 = vdwg.mxu0
        %s3585 = scalar_lea.vmem %s9, 256
        %v3586 = vld [vmem:[%s3585] sm:$0xf]
        %v3587 = vld [vmem:[%s3585 + $0x4] sm:$0xf]
        %v3588 = vld [vmem:[%s3585 + $0x8] sm:$0xf]
        %v3589 = vld [vmem:[%s3585 + $0xc] sm:$0xf]
        %v3590 = vld [vmem:[%s3585 + $0x10] sm:$0xf]
        %v3591 = vld [vmem:[%s3585 + $0x14] sm:$0xf]
        %v3592 = vld [vmem:[%s3585 + $0x18] sm:$0xf]
        %v3593 = vld [vmem:[%s3585 + $0x1c] sm:$0xf]
        %v3594 = vld [vmem:[%s3585 + $0x20] sm:$0xf]
        %v3595 = vld [vmem:[%s3585 + $0x24] sm:$0xf]
        %v3596 = vld [vmem:[%s3585 + $0x28] sm:$0xf]
        %v3597 = vld [vmem:[%s3585 + $0x2c] sm:$0xf]
        %v3598 = vld [vmem:[%s3585 + $0x30] sm:$0xf]
        %v3599 = vld [vmem:[%s3585 + $0x34] sm:$0xf]
        %v3600 = vld [vmem:[%s3585 + $0x38] sm:$0xf]
        %v3601 = vld [vmem:[%s3585 + $0x3c] sm:$0xf]
        %v3602 = vld [vmem:[%s3585 + $0x40] sm:$0xf]
        %v3603 = vld [vmem:[%s3585 + $0x44] sm:$0xf]
        %v3604 = vld [vmem:[%s3585 + $0x48] sm:$0xf]
        %v3605 = vld [vmem:[%s3585 + $0x4c] sm:$0xf]
        %v3606 = vld [vmem:[%s3585 + $0x50] sm:$0xf]
        %v3607 = vld [vmem:[%s3585 + $0x54] sm:$0xf]
        %v3608 = vld [vmem:[%s3585 + $0x58] sm:$0xf]
        %v3609 = vld [vmem:[%s3585 + $0x5c] sm:$0xf]
        %v3610 = vld [vmem:[%s3585 + $0x60] sm:$0xf]
        %v3611 = vld [vmem:[%s3585 + $0x64] sm:$0xf]
        %v3612 = vld [vmem:[%s3585 + $0x68] sm:$0xf]
        %v3613 = vld [vmem:[%s3585 + $0x6c] sm:$0xf]
        %v3614 = vld [vmem:[%s3585 + $0x70] sm:$0xf]
        %v3615 = vld [vmem:[%s3585 + $0x74] sm:$0xf]
        %v3616 = vld [vmem:[%s3585 + $0x78] sm:$0xf]
        %v3617 = vld [vmem:[%s3585 + $0x7c] sm:$0xf]
        %v3618 = vld [vmem:[%s3585 + $0x80] sm:$0xf]
        %v3619 = vld [vmem:[%s3585 + $0x84] sm:$0xf]
        %v3620 = vld [vmem:[%s3585 + $0x88] sm:$0xf]
        %v3621 = vld [vmem:[%s3585 + $0x8c] sm:$0xf]
        %v3622 = vld [vmem:[%s3585 + $0x90] sm:$0xf]
        %v3623 = vld [vmem:[%s3585 + $0x94] sm:$0xf]
        %v3624 = vld [vmem:[%s3585 + $0x98] sm:$0xf]
        %v3625 = vld [vmem:[%s3585 + $0x9c] sm:$0xf]
        %v3626 = vld [vmem:[%s3585 + $0xa0] sm:$0xf]
        %v3627 = vld [vmem:[%s3585 + $0xa4] sm:$0xf]
        %v3628 = vld [vmem:[%s3585 + $0xa8] sm:$0xf]
        %v3629 = vld [vmem:[%s3585 + $0xac] sm:$0xf]
        %v3630 = vld [vmem:[%s3585 + $0xb0] sm:$0xf]
        %v3631 = vld [vmem:[%s3585 + $0xb4] sm:$0xf]
        %v3632 = vld [vmem:[%s3585 + $0xb8] sm:$0xf]
        %v3633 = vld [vmem:[%s3585 + $0xbc] sm:$0xf]
        %v3634 = vld [vmem:[%s3585 + $0xc0] sm:$0xf]
        %v3635 = vld [vmem:[%s3585 + $0xc4] sm:$0xf]
        %v3636 = vld [vmem:[%s3585 + $0xc8] sm:$0xf]
        %v3637 = vld [vmem:[%s3585 + $0xcc] sm:$0xf]
        %v3638 = vld [vmem:[%s3585 + $0xd0] sm:$0xf]
        %v3639 = vld [vmem:[%s3585 + $0xd4] sm:$0xf]
        %v3640 = vld [vmem:[%s3585 + $0xd8] sm:$0xf]
        %v3641 = vld [vmem:[%s3585 + $0xdc] sm:$0xf]
        %v3642 = vld [vmem:[%s3585 + $0xe0] sm:$0xf]
        %v3643 = vld [vmem:[%s3585 + $0xe4] sm:$0xf]
        %v3644 = vld [vmem:[%s3585 + $0xe8] sm:$0xf]
        %v3645 = vld [vmem:[%s3585 + $0xec] sm:$0xf]
        %v3646 = vld [vmem:[%s3585 + $0xf0] sm:$0xf]
        %v3647 = vld [vmem:[%s3585 + $0xf4] sm:$0xf]
        %v3648 = vld [vmem:[%s3585 + $0xf8] sm:$0xf]
        %v3649 = vld [vmem:[%s3585 + $0xfc] sm:$0xf]
        %v3666 = vunpack.c.l.b16 %v3586
        %v3667 = vunpack.c.l.b16 %v3587
        %v3668 = vunpack.c.l.b16 %v3588
        %v3669 = vunpack.c.l.b16 %v3589
        %v3670 = vunpack.c.l.b16 %v3590
        %v3671 = vunpack.c.l.b16 %v3591
        %v3672 = vunpack.c.l.b16 %v3592
        %v3673 = vunpack.c.l.b16 %v3593
        %v3674 = vunpack.c.l.b16 %v3594
        %v3675 = vunpack.c.l.b16 %v3595
        %v3676 = vunpack.c.l.b16 %v3596
        %v3677 = vunpack.c.l.b16 %v3597
        %v3678 = vunpack.c.l.b16 %v3598
        %v3679 = vunpack.c.l.b16 %v3599
        %v3680 = vunpack.c.l.b16 %v3600
        %v3681 = vunpack.c.l.b16 %v3601
        %v3682 = vpack.c.b16 %v3667, %v3666
        %v3683 = vpack.c.b16 %v3669, %v3668
        %v3684 = vpack.c.b16 %v3671, %v3670
        %v3685 = vpack.c.b16 %v3673, %v3672
        %v3686 = vpack.c.b16 %v3675, %v3674
        %v3687 = vpack.c.b16 %v3677, %v3676
        %v3688 = vpack.c.b16 %v3679, %v3678
        %v3689 = vpack.c.b16 %v3681, %v3680
        %3698 = vmatpush.bf16.msra.mxu0 %v3689
        %3699 = vmatpush.bf16.msra.mxu0 %v3688
        %3700 = vmatpush.bf16.msra.mxu0 %v3687
        %3701 = vmatpush.bf16.msra.mxu0 %v3686
        %3702 = vmatpush.bf16.msra.mxu0 %v3685
        %3703 = vmatpush.bf16.msra.mxu0 %v3684
        %3704 = vmatpush.bf16.msra.mxu0 %v3683
        %3705 = vmatpush.bf16.msra.mxu0 %v3682
        %3706 = vmatmul.bf16.gmra.mxu0 %v3022
        %v3707 = vpop.f32.mrf.mxu0
        %v3708 = vadd.f32 0.0, %v3707
        %v3709 = vpop.f32.mrf.mxu0
        %v3710 = vadd.f32 0.0, %v3709
        %3711 = vdwg.mxu0
        %v3728 = vunpack.c.l.b16 %v3602
        %v3729 = vunpack.c.l.b16 %v3603
        %v3730 = vunpack.c.l.b16 %v3604
        %v3731 = vunpack.c.l.b16 %v3605
        %v3732 = vunpack.c.l.b16 %v3606
        %v3733 = vunpack.c.l.b16 %v3607
        %v3734 = vunpack.c.l.b16 %v3608
        %v3735 = vunpack.c.l.b16 %v3609
        %v3736 = vunpack.c.l.b16 %v3610
        %v3737 = vunpack.c.l.b16 %v3611
        %v3738 = vunpack.c.l.b16 %v3612
        %v3739 = vunpack.c.l.b16 %v3613
        %v3740 = vunpack.c.l.b16 %v3614
        %v3741 = vunpack.c.l.b16 %v3615
        %v3742 = vunpack.c.l.b16 %v3616
        %v3743 = vunpack.c.l.b16 %v3617
        %v3744 = vpack.c.b16 %v3729, %v3728
        %v3745 = vpack.c.b16 %v3731, %v3730
        %v3746 = vpack.c.b16 %v3733, %v3732
        %v3747 = vpack.c.b16 %v3735, %v3734
        %v3748 = vpack.c.b16 %v3737, %v3736
        %v3749 = vpack.c.b16 %v3739, %v3738
        %v3750 = vpack.c.b16 %v3741, %v3740
        %v3751 = vpack.c.b16 %v3743, %v3742
        %3760 = vmatpush.bf16.msra.mxu0 %v3751
        %3761 = vmatpush.bf16.msra.mxu0 %v3750
        %3762 = vmatpush.bf16.msra.mxu0 %v3749
        %3763 = vmatpush.bf16.msra.mxu0 %v3748
        %3764 = vmatpush.bf16.msra.mxu0 %v3747
        %3765 = vmatpush.bf16.msra.mxu0 %v3746
        %3766 = vmatpush.bf16.msra.mxu0 %v3745
        %3767 = vmatpush.bf16.msra.mxu0 %v3744
        %3768 = vmatmul.bf16.gmra.mxu0 %v3022
        %v3769 = vpop.f32.mrf.mxu0
        %v3770 = vadd.f32 0.0, %v3769
        %v3771 = vpop.f32.mrf.mxu0
        %v3772 = vadd.f32 0.0, %v3771
        %3773 = vdwg.mxu0
        %v3790 = vunpack.c.l.b16 %v3618
        %v3791 = vunpack.c.l.b16 %v3619
        %v3792 = vunpack.c.l.b16 %v3620
        %v3793 = vunpack.c.l.b16 %v3621
        %v3794 = vunpack.c.l.b16 %v3622
        %v3795 = vunpack.c.l.b16 %v3623
        %v3796 = vunpack.c.l.b16 %v3624
        %v3797 = vunpack.c.l.b16 %v3625
        %v3798 = vunpack.c.l.b16 %v3626
        %v3799 = vunpack.c.l.b16 %v3627
        %v3800 = vunpack.c.l.b16 %v3628
        %v3801 = vunpack.c.l.b16 %v3629
        %v3802 = vunpack.c.l.b16 %v3630
        %v3803 = vunpack.c.l.b16 %v3631
        %v3804 = vunpack.c.l.b16 %v3632
        %v3805 = vunpack.c.l.b16 %v3633
        %v3806 = vpack.c.b16 %v3791, %v3790
        %v3807 = vpack.c.b16 %v3793, %v3792
        %v3808 = vpack.c.b16 %v3795, %v3794
        %v3809 = vpack.c.b16 %v3797, %v3796
        %v3810 = vpack.c.b16 %v3799, %v3798
        %v3811 = vpack.c.b16 %v3801, %v3800
        %v3812 = vpack.c.b16 %v3803, %v3802
        %v3813 = vpack.c.b16 %v3805, %v3804
        %3822 = vmatpush.bf16.msra.mxu0 %v3813
        %3823 = vmatpush.bf16.msra.mxu0 %v3812
        %3824 = vmatpush.bf16.msra.mxu0 %v3811
        %3825 = vmatpush.bf16.msra.mxu0 %v3810
        %3826 = vmatpush.bf16.msra.mxu0 %v3809
        %3827 = vmatpush.bf16.msra.mxu0 %v3808
        %3828 = vmatpush.bf16.msra.mxu0 %v3807
        %3829 = vmatpush.bf16.msra.mxu0 %v3806
        %3830 = vmatmul.bf16.gmra.mxu0 %v3022
        %v3831 = vpop.f32.mrf.mxu0
        %v3832 = vadd.f32 0.0, %v3831
        %v3833 = vpop.f32.mrf.mxu0
        %v3834 = vadd.f32 0.0, %v3833
        %3835 = vdwg.mxu0
        %v3852 = vunpack.c.l.b16 %v3634
        %v3853 = vunpack.c.l.b16 %v3635
        %v3854 = vunpack.c.l.b16 %v3636
        %v3855 = vunpack.c.l.b16 %v3637
        %v3856 = vunpack.c.l.b16 %v3638
        %v3857 = vunpack.c.l.b16 %v3639
        %v3858 = vunpack.c.l.b16 %v3640
        %v3859 = vunpack.c.l.b16 %v3641
        %v3860 = vunpack.c.l.b16 %v3642
        %v3861 = vunpack.c.l.b16 %v3643
        %v3862 = vunpack.c.l.b16 %v3644
        %v3863 = vunpack.c.l.b16 %v3645
        %v3864 = vunpack.c.l.b16 %v3646
        %v3865 = vunpack.c.l.b16 %v3647
        %v3866 = vunpack.c.l.b16 %v3648
        %v3867 = vunpack.c.l.b16 %v3649
        %v3868 = vpack.c.b16 %v3853, %v3852
        %v3869 = vpack.c.b16 %v3855, %v3854
        %v3870 = vpack.c.b16 %v3857, %v3856
        %v3871 = vpack.c.b16 %v3859, %v3858
        %v3872 = vpack.c.b16 %v3861, %v3860
        %v3873 = vpack.c.b16 %v3863, %v3862
        %v3874 = vpack.c.b16 %v3865, %v3864
        %v3875 = vpack.c.b16 %v3867, %v3866
        %3884 = vmatpush.bf16.msra.mxu0 %v3875
        %3885 = vmatpush.bf16.msra.mxu0 %v3874
        %3886 = vmatpush.bf16.msra.mxu0 %v3873
        %3887 = vmatpush.bf16.msra.mxu0 %v3872
        %3888 = vmatpush.bf16.msra.mxu0 %v3871
        %3889 = vmatpush.bf16.msra.mxu0 %v3870
        %3890 = vmatpush.bf16.msra.mxu0 %v3869
        %3891 = vmatpush.bf16.msra.mxu0 %v3868
        %3892 = vmatmul.bf16.gmra.mxu0 %v3022
        %v3893 = vpop.f32.mrf.mxu0
        %v3894 = vadd.f32 0.0, %v3893
        %v3895 = vpop.f32.mrf.mxu0
        %v3896 = vadd.f32 0.0, %v3895
        %3897 = vdwg.mxu0
        %v3898 = vpack.c.bf16 %v3082, %v3082
        %v3899 = vpack.c.bf16 %v3084, %v3084
        %v3900 = vpack.c.bf16 %v3144, %v3144
        %v3901 = vpack.c.bf16 %v3146, %v3146
        %v3902 = vpack.c.bf16 %v3206, %v3206
        %v3903 = vpack.c.bf16 %v3208, %v3208
        %v3904 = vpack.c.bf16 %v3268, %v3268
        %v3905 = vpack.c.bf16 %v3270, %v3270
        %v3906 = vpack.c.bf16 %v3395, %v3395
        %v3907 = vpack.c.bf16 %v3397, %v3397
        %v3908 = vpack.c.bf16 %v3457, %v3457
        %v3909 = vpack.c.bf16 %v3459, %v3459
        %v3910 = vpack.c.bf16 %v3519, %v3519
        %v3911 = vpack.c.bf16 %v3521, %v3521
        %v3912 = vpack.c.bf16 %v3581, %v3581
        %v3913 = vpack.c.bf16 %v3583, %v3583
        %v3916 = vunpack.c.l.b16 %v3898
        %v3917 = vunpack.c.l.b16 %v3899
        %v3918 = vpack.c.b16 %v3917, %v3916
        %v3921 = vunpack.c.l.b16 %v3906
        %v3922 = vunpack.c.l.b16 %v3907
        %v3923 = vpack.c.b16 %v3922, %v3921
        %v3925 = vsel %vm1857, %v3918, 0
        %v3928 = vsel %vm1857, %v3923, 0
        %3930 = vmatpush.bf16.xpose.msra.mxu0 0
        %3931 = vmatpush.bf16.xpose.msra.mxu0 0
        %3932 = vmatpush.bf16.xpose.msra.mxu0 0
        %3933 = vmatpush.bf16.xpose.msra.mxu0 0
        %3934 = vmatpush.bf16.xpose.msra.mxu0 0
        %3935 = vmatpush.bf16.xpose.msra.mxu0 0
        %3936 = vmatpush.bf16.xpose.msra.mxu0 0
        %3937 = vmatpush.bf16.xpose.msra.mxu0 %v3928
        %3938 = vmatmul.bf16.gmra.mxu0 %v3925
        %v3939 = vpop.f32.mrf.mxu0
        %v3940 = vadd.f32 0.0, %v3939
        %v3941 = vpop.f32.mrf.mxu0
        %v3942 = vadd.f32 0.0, %v3941
        %3943 = vdwg.mxu0
        %v3946 = vunpack.c.l.b16 %v3900
        %v3947 = vunpack.c.l.b16 %v3901
        %v3948 = vpack.c.b16 %v3947, %v3946
        %v3951 = vunpack.c.l.b16 %v3908
        %v3952 = vunpack.c.l.b16 %v3909
        %v3953 = vpack.c.b16 %v3952, %v3951
        %v3955 = vsel %vm1857, %v3948, 0
        %v3958 = vsel %vm1857, %v3953, 0
        %3960 = vmatpush.bf16.xpose.msra.mxu0 0
        %3961 = vmatpush.bf16.xpose.msra.mxu0 0
        %3962 = vmatpush.bf16.xpose.msra.mxu0 0
        %3963 = vmatpush.bf16.xpose.msra.mxu0 0
        %3964 = vmatpush.bf16.xpose.msra.mxu0 0
        %3965 = vmatpush.bf16.xpose.msra.mxu0 0
        %3966 = vmatpush.bf16.xpose.msra.mxu0 0
        %3967 = vmatpush.bf16.xpose.msra.mxu0 %v3958
        %3968 = vmatmul.bf16.gmra.mxu0 %v3955
        %v3969 = vpop.f32.mrf.mxu0
        %v3970 = vadd.f32 0.0, %v3969
        %v3971 = vpop.f32.mrf.mxu0
        %v3972 = vadd.f32 0.0, %v3971
        %3973 = vdwg.mxu0
        %v3976 = vunpack.c.l.b16 %v3902
        %v3977 = vunpack.c.l.b16 %v3903
        %v3978 = vpack.c.b16 %v3977, %v3976
        %v3981 = vunpack.c.l.b16 %v3910
        %v3982 = vunpack.c.l.b16 %v3911
        %v3983 = vpack.c.b16 %v3982, %v3981
        %v3985 = vsel %vm1857, %v3978, 0
        %v3988 = vsel %vm1857, %v3983, 0
        %3990 = vmatpush.bf16.xpose.msra.mxu0 0
        %3991 = vmatpush.bf16.xpose.msra.mxu0 0
        %3992 = vmatpush.bf16.xpose.msra.mxu0 0
        %3993 = vmatpush.bf16.xpose.msra.mxu0 0
        %3994 = vmatpush.bf16.xpose.msra.mxu0 0
        %3995 = vmatpush.bf16.xpose.msra.mxu0 0
        %3996 = vmatpush.bf16.xpose.msra.mxu0 0
        %3997 = vmatpush.bf16.xpose.msra.mxu0 %v3988
        %3998 = vmatmul.bf16.gmra.mxu0 %v3985
        %v3999 = vpop.f32.mrf.mxu0
        %v4000 = vadd.f32 0.0, %v3999
        %v4001 = vpop.f32.mrf.mxu0
        %v4002 = vadd.f32 0.0, %v4001
        %4003 = vdwg.mxu0
        %v4006 = vunpack.c.l.b16 %v3904
        %v4007 = vunpack.c.l.b16 %v3905
        %v4008 = vpack.c.b16 %v4007, %v4006
        %v4011 = vunpack.c.l.b16 %v3912
        %v4012 = vunpack.c.l.b16 %v3913
        %v4013 = vpack.c.b16 %v4012, %v4011
        %v4015 = vsel %vm1857, %v4008, 0
        %v4018 = vsel %vm1857, %v4013, 0
        %4020 = vmatpush.bf16.xpose.msra.mxu0 0
        %4021 = vmatpush.bf16.xpose.msra.mxu0 0
        %4022 = vmatpush.bf16.xpose.msra.mxu0 0
        %4023 = vmatpush.bf16.xpose.msra.mxu0 0
        %4024 = vmatpush.bf16.xpose.msra.mxu0 0
        %4025 = vmatpush.bf16.xpose.msra.mxu0 0
        %4026 = vmatpush.bf16.xpose.msra.mxu0 0
        %4027 = vmatpush.bf16.xpose.msra.mxu0 %v4018
        %4028 = vmatmul.bf16.gmra.mxu0 %v4015
        %v4029 = vpop.f32.mrf.mxu0
        %v4030 = vadd.f32 0.0, %v4029
        %v4031 = vpop.f32.mrf.mxu0
        %v4032 = vadd.f32 0.0, %v4031
        %4033 = vdwg.mxu0
        %v4034 = vmul.f32 %v3940, 0.17677669
        %v4035 = vmul.f32 %v3942, 0.17677669
        %v4036 = vmul.f32 %v3970, 0.17677669
        %v4037 = vmul.f32 %v3972, 0.17677669
        %v4038 = vmul.f32 %v4000, 0.17677669
        %v4039 = vmul.f32 %v4002, 0.17677669
        %v4040 = vmul.f32 %v4030, 0.17677669
        %v4041 = vmul.f32 %v4032, 0.17677669
        %v4042 = vsel %vm1976, %v4034, -inf
        %4043 = vmax.xlane.f32.xlu0 %v4042
        %v4044 = vpop.xlane.xlu0 %4043
        %v4045 = vsel %vm1980, %v4035, -inf
        %4046 = vmax.xlane.f32.xlu0 %v4045
        %v4047 = vpop.xlane.xlu0 %4046
        %v4048 = vsel %vm1976, %v4036, -inf
        %4049 = vmax.xlane.f32.xlu0 %v4048
        %v4050 = vpop.xlane.xlu0 %4049
        %v4051 = vsel %vm1980, %v4037, -inf
        %4052 = vmax.xlane.f32.xlu0 %v4051
        %v4053 = vpop.xlane.xlu0 %4052
        %v4054 = vsel %vm1976, %v4038, -inf
        %4055 = vmax.xlane.f32.xlu0 %v4054
        %v4056 = vpop.xlane.xlu0 %4055
        %v4057 = vsel %vm1980, %v4039, -inf
        %4058 = vmax.xlane.f32.xlu0 %v4057
        %v4059 = vpop.xlane.xlu0 %4058
        %v4060 = vsel %vm1976, %v4040, -inf
        %4061 = vmax.xlane.f32.xlu0 %v4060
        %v4062 = vpop.xlane.xlu0 %4061
        %v4063 = vsel %vm1980, %v4041, -inf
        %4064 = vmax.xlane.f32.xlu0 %v4063
        %v4065 = vpop.xlane.xlu0 %4064
        %v4066 = vsub.f32 %v4034, %v4044
        %v4067 = vsub.f32 %v4035, %v4047
        %v4068 = vsub.f32 %v4036, %v4050
        %v4069 = vsub.f32 %v4037, %v4053
        %v4070 = vsub.f32 %v4038, %v4056
        %v4071 = vsub.f32 %v4039, %v4059
        %v4072 = vsub.f32 %v4040, %v4062
        %v4073 = vsub.f32 %v4041, %v4065
        %v4074 = vmul.f32 %v4066, 1.442695
        %v4075 = vpow.pop %v4074
        %v4076 = vmul.f32 %v4067, 1.442695
        %v4077 = vpow.pop %v4076
        %v4078 = vmul.f32 %v4068, 1.442695
        %v4079 = vpow.pop %v4078
        %v4080 = vmul.f32 %v4069, 1.442695
        %v4081 = vpow.pop %v4080
        %v4082 = vmul.f32 %v4070, 1.442695
        %v4083 = vpow.pop %v4082
        %v4084 = vmul.f32 %v4071, 1.442695
        %v4085 = vpow.pop %v4084
        %v4086 = vmul.f32 %v4072, 1.442695
        %v4087 = vpow.pop %v4086
        %v4088 = vmul.f32 %v4073, 1.442695
        %v4089 = vpow.pop %v4088
        %v4090 = vsel %vm1976, %v4075, 0.0
        %4091 = vadd.xlane.f32.xlu0 %v4090
        %v4092 = vpop.xlane.xlu0 %4091
        %v4093 = vsel %vm1980, %v4077, 0.0
        %4094 = vadd.xlane.f32.xlu0 %v4093
        %v4095 = vpop.xlane.xlu0 %4094
        %v4096 = vsel %vm1976, %v4079, 0.0
        %4097 = vadd.xlane.f32.xlu0 %v4096
        %v4098 = vpop.xlane.xlu0 %4097
        %v4099 = vsel %vm1980, %v4081, 0.0
        %4100 = vadd.xlane.f32.xlu0 %v4099
        %v4101 = vpop.xlane.xlu0 %4100
        %v4102 = vsel %vm1976, %v4083, 0.0
        %4103 = vadd.xlane.f32.xlu0 %v4102
        %v4104 = vpop.xlane.xlu0 %4103
        %v4105 = vsel %vm1980, %v4085, 0.0
        %4106 = vadd.xlane.f32.xlu0 %v4105
        %v4107 = vpop.xlane.xlu0 %4106
        %v4108 = vsel %vm1976, %v4087, 0.0
        %4109 = vadd.xlane.f32.xlu0 %v4108
        %v4110 = vpop.xlane.xlu0 %4109
        %v4111 = vsel %vm1980, %v4089, 0.0
        %4112 = vadd.xlane.f32.xlu0 %v4111
        %v4113 = vpop.xlane.xlu0 %4112
        %v4114 = vrcp.pop %v4092
        %v4115 = vrcp.pop %v4095
        %v4116 = vrcp.pop %v4098
        %v4117 = vrcp.pop %v4101
        %v4118 = vrcp.pop %v4104
        %v4119 = vrcp.pop %v4107
        %v4120 = vrcp.pop %v4110
        %v4121 = vrcp.pop %v4113
        %v4122 = vmul.f32 %v4075, %v4114
        %v4123 = vmul.f32 %v4077, %v4115
        %v4124 = vmul.f32 %v4079, %v4116
        %v4125 = vmul.f32 %v4081, %v4117
        %v4126 = vmul.f32 %v4083, %v4118
        %v4127 = vmul.f32 %v4085, %v4119
        %v4128 = vmul.f32 %v4087, %v4120
        %v4129 = vmul.f32 %v4089, %v4121
        %v4130 = vpack.c.bf16 %v4122, %v4122
        %v4131 = vpack.c.bf16 %v4123, %v4123
        %v4132 = vpack.c.bf16 %v4124, %v4124
        %v4133 = vpack.c.bf16 %v4125, %v4125
        %v4134 = vpack.c.bf16 %v4126, %v4126
        %v4135 = vpack.c.bf16 %v4127, %v4127
        %v4136 = vpack.c.bf16 %v4128, %v4128
        %v4137 = vpack.c.bf16 %v4129, %v4129
        %v4138 = vpack.c.bf16 %v3708, %v3708
        %v4139 = vpack.c.bf16 %v3710, %v3710
        %v4140 = vpack.c.bf16 %v3770, %v3770
        %v4141 = vpack.c.bf16 %v3772, %v3772
        %v4142 = vpack.c.bf16 %v3832, %v3832
        %v4143 = vpack.c.bf16 %v3834, %v3834
        %v4144 = vpack.c.bf16 %v3894, %v3894
        %v4145 = vpack.c.bf16 %v3896, %v3896
        %v4148 = vunpack.c.l.b16 %v4130
        %v4149 = vunpack.c.l.b16 %v4131
        %v4150 = vpack.c.b16 %v4149, %v4148
        %v4153 = vunpack.c.l.b16 %v4138
        %v4154 = vunpack.c.l.b16 %v4139
        %v4155 = vpack.c.b16 %v4154, %v4153
        %v4157 = vsel %vm1976, %v4150, 0
        %v4160 = vand.u32 %v4155, %v2098
        %4162 = vmatpush.bf16.msra.mxu0 0
        %4163 = vmatpush.bf16.msra.mxu0 0
        %4164 = vmatpush.bf16.msra.mxu0 0
        %4165 = vmatpush.bf16.msra.mxu0 0
        %4166 = vmatpush.bf16.msra.mxu0 0
        %4167 = vmatpush.bf16.msra.mxu0 0
        %4168 = vmatpush.bf16.msra.mxu0 0
        %4169 = vmatpush.bf16.msra.mxu0 %v4160
        %4170 = vmatmul.bf16.gmra.mxu0 %v4157
        %v4171 = vpop.f32.mrf.mxu0
        %v4172 = vadd.f32 0.0, %v4171
        %v4173 = vpop.f32.mrf.mxu0
        %v4174 = vadd.f32 0.0, %v4173
        %4175 = vdwg.mxu0
        %v4178 = vunpack.c.l.b16 %v4132
        %v4179 = vunpack.c.l.b16 %v4133
        %v4180 = vpack.c.b16 %v4179, %v4178
        %v4183 = vunpack.c.l.b16 %v4140
        %v4184 = vunpack.c.l.b16 %v4141
        %v4185 = vpack.c.b16 %v4184, %v4183
        %v4187 = vsel %vm1976, %v4180, 0
        %v4190 = vand.u32 %v4185, %v2098
        %4192 = vmatpush.bf16.msra.mxu0 0
        %4193 = vmatpush.bf16.msra.mxu0 0
        %4194 = vmatpush.bf16.msra.mxu0 0
        %4195 = vmatpush.bf16.msra.mxu0 0
        %4196 = vmatpush.bf16.msra.mxu0 0
        %4197 = vmatpush.bf16.msra.mxu0 0
        %4198 = vmatpush.bf16.msra.mxu0 0
        %4199 = vmatpush.bf16.msra.mxu0 %v4190
        %4200 = vmatmul.bf16.gmra.mxu0 %v4187
        %v4201 = vpop.f32.mrf.mxu0
        %v4202 = vadd.f32 0.0, %v4201
        %v4203 = vpop.f32.mrf.mxu0
        %v4204 = vadd.f32 0.0, %v4203
        %4205 = vdwg.mxu0
        %v4208 = vunpack.c.l.b16 %v4134
        %v4209 = vunpack.c.l.b16 %v4135
        %v4210 = vpack.c.b16 %v4209, %v4208
        %v4213 = vunpack.c.l.b16 %v4142
        %v4214 = vunpack.c.l.b16 %v4143
        %v4215 = vpack.c.b16 %v4214, %v4213
        %v4217 = vsel %vm1976, %v4210, 0
        %v4220 = vand.u32 %v4215, %v2098
        %4222 = vmatpush.bf16.msra.mxu0 0
        %4223 = vmatpush.bf16.msra.mxu0 0
        %4224 = vmatpush.bf16.msra.mxu0 0
        %4225 = vmatpush.bf16.msra.mxu0 0
        %4226 = vmatpush.bf16.msra.mxu0 0
        %4227 = vmatpush.bf16.msra.mxu0 0
        %4228 = vmatpush.bf16.msra.mxu0 0
        %4229 = vmatpush.bf16.msra.mxu0 %v4220
        %4230 = vmatmul.bf16.gmra.mxu0 %v4217
        %v4231 = vpop.f32.mrf.mxu0
        %v4232 = vadd.f32 0.0, %v4231
        %v4233 = vpop.f32.mrf.mxu0
        %v4234 = vadd.f32 0.0, %v4233
        %4235 = vdwg.mxu0
        %v4238 = vunpack.c.l.b16 %v4136
        %v4239 = vunpack.c.l.b16 %v4137
        %v4240 = vpack.c.b16 %v4239, %v4238
        %v4243 = vunpack.c.l.b16 %v4144
        %v4244 = vunpack.c.l.b16 %v4145
        %v4245 = vpack.c.b16 %v4244, %v4243
        %v4247 = vsel %vm1976, %v4240, 0
        %v4250 = vand.u32 %v4245, %v2098
        %4252 = vmatpush.bf16.msra.mxu0 0
        %4253 = vmatpush.bf16.msra.mxu0 0
        %4254 = vmatpush.bf16.msra.mxu0 0
        %4255 = vmatpush.bf16.msra.mxu0 0
        %4256 = vmatpush.bf16.msra.mxu0 0
        %4257 = vmatpush.bf16.msra.mxu0 0
        %4258 = vmatpush.bf16.msra.mxu0 0
        %4259 = vmatpush.bf16.msra.mxu0 %v4250
        %4260 = vmatmul.bf16.gmra.mxu0 %v4247
        %v4261 = vpop.f32.mrf.mxu0
        %v4262 = vadd.f32 0.0, %v4261
        %v4263 = vpop.f32.mrf.mxu0
        %v4264 = vadd.f32 0.0, %v4263
        %4265 = vdwg.mxu0
        %v4266 = vpack.c.bf16 %v4172, %v4172
        %v4267 = vpack.c.bf16 %v4174, %v4174
        %v4268 = vpack.c.bf16 %v4202, %v4202
        %v4269 = vpack.c.bf16 %v4204, %v4204
        %v4270 = vpack.c.bf16 %v4232, %v4232
        %v4271 = vpack.c.bf16 %v4234, %v4234
        %v4272 = vpack.c.bf16 %v4262, %v4262
        %v4273 = vpack.c.bf16 %v4264, %v4264
        %s4274 = scalar_lea.vmem %s10, 64
        %v4275 = vld [vmem:[%s4274] sm:$0xf]
        %v4276 = vld [vmem:[%s4274 + $0x4] sm:$0xf]
        %v4277 = vld [vmem:[%s4274 + $0x8] sm:$0xf]
        %v4278 = vld [vmem:[%s4274 + $0xc] sm:$0xf]
        %v4279 = vld [vmem:[%s4274 + $0x10] sm:$0xf]
        %v4280 = vld [vmem:[%s4274 + $0x14] sm:$0xf]
        %v4281 = vld [vmem:[%s4274 + $0x18] sm:$0xf]
        %v4282 = vld [vmem:[%s4274 + $0x1c] sm:$0xf]
        %v4283 = vld [vmem:[%s4274 + $0x20] sm:$0xf]
        %v4284 = vld [vmem:[%s4274 + $0x24] sm:$0xf]
        %v4285 = vld [vmem:[%s4274 + $0x28] sm:$0xf]
        %v4286 = vld [vmem:[%s4274 + $0x2c] sm:$0xf]
        %v4287 = vld [vmem:[%s4274 + $0x30] sm:$0xf]
        %v4288 = vld [vmem:[%s4274 + $0x34] sm:$0xf]
        %v4289 = vld [vmem:[%s4274 + $0x38] sm:$0xf]
        %v4290 = vld [vmem:[%s4274 + $0x3c] sm:$0xf]
        %v4293 = vunpack.c.l.b16 %v4266
        %v4294 = vunpack.c.l.b16 %v4267
        %v4295 = vpack.c.b16 %v4294, %v4293
        %v4300 = vunpack.c.l.b16 %v4275
        %v4301 = vunpack.c.l.b16 %v4276
        %v4302 = vunpack.c.l.b16 %v4277
        %v4303 = vunpack.c.l.b16 %v4278
        %v4304 = vpack.c.b16 %v4301, %v4300
        %v4305 = vpack.c.b16 %v4303, %v4302
        %v4309 = vsel %vm1857, %v4295, 0
        %4311 = vmatpush.bf16.msra.mxu0 0
        %4312 = vmatpush.bf16.msra.mxu0 0
        %4313 = vmatpush.bf16.msra.mxu0 0
        %4314 = vmatpush.bf16.msra.mxu0 0
        %4315 = vmatpush.bf16.msra.mxu0 0
        %4316 = vmatpush.bf16.msra.mxu0 0
        %4317 = vmatpush.bf16.msra.mxu0 %v4305
        %4318 = vmatpush.bf16.msra.mxu0 %v4304
        %4319 = vmatmul.bf16.gmra.mxu0 %v4309
        %v4320 = vpop.f32.mrf.mxu0
        %v4321 = vadd.f32 0.0, %v4320
        %v4322 = vpop.f32.mrf.mxu0
        %v4323 = vadd.f32 0.0, %v4322
        %4324 = vdwg.mxu0
        %v4327 = vunpack.c.l.b16 %v4268
        %v4328 = vunpack.c.l.b16 %v4269
        %v4329 = vpack.c.b16 %v4328, %v4327
        %v4334 = vunpack.c.l.b16 %v4279
        %v4335 = vunpack.c.l.b16 %v4280
        %v4336 = vunpack.c.l.b16 %v4281
        %v4337 = vunpack.c.l.b16 %v4282
        %v4338 = vpack.c.b16 %v4335, %v4334
        %v4339 = vpack.c.b16 %v4337, %v4336
        %v4343 = vsel %vm1857, %v4329, 0
        %4345 = vmatpush.bf16.msra.mxu0 0
        %4346 = vmatpush.bf16.msra.mxu0 0
        %4347 = vmatpush.bf16.msra.mxu0 0
        %4348 = vmatpush.bf16.msra.mxu0 0
        %4349 = vmatpush.bf16.msra.mxu0 0
        %4350 = vmatpush.bf16.msra.mxu0 0
        %4351 = vmatpush.bf16.msra.mxu0 %v4339
        %4352 = vmatpush.bf16.msra.mxu0 %v4338
        %4353 = vmatmul.bf16.gmra.mxu0 %v4343
        %v4354 = vpop.f32.mrf.mxu0
        %v4355 = vadd.f32 0.0, %v4354
        %v4356 = vpop.f32.mrf.mxu0
        %v4357 = vadd.f32 0.0, %v4356
        %4358 = vdwg.mxu0
        %v4361 = vunpack.c.l.b16 %v4270
        %v4362 = vunpack.c.l.b16 %v4271
        %v4363 = vpack.c.b16 %v4362, %v4361
        %v4368 = vunpack.c.l.b16 %v4283
        %v4369 = vunpack.c.l.b16 %v4284
        %v4370 = vunpack.c.l.b16 %v4285
        %v4371 = vunpack.c.l.b16 %v4286
        %v4372 = vpack.c.b16 %v4369, %v4368
        %v4373 = vpack.c.b16 %v4371, %v4370
        %v4377 = vsel %vm1857, %v4363, 0
        %4379 = vmatpush.bf16.msra.mxu0 0
        %4380 = vmatpush.bf16.msra.mxu0 0
        %4381 = vmatpush.bf16.msra.mxu0 0
        %4382 = vmatpush.bf16.msra.mxu0 0
        %4383 = vmatpush.bf16.msra.mxu0 0
        %4384 = vmatpush.bf16.msra.mxu0 0
        %4385 = vmatpush.bf16.msra.mxu0 %v4373
        %4386 = vmatpush.bf16.msra.mxu0 %v4372
        %4387 = vmatmul.bf16.gmra.mxu0 %v4377
        %v4388 = vpop.f32.mrf.mxu0
        %v4389 = vadd.f32 0.0, %v4388
        %v4390 = vpop.f32.mrf.mxu0
        %v4391 = vadd.f32 0.0, %v4390
        %4392 = vdwg.mxu0
        %v4395 = vunpack.c.l.b16 %v4272
        %v4396 = vunpack.c.l.b16 %v4273
        %v4397 = vpack.c.b16 %v4396, %v4395
        %v4402 = vunpack.c.l.b16 %v4287
        %v4403 = vunpack.c.l.b16 %v4288
        %v4404 = vunpack.c.l.b16 %v4289
        %v4405 = vunpack.c.l.b16 %v4290
        %v4406 = vpack.c.b16 %v4403, %v4402
        %v4407 = vpack.c.b16 %v4405, %v4404
        %v4411 = vsel %vm1857, %v4397, 0
        %4413 = vmatpush.bf16.msra.mxu0 0
        %4414 = vmatpush.bf16.msra.mxu0 0
        %4415 = vmatpush.bf16.msra.mxu0 0
        %4416 = vmatpush.bf16.msra.mxu0 0
        %4417 = vmatpush.bf16.msra.mxu0 0
        %4418 = vmatpush.bf16.msra.mxu0 0
        %4419 = vmatpush.bf16.msra.mxu0 %v4407
        %4420 = vmatpush.bf16.msra.mxu0 %v4406
        %4421 = vmatmul.bf16.gmra.mxu0 %v4411
        %v4422 = vpop.f32.mrf.mxu0
        %v4423 = vadd.f32 0.0, %v4422
        %v4424 = vpop.f32.mrf.mxu0
        %v4425 = vadd.f32 0.0, %v4424
        %4426 = vdwg.mxu0
        %v4427 = vadd.f32 %v4321, %v4355
        %v4428 = vadd.f32 %v4427, %v4389
        %v4429 = vadd.f32 %v4428, %v4423
        %v4430 = vsel %vm829, %v4323, 0.0
        %v4431 = vsel %vm829, %v4357, 0.0
        %v4432 = vadd.f32 %v4430, %v4431
        %v4433 = vsel %vm829, %v4391, 0.0
        %v4434 = vadd.f32 %v4432, %v4433
        %v4435 = vsel %vm829, %v4425, 0.0
        %v4436 = vadd.f32 %v4434, %v4435
        %v4437 = vadd.f32 %v2893, %v4429
        %v4438 = vadd.f32 %v2894, %v4436
        %s4439 = scalar_lea.vmem %s11, 1
        %v4440 = vld [vmem:[%s4439] sm:$0x1]
        %v4442 = vperm.slane %v4440, 0
        %v4444 = vadd.f32 %v4437, %v4442
        %v4445 = vadd.f32 %v4438, %v4442
        %s4446 = scalar_lea.vmem %s12, 1
        %v4447 = vld [vmem:[%s4446] sm:$0x1]
        %s4448 = scalar_lea.vmem %s13, 1
        %v4449 = vld [vmem:[%s4448] sm:$0x1]
        %4450 = vadd.xlane.f32.xlu0 %v4444
        %v4451 = vpop.xlane.xlu0 %4450
        %v4452 = vsel %vm829, %v4445, 0.0
        %4453 = vadd.xlane.f32.xlu0 %v4452
        %v4454 = vpop.xlane.xlu0 %4453
        %v4455 = vmul.f32 %v4451, %v839
        %v4456 = vmul.f32 %v4454, %v839
        %v4457 = vsub.f32 %v4444, %v4455
        %v4458 = vsub.f32 %v4445, %v4456
        %v4459 = vmul.f32 %v4457, %v4457
        %v4460 = vmul.f32 %v4458, %v4458
        %4461 = vadd.xlane.f32.xlu0 %v4459
        %v4462 = vpop.xlane.xlu0 %4461
        %v4463 = vsel %vm829, %v4460, 0.0
        %4464 = vadd.xlane.f32.xlu0 %v4463
        %v4465 = vpop.xlane.xlu0 %4464
        %v4466 = vmul.f32 %v4462, %v839
        %v4467 = vmul.f32 %v4465, %v839
        %v4468 = vadd.f32 %v4466, 1e-05
        %v4469 = vadd.f32 %v4467, 1e-05
        %v4470 = vrsqrt.pop %v4468
        %v4471 = vmul.f32 %v4470, %v4468
        %v4472 = vmul.f32 %v4471, %v4470
        %v4473 = vmul.f32 0.5, %v4472
        %v4474 = vsub.f32 1.5, %v4473
        %v4475 = vmul.f32 %v4470, %v4474
        %vm4476 = vweird.f32 %v4468
        %vm4477 = vweird.f32 %v4470
        %vm4478 = vmor %vm4476, %vm4477
        %v4479 = vsel %vm4478, %v4470, %v4475
        %v4480 = vrsqrt.pop %v4469
        %v4481 = vmul.f32 %v4480, %v4469
        %v4482 = vmul.f32 %v4481, %v4480
        %v4483 = vmul.f32 0.5, %v4482
        %v4484 = vsub.f32 1.5, %v4483
        %v4485 = vmul.f32 %v4480, %v4484
        %vm4486 = vweird.f32 %v4469
        %vm4487 = vweird.f32 %v4480
        %vm4488 = vmor %vm4486, %vm4487
        %v4489 = vsel %vm4488, %v4480, %v4485
        %v4490 = vmul.f32 %v4457, %v4479
        %v4491 = vmul.f32 %v4458, %v4489
        %v4493 = vperm.slane %v4447, 0
        %v4495 = vmul.f32 %v4490, %v4493
        %v4496 = vmul.f32 %v4491, %v4493
        %v4498 = vperm.slane %v4449, 0
        %v4500 = vadd.f32 %v4495, %v4498
        %v4501 = vadd.f32 %v4496, %v4498
        %v4502 = vpack.c.bf16 %v4501, %v4500
        %s4503 = scalar_lea.vmem %s14, 128
        %v4504 = vld [vmem:[%s4503] sm:$0xff]
        %v4505 = vld [vmem:[%s4503 + $0x8] sm:$0xff]
        %v4506 = vld [vmem:[%s4503 + $0x10] sm:$0xff]
        %v4507 = vld [vmem:[%s4503 + $0x18] sm:$0xff]
        %v4508 = vld [vmem:[%s4503 + $0x20] sm:$0xff]
        %v4509 = vld [vmem:[%s4503 + $0x28] sm:$0xff]
        %v4510 = vld [vmem:[%s4503 + $0x30] sm:$0xff]
        %v4511 = vld [vmem:[%s4503 + $0x38] sm:$0xff]
        %v4512 = vld [vmem:[%s4503 + $0x40] sm:$0xff]
        %v4513 = vld [vmem:[%s4503 + $0x48] sm:$0xff]
        %v4514 = vld [vmem:[%s4503 + $0x50] sm:$0xff]
        %v4515 = vld [vmem:[%s4503 + $0x58] sm:$0xff]
        %v4516 = vld [vmem:[%s4503 + $0x60] sm:$0xff]
        %v4517 = vld [vmem:[%s4503 + $0x68] sm:$0xff]
        %v4518 = vld [vmem:[%s4503 + $0x70] sm:$0xff]
        %v4519 = vld [vmem:[%s4503 + $0x78] sm:$0xff]
        %s4520 = scalar_lea.vmem %s15, 2
        %v4521 = vld [vmem:[%s4520] sm:$0x3]
        %v4523 = vperm.slane %v4521, 0
        %v4524 = vperm.slane %v4521, 1
        %v4543 = vunpack.c.l.b16 %v4504
        %v4544 = vunpack.c.h.b16 %v4504
        %v4545 = vunpack.c.l.b16 %v4505
        %v4546 = vunpack.c.h.b16 %v4505
        %v4547 = vunpack.c.l.b16 %v4506
        %v4548 = vunpack.c.h.b16 %v4506
        %v4549 = vunpack.c.l.b16 %v4507
        %v4550 = vunpack.c.h.b16 %v4507
        %v4551 = vunpack.c.l.b16 %v4508
        %v4552 = vunpack.c.h.b16 %v4508
        %v4553 = vunpack.c.l.b16 %v4509
        %v4554 = vunpack.c.h.b16 %v4509
        %v4555 = vunpack.c.l.b16 %v4510
        %v4556 = vunpack.c.h.b16 %v4510
        %v4557 = vunpack.c.l.b16 %v4511
        %v4558 = vunpack.c.h.b16 %v4511
        %v4559 = vunpack.c.l.b16 %v4512
        %v4560 = vunpack.c.h.b16 %v4512
        %v4561 = vunpack.c.l.b16 %v4513
        %v4562 = vunpack.c.h.b16 %v4513
        %v4563 = vunpack.c.l.b16 %v4514
        %v4564 = vunpack.c.h.b16 %v4514
        %v4565 = vunpack.c.l.b16 %v4515
        %v4566 = vunpack.c.h.b16 %v4515
        %v4567 = vunpack.c.l.b16 %v4516
        %v4568 = vunpack.c.h.b16 %v4516
        %v4569 = vunpack.c.l.b16 %v4517
        %v4570 = vunpack.c.h.b16 %v4517
        %v4571 = vunpack.c.l.b16 %v4518
        %v4572 = vunpack.c.h.b16 %v4518
        %v4573 = vunpack.c.l.b16 %v4519
        %v4574 = vunpack.c.h.b16 %v4519
        %v4575 = vpack.c.b16 %v4545, %v4543
        %v4576 = vpack.c.b16 %v4546, %v4544
        %v4577 = vpack.c.b16 %v4549, %v4547
        %v4578 = vpack.c.b16 %v4550, %v4548
        %v4579 = vpack.c.b16 %v4553, %v4551
        %v4580 = vpack.c.b16 %v4554, %v4552
        %v4581 = vpack.c.b16 %v4557, %v4555
        %v4582 = vpack.c.b16 %v4558, %v4556
        %v4583 = vpack.c.b16 %v4561, %v4559
        %v4584 = vpack.c.b16 %v4562, %v4560
        %v4585 = vpack.c.b16 %v4565, %v4563
        %v4586 = vpack.c.b16 %v4566, %v4564
        %v4587 = vpack.c.b16 %v4569, %v4567
        %v4588 = vpack.c.b16 %v4570, %v4568
        %v4589 = vpack.c.b16 %v4573, %v4571
        %v4590 = vpack.c.b16 %v4574, %v4572
        %4607 = vmatpush.bf16.msra.mxu0 %v4589
        %4608 = vmatpush.bf16.msra.mxu0 %v4587
        %4609 = vmatpush.bf16.msra.mxu0 %v4585
        %4610 = vmatpush.bf16.msra.mxu0 %v4583
        %4611 = vmatpush.bf16.msra.mxu0 %v4581
        %4612 = vmatpush.bf16.msra.mxu0 %v4579
        %4613 = vmatpush.bf16.msra.mxu0 %v4577
        %4614 = vmatpush.bf16.msra.mxu0 %v4575
        %4615 = vmatmul.bf16.gmra.mxu0 %v4502
        %v4616 = vpop.f32.mrf.mxu0
        %v4617 = vadd.f32 %v4523, %v4616
        %v4618 = vpop.f32.mrf.mxu0
        %v4619 = vadd.f32 %v4523, %v4618
        %4620 = vdwg.mxu0
        %4621 = vmatpush.bf16.msra.mxu0 %v4590
        %4622 = vmatpush.bf16.msra.mxu0 %v4588
        %4623 = vmatpush.bf16.msra.mxu0 %v4586
        %4624 = vmatpush.bf16.msra.mxu0 %v4584
        %4625 = vmatpush.bf16.msra.mxu0 %v4582
        %4626 = vmatpush.bf16.msra.mxu0 %v4580
        %4627 = vmatpush.bf16.msra.mxu0 %v4578
        %4628 = vmatpush.bf16.msra.mxu0 %v4576
        %4629 = vmatmul.bf16.gmra.mxu0 %v4502
        %v4630 = vpop.f32.mrf.mxu0
        %v4631 = vadd.f32 %v4524, %v4630
        %v4632 = vpop.f32.mrf.mxu0
        %v4633 = vadd.f32 %v4524, %v4632
        %4634 = vdwg.mxu0
        %v4635 = vmul.f32 %v4617, 0.5
        %v4636 = vmul.f32 %v4631, 0.5
        %v4637 = vmul.f32 %v4619, 0.5
        %v4638 = vmul.f32 %v4633, 0.5
        %v4639 = vmul.f32 %v4617, 0.70710677
        %v4640 = vmul.f32 %v4631, 0.70710677
        %v4641 = vmul.f32 %v4619, 0.70710677
        %v4642 = vmul.f32 %v4633, 0.70710677
        %v4643 = vand.u32 2147483647, %v4639
        %v4644 = vand.u32 2147483647, %v4640
        %v4645 = vand.u32 2147483647, %v4641
        %v4646 = vand.u32 2147483647, %v4642
        %v4647 = vmul.f32 %v4643, 0.3275911
        %v4648 = vmul.f32 %v4644, 0.3275911
        %v4649 = vmul.f32 %v4645, 0.3275911
        %v4650 = vmul.f32 %v4646, 0.3275911
        %v4651 = vadd.f32 %v4647, 1.0
        %v4652 = vadd.f32 %v4648, 1.0
        %v4653 = vadd.f32 %v4649, 1.0
        %v4654 = vadd.f32 %v4650, 1.0
        %v4655 = vrcp.pop %v4651
        %v4656 = vmul.f32 %v4651, %v4655
        %v4657 = vsub.f32 1.0, %v4656
        %v4658 = vmul.f32 %v4655, %v4657
        %v4659 = vadd.f32 %v4655, %v4658
        %vm4660 = vweird.f32 %v4651
        %vm4661 = vweird.f32 %v4655
        %vm4662 = vmor %vm4660, %vm4661
        %v4663 = vsel %vm4662, %v4655, %v4659
        %v4664 = vand.u32 2147483647, %v4651
        %vm4665 = vcmp.eq.f32.partialorder %v4664, 8.507059e+37
        %v4666 = vand.u32 %v4651, 2147483648
        %v4667 = vor.u32 1.1754944e-38, %v4666
        %v4668 = vsel %vm4665, %v4667, %v4663
        %v4669 = vmul.f32 1.0, %v4668
        %v4670 = vrcp.pop %v4652
        %v4671 = vmul.f32 %v4652, %v4670
        %v4672 = vsub.f32 1.0, %v4671
        %v4673 = vmul.f32 %v4670, %v4672
        %v4674 = vadd.f32 %v4670, %v4673
        %vm4675 = vweird.f32 %v4652
        %vm4676 = vweird.f32 %v4670
        %vm4677 = vmor %vm4675, %vm4676
        %v4678 = vsel %vm4677, %v4670, %v4674
        %v4679 = vand.u32 2147483647, %v4652
        %vm4680 = vcmp.eq.f32.partialorder %v4679, 8.507059e+37
        %v4681 = vand.u32 %v4652, 2147483648
        %v4682 = vor.u32 1.1754944e-38, %v4681
        %v4683 = vsel %vm4680, %v4682, %v4678
        %v4684 = vmul.f32 1.0, %v4683
        %v4685 = vrcp.pop %v4653
        %v4686 = vmul.f32 %v4653, %v4685
        %v4687 = vsub.f32 1.0, %v4686
        %v4688 = vmul.f32 %v4685, %v4687
        %v4689 = vadd.f32 %v4685, %v4688
        %vm4690 = vweird.f32 %v4653
        %vm4691 = vweird.f32 %v4685
        %vm4692 = vmor %vm4690, %vm4691
        %v4693 = vsel %vm4692, %v4685, %v4689
        %v4694 = vand.u32 2147483647, %v4653
        %vm4695 = vcmp.eq.f32.partialorder %v4694, 8.507059e+37
        %v4696 = vand.u32 %v4653, 2147483648
        %v4697 = vor.u32 1.1754944e-38, %v4696
        %v4698 = vsel %vm4695, %v4697, %v4693
        %v4699 = vmul.f32 1.0, %v4698
        %v4700 = vrcp.pop %v4654
        %v4701 = vmul.f32 %v4654, %v4700
        %v4702 = vsub.f32 1.0, %v4701
        %v4703 = vmul.f32 %v4700, %v4702
        %v4704 = vadd.f32 %v4700, %v4703
        %vm4705 = vweird.f32 %v4654
        %vm4706 = vweird.f32 %v4700
        %vm4707 = vmor %vm4705, %vm4706
        %v4708 = vsel %vm4707, %v4700, %v4704
        %v4709 = vand.u32 2147483647, %v4654
        %vm4710 = vcmp.eq.f32.partialorder %v4709, 8.507059e+37
        %v4711 = vand.u32 %v4654, 2147483648
        %v4712 = vor.u32 1.1754944e-38, %v4711
        %v4713 = vsel %vm4710, %v4712, %v4708
        %v4714 = vmul.f32 1.0, %v4713
        %v4715 = vmul.f32 %v4669, 1.0614054
        %v4716 = vmul.f32 %v4684, 1.0614054
        %v4717 = vmul.f32 %v4699, 1.0614054
        %v4718 = vmul.f32 %v4714, 1.0614054
        %v4719 = vadd.f32 %v4715, -1.4531521
        %v4720 = vadd.f32 %v4716, -1.4531521
        %v4721 = vadd.f32 %v4717, -1.4531521
        %v4722 = vadd.f32 %v4718, -1.4531521
        %v4723 = vmul.f32 %v4719, %v4669
        %v4724 = vmul.f32 %v4720, %v4684
        %v4725 = vmul.f32 %v4721, %v4699
        %v4726 = vmul.f32 %v4722, %v4714
        %v4727 = vadd.f32 %v4723, 1.4214138
        %v4728 = vadd.f32 %v4724, 1.4214138
        %v4729 = vadd.f32 %v4725, 1.4214138
        %v4730 = vadd.f32 %v4726, 1.4214138
        %v4731 = vmul.f32 %v4727, %v4669
        %v4732 = vmul.f32 %v4728, %v4684
        %v4733 = vmul.f32 %v4729, %v4699
        %v4734 = vmul.f32 %v4730, %v4714
        %v4735 = vadd.f32 %v4731, -0.28449672
        %v4736 = vadd.f32 %v4732, -0.28449672
        %v4737 = vadd.f32 %v4733, -0.28449672
        %v4738 = vadd.f32 %v4734, -0.28449672
        %v4739 = vmul.f32 %v4735, %v4669
        %v4740 = vmul.f32 %v4736, %v4684
        %v4741 = vmul.f32 %v4737, %v4699
        %v4742 = vmul.f32 %v4738, %v4714
        %v4743 = vadd.f32 %v4739, 0.2548296
        %v4744 = vadd.f32 %v4740, 0.2548296
        %v4745 = vadd.f32 %v4741, 0.2548296
        %v4746 = vadd.f32 %v4742, 0.2548296
        %v4747 = vmul.f32 %v4743, %v4669
        %v4748 = vmul.f32 %v4744, %v4684
        %v4749 = vmul.f32 %v4745, %v4699
        %v4750 = vmul.f32 %v4746, %v4714
        %v4751 = vmul.f32 %v4643, %v4643
        %v4752 = vmul.f32 %v4644, %v4644
        %v4753 = vmul.f32 %v4645, %v4645
        %v4754 = vmul.f32 %v4646, %v4646
        %v4755 = vsub.f32 0.0, %v4751
        %v4756 = vsub.f32 0.0, %v4752
        %v4757 = vsub.f32 0.0, %v4753
        %v4758 = vsub.f32 0.0, %v4754
        %v4759 = vmul.f32 %v4755, 1.442695
        %v4760 = vpow.pop %v4759
        %v4761 = vmul.f32 %v4756, 1.442695
        %v4762 = vpow.pop %v4761
        %v4763 = vmul.f32 %v4757, 1.442695
        %v4764 = vpow.pop %v4763
        %v4765 = vmul.f32 %v4758, 1.442695
        %v4766 = vpow.pop %v4765
        %v4767 = vmul.f32 %v4747, %v4760
        %v4768 = vmul.f32 %v4748, %v4762
        %v4769 = vmul.f32 %v4749, %v4764
        %v4770 = vmul.f32 %v4750, %v4766
        %v4771 = vsub.f32 1.0, %v4767
        %v4772 = vsub.f32 1.0, %v4768
        %v4773 = vsub.f32 1.0, %v4769
        %v4774 = vsub.f32 1.0, %v4770
        %vm4775 = vcmp.lt.f32.partialorder %v4639, 0.0
        %vm4776 = vcmp.lt.f32.partialorder %v4640, 0.0
        %vm4777 = vcmp.lt.f32.partialorder %v4641, 0.0
        %vm4778 = vcmp.lt.f32.partialorder %v4642, 0.0
        %v4779 = vsub.f32 0.0, %v4771
        %v4780 = vsub.f32 0.0, %v4772
        %v4781 = vsub.f32 0.0, %v4773
        %v4782 = vsub.f32 0.0, %v4774
        %v4783 = vsel %vm4775, %v4779, %v4771
        %v4784 = vsel %vm4776, %v4780, %v4772
        %v4785 = vsel %vm4777, %v4781, %v4773
        %v4786 = vsel %vm4778, %v4782, %v4774
        %v4787 = vadd.f32 %v4783, 1.0
        %v4788 = vadd.f32 %v4784, 1.0
        %v4789 = vadd.f32 %v4785, 1.0
        %v4790 = vadd.f32 %v4786, 1.0
        %v4791 = vmul.f32 %v4635, %v4787
        %v4792 = vmul.f32 %v4636, %v4788
        %v4793 = vmul.f32 %v4637, %v4789
        %v4794 = vmul.f32 %v4638, %v4790
        %v4795 = vpack.c.bf16 %v4793, %v4791
        %v4796 = vpack.c.bf16 %v4794, %v4792
        %s4797 = scalar_lea.vmem %s16, 128
        %v4798 = vld [vmem:[%s4797] sm:$0xf]
        %v4799 = vld [vmem:[%s4797 + $0x4] sm:$0xf]
        %v4800 = vld [vmem:[%s4797 + $0x8] sm:$0xf]
        %v4801 = vld [vmem:[%s4797 + $0xc] sm:$0xf]
        %v4802 = vld [vmem:[%s4797 + $0x10] sm:$0xf]
        %v4803 = vld [vmem:[%s4797 + $0x14] sm:$0xf]
        %v4804 = vld [vmem:[%s4797 + $0x18] sm:$0xf]
        %v4805 = vld [vmem:[%s4797 + $0x1c] sm:$0xf]
        %v4806 = vld [vmem:[%s4797 + $0x20] sm:$0xf]
        %v4807 = vld [vmem:[%s4797 + $0x24] sm:$0xf]
        %v4808 = vld [vmem:[%s4797 + $0x28] sm:$0xf]
        %v4809 = vld [vmem:[%s4797 + $0x2c] sm:$0xf]
        %v4810 = vld [vmem:[%s4797 + $0x30] sm:$0xf]
        %v4811 = vld [vmem:[%s4797 + $0x34] sm:$0xf]
        %v4812 = vld [vmem:[%s4797 + $0x38] sm:$0xf]
        %v4813 = vld [vmem:[%s4797 + $0x3c] sm:$0xf]
        %v4814 = vld [vmem:[%s4797 + $0x40] sm:$0xf]
        %v4815 = vld [vmem:[%s4797 + $0x44] sm:$0xf]
        %v4816 = vld [vmem:[%s4797 + $0x48] sm:$0xf]
        %v4817 = vld [vmem:[%s4797 + $0x4c] sm:$0xf]
        %v4818 = vld [vmem:[%s4797 + $0x50] sm:$0xf]
        %v4819 = vld [vmem:[%s4797 + $0x54] sm:$0xf]
        %v4820 = vld [vmem:[%s4797 + $0x58] sm:$0xf]
        %v4821 = vld [vmem:[%s4797 + $0x5c] sm:$0xf]
        %v4822 = vld [vmem:[%s4797 + $0x60] sm:$0xf]
        %v4823 = vld [vmem:[%s4797 + $0x64] sm:$0xf]
        %v4824 = vld [vmem:[%s4797 + $0x68] sm:$0xf]
        %v4825 = vld [vmem:[%s4797 + $0x6c] sm:$0xf]
        %v4826 = vld [vmem:[%s4797 + $0x70] sm:$0xf]
        %v4827 = vld [vmem:[%s4797 + $0x74] sm:$0xf]
        %v4828 = vld [vmem:[%s4797 + $0x78] sm:$0xf]
        %v4829 = vld [vmem:[%s4797 + $0x7c] sm:$0xf]
        %v4862 = vunpack.c.l.b16 %v4798
        %v4863 = vunpack.c.l.b16 %v4799
        %v4864 = vunpack.c.l.b16 %v4800
        %v4865 = vunpack.c.l.b16 %v4801
        %v4866 = vunpack.c.l.b16 %v4802
        %v4867 = vunpack.c.l.b16 %v4803
        %v4868 = vunpack.c.l.b16 %v4804
        %v4869 = vunpack.c.l.b16 %v4805
        %v4870 = vunpack.c.l.b16 %v4806
        %v4871 = vunpack.c.l.b16 %v4807
        %v4872 = vunpack.c.l.b16 %v4808
        %v4873 = vunpack.c.l.b16 %v4809
        %v4874 = vunpack.c.l.b16 %v4810
        %v4875 = vunpack.c.l.b16 %v4811
        %v4876 = vunpack.c.l.b16 %v4812
        %v4877 = vunpack.c.l.b16 %v4813
        %v4878 = vunpack.c.l.b16 %v4814
        %v4879 = vunpack.c.l.b16 %v4815
        %v4880 = vunpack.c.l.b16 %v4816
        %v4881 = vunpack.c.l.b16 %v4817
        %v4882 = vunpack.c.l.b16 %v4818
        %v4883 = vunpack.c.l.b16 %v4819
        %v4884 = vunpack.c.l.b16 %v4820
        %v4885 = vunpack.c.l.b16 %v4821
        %v4886 = vunpack.c.l.b16 %v4822
        %v4887 = vunpack.c.l.b16 %v4823
        %v4888 = vunpack.c.l.b16 %v4824
        %v4889 = vunpack.c.l.b16 %v4825
        %v4890 = vunpack.c.l.b16 %v4826
        %v4891 = vunpack.c.l.b16 %v4827
        %v4892 = vunpack.c.l.b16 %v4828
        %v4893 = vunpack.c.l.b16 %v4829
        %v4894 = vpack.c.b16 %v4863, %v4862
        %v4895 = vpack.c.b16 %v4865, %v4864
        %v4896 = vpack.c.b16 %v4867, %v4866
        %v4897 = vpack.c.b16 %v4869, %v4868
        %v4898 = vpack.c.b16 %v4871, %v4870
        %v4899 = vpack.c.b16 %v4873, %v4872
        %v4900 = vpack.c.b16 %v4875, %v4874
        %v4901 = vpack.c.b16 %v4877, %v4876
        %v4902 = vpack.c.b16 %v4879, %v4878
        %v4903 = vpack.c.b16 %v4881, %v4880
        %v4904 = vpack.c.b16 %v4883, %v4882
        %v4905 = vpack.c.b16 %v4885, %v4884
        %v4906 = vpack.c.b16 %v4887, %v4886
        %v4907 = vpack.c.b16 %v4889, %v4888
        %v4908 = vpack.c.b16 %v4891, %v4890
        %v4909 = vpack.c.b16 %v4893, %v4892
        %4926 = vmatpush.bf16.msra.mxu0 %v4901
        %4927 = vmatpush.bf16.msra.mxu0 %v4900
        %4928 = vmatpush.bf16.msra.mxu0 %v4899
        %4929 = vmatpush.bf16.msra.mxu0 %v4898
        %4930 = vmatpush.bf16.msra.mxu0 %v4897
        %4931 = vmatpush.bf16.msra.mxu0 %v4896
        %4932 = vmatpush.bf16.msra.mxu0 %v4895
        %4933 = vmatpush.bf16.msra.mxu0 %v4894
        %4934 = vmatmul.bf16.gmra.mxu0 %v4795
        %v4935 = vpop.f32.mrf.mxu0
        %v4936 = vpop.f32.mrf.mxu0
        %v4937 = vadd.f32 0.0, %v4936
        %4938 = vdwg.mxu0
        %4939 = vmatpush.bf16.msra.mxu0 %v4909
        %4940 = vmatpush.bf16.msra.mxu0 %v4908
        %4941 = vmatpush.bf16.msra.mxu0 %v4907
        %4942 = vmatpush.bf16.msra.mxu0 %v4906
        %4943 = vmatpush.bf16.msra.mxu0 %v4905
        %4944 = vmatpush.bf16.msra.mxu0 %v4904
        %4945 = vmatpush.bf16.msra.mxu0 %v4903
        %4946 = vmatpush.bf16.msra.mxu0 %v4902
        %4947 = vmatmul.bf16.gmra.mxu0 %v4796
        %v4948 = vpop.f32.mrf.mxu0
        %v4949 = vpop.f32.mrf.mxu0
        %v4950 = vadd.f32 %v4937, %v4949
        %4951 = vdwg.mxu0
        %v4952 = vadd.f32 %v4445, %v4950
        %s4953 = scalar_lea.vmem %s17, 1
        %v4954 = vld [vmem:[%s4953] sm:$0x1]
        %v4956 = vperm.slane %v4954, 0
        %v4958 = vadd.f32 %v4952, %v4956
        %v4959 = vld [vmem:[%s18] sm:$0x1]
        %v4960 = vld [vmem:[%s19] sm:$0x1]
        %v4961 = vsel %vm829, %v4958, 0.0
        %4962 = vadd.xlane.f32.xlu0 %v4961
        %v4963 = vpop.xlane.xlu0 %4962
        %v4964 = vmul.f32 %v4963, %v839
        %v4965 = vsub.f32 %v4958, %v4964
        %v4966 = vmul.f32 %v4965, %v4965
        %v4967 = vsel %vm829, %v4966, 0.0
        %4968 = vadd.xlane.f32.xlu0 %v4967
        %v4969 = vpop.xlane.xlu0 %4968
        %v4970 = vmul.f32 %v4969, %v839
        %v4971 = vadd.f32 %v4970, 1e-05
        %v4972 = vrsqrt.pop %v4971
        %v4973 = vmul.f32 %v4972, %v4971
        %v4974 = vmul.f32 %v4973, %v4972
        %v4975 = vmul.f32 0.5, %v4974
        %v4976 = vsub.f32 1.5, %v4975
        %v4977 = vmul.f32 %v4972, %v4976
        %vm4978 = vweird.f32 %v4971
        %vm4979 = vweird.f32 %v4972
        %vm4980 = vmor %vm4978, %vm4979
        %v4981 = vsel %vm4980, %v4972, %v4977
        %v4982 = vmul.f32 %v4965, %v4981
        %v4983 = vmul.f32 %v4982, %v4959
        %v4984 = vadd.f32 %v4983, %v4960
        %v4985 = vpack.c.bf16 %v4984, %v4984
        %v4986 = vld [vmem:[%s20] sm:$0xff]
        %v4987 = vld [vmem:[%s20 + $0x8] sm:$0xff]
        %v4988 = vld [vmem:[%s20 + $0x10] sm:$0xff]
        %v4989 = vld [vmem:[%s20 + $0x18] sm:$0xff]
        %v4990 = vld [vmem:[%s20 + $0x20] sm:$0xff]
        %v4991 = vld [vmem:[%s20 + $0x28] sm:$0xff]
        %v4992 = vld [vmem:[%s20 + $0x30] sm:$0xff]
        %v4993 = vld [vmem:[%s20 + $0x38] sm:$0xff]
        %v4994 = vld [vmem:[%s20 + $0x40] sm:$0xff]
        %v4995 = vld [vmem:[%s20 + $0x48] sm:$0xff]
        %v4996 = vld [vmem:[%s20 + $0x50] sm:$0xff]
        %v4997 = vld [vmem:[%s20 + $0x58] sm:$0xff]
        %v4998 = vld [vmem:[%s20 + $0x60] sm:$0xff]
        %v4999 = vld [vmem:[%s20 + $0x68] sm:$0xff]
        %v5000 = vld [vmem:[%s20 + $0x70] sm:$0xff]
        %v5001 = vld [vmem:[%s20 + $0x78] sm:$0xff]
        %v5002 = vld [vmem:[%s21] sm:$0x3]
        %v5019 = vunpack.c.l.b16 %v4986
        %v5020 = vunpack.c.h.b16 %v4986
        %v5021 = vunpack.c.l.b16 %v4987
        %v5022 = vunpack.c.h.b16 %v4987
        %v5023 = vunpack.c.l.b16 %v4988
        %v5024 = vunpack.c.h.b16 %v4988
        %v5025 = vunpack.c.l.b16 %v4989
        %v5026 = vunpack.c.h.b16 %v4989
        %v5027 = vunpack.c.l.b16 %v4990
        %v5028 = vunpack.c.h.b16 %v4990
        %v5029 = vunpack.c.l.b16 %v4991
        %v5030 = vunpack.c.h.b16 %v4991
        %v5031 = vunpack.c.l.b16 %v4992
        %v5032 = vunpack.c.h.b16 %v4992
        %v5033 = vunpack.c.l.b16 %v4993
        %v5034 = vunpack.c.h.b16 %v4993
        %v5035 = vunpack.c.l.b16 %v4994
        %v5036 = vunpack.c.h.b16 %v4994
        %v5037 = vunpack.c.l.b16 %v4995
        %v5038 = vunpack.c.h.b16 %v4995
        %v5039 = vunpack.c.l.b16 %v4996
        %v5040 = vunpack.c.h.b16 %v4996
        %v5041 = vunpack.c.l.b16 %v4997
        %v5042 = vunpack.c.h.b16 %v4997
        %v5043 = vunpack.c.l.b16 %v4998
        %v5044 = vunpack.c.h.b16 %v4998
        %v5045 = vunpack.c.l.b16 %v4999
        %v5046 = vunpack.c.h.b16 %v4999
        %v5047 = vunpack.c.l.b16 %v5000
        %v5048 = vunpack.c.h.b16 %v5000
        %v5049 = vunpack.c.l.b16 %v5001
        %v5050 = vunpack.c.h.b16 %v5001
        %v5051 = vpack.c.b16 %v5021, %v5019
        %v5052 = vpack.c.b16 %v5022, %v5020
        %v5053 = vpack.c.b16 %v5025, %v5023
        %v5054 = vpack.c.b16 %v5026, %v5024
        %v5055 = vpack.c.b16 %v5029, %v5027
        %v5056 = vpack.c.b16 %v5030, %v5028
        %v5057 = vpack.c.b16 %v5033, %v5031
        %v5058 = vpack.c.b16 %v5034, %v5032
        %v5059 = vpack.c.b16 %v5037, %v5035
        %v5060 = vpack.c.b16 %v5038, %v5036
        %v5061 = vpack.c.b16 %v5041, %v5039
        %v5062 = vpack.c.b16 %v5042, %v5040
        %v5063 = vpack.c.b16 %v5045, %v5043
        %v5064 = vpack.c.b16 %v5046, %v5044
        %v5065 = vpack.c.b16 %v5049, %v5047
        %v5066 = vpack.c.b16 %v5050, %v5048
        %v5084 = vperm.slane %v5002, 0
        %v5085 = vperm.slane %v5002, 1
        %5088 = vmatpush.bf16.msra.mxu0 %v5065
        %5089 = vmatpush.bf16.msra.mxu0 %v5063
        %5090 = vmatpush.bf16.msra.mxu0 %v5061
        %5091 = vmatpush.bf16.msra.mxu0 %v5059
        %5092 = vmatpush.bf16.msra.mxu0 %v5057
        %5093 = vmatpush.bf16.msra.mxu0 %v5055
        %5094 = vmatpush.bf16.msra.mxu0 %v5053
        %5095 = vmatpush.bf16.msra.mxu0 %v5051
        %5096 = vmatmul.bf16.gmra.mxu0 %v4985
        %v5097 = vpop.f32.mrf.mxu0
        %v5098 = vadd.f32 %v5084, %v5097
        %v5099 = vpop.f32.mrf.mxu0
        %5100 = vdwg.mxu0
        %5101 = vmatpush.bf16.msra.mxu0 %v5066
        %5102 = vmatpush.bf16.msra.mxu0 %v5064
        %5103 = vmatpush.bf16.msra.mxu0 %v5062
        %5104 = vmatpush.bf16.msra.mxu0 %v5060
        %5105 = vmatpush.bf16.msra.mxu0 %v5058
        %5106 = vmatpush.bf16.msra.mxu0 %v5056
        %5107 = vmatpush.bf16.msra.mxu0 %v5054
        %5108 = vmatpush.bf16.msra.mxu0 %v5052
        %5109 = vmatmul.bf16.gmra.mxu0 %v4985
        %v5110 = vpop.f32.mrf.mxu0
        %v5111 = vadd.f32 %v5085, %v5110
        %v5112 = vpop.f32.mrf.mxu0
        %5113 = vdwg.mxu0
        %v5114 = vmul.f32 %v5098, 0.5
        %v5115 = vmul.f32 %v5111, 0.5
        %v5116 = vmul.f32 %v5098, 0.70710677
        %v5117 = vmul.f32 %v5111, 0.70710677
        %v5118 = vand.u32 2147483647, %v5116
        %v5119 = vand.u32 2147483647, %v5117
        %v5120 = vmul.f32 %v5118, 0.3275911
        %v5121 = vmul.f32 %v5119, 0.3275911
        %v5122 = vadd.f32 %v5120, 1.0
        %v5123 = vadd.f32 %v5121, 1.0
        %v5124 = vrcp.pop %v5122
        %v5125 = vmul.f32 %v5122, %v5124
        %v5126 = vsub.f32 1.0, %v5125
        %v5127 = vmul.f32 %v5124, %v5126
        %v5128 = vadd.f32 %v5124, %v5127
        %vm5129 = vweird.f32 %v5122
        %vm5130 = vweird.f32 %v5124
        %vm5131 = vmor %vm5129, %vm5130
        %v5132 = vsel %vm5131, %v5124, %v5128
        %v5133 = vand.u32 2147483647, %v5122
        %vm5134 = vcmp.eq.f32.partialorder %v5133, 8.507059e+37
        %v5135 = vand.u32 %v5122, 2147483648
        %v5136 = vor.u32 1.1754944e-38, %v5135
        %v5137 = vsel %vm5134, %v5136, %v5132
        %v5138 = vmul.f32 1.0, %v5137
        %v5139 = vrcp.pop %v5123
        %v5140 = vmul.f32 %v5123, %v5139
        %v5141 = vsub.f32 1.0, %v5140
        %v5142 = vmul.f32 %v5139, %v5141
        %v5143 = vadd.f32 %v5139, %v5142
        %vm5144 = vweird.f32 %v5123
        %vm5145 = vweird.f32 %v5139
        %vm5146 = vmor %vm5144, %vm5145
        %v5147 = vsel %vm5146, %v5139, %v5143
        %v5148 = vand.u32 2147483647, %v5123
        %vm5149 = vcmp.eq.f32.partialorder %v5148, 8.507059e+37
        %v5150 = vand.u32 %v5123, 2147483648
        %v5151 = vor.u32 1.1754944e-38, %v5150
        %v5152 = vsel %vm5149, %v5151, %v5147
        %v5153 = vmul.f32 1.0, %v5152
        %v5154 = vmul.f32 %v5138, 1.0614054
        %v5155 = vmul.f32 %v5153, 1.0614054
        %v5156 = vadd.f32 %v5154, -1.4531521
        %v5157 = vadd.f32 %v5155, -1.4531521
        %v5158 = vmul.f32 %v5156, %v5138
        %v5159 = vmul.f32 %v5157, %v5153
        %v5160 = vadd.f32 %v5158, 1.4214138
        %v5161 = vadd.f32 %v5159, 1.4214138
        %v5162 = vmul.f32 %v5160, %v5138
        %v5163 = vmul.f32 %v5161, %v5153
        %v5164 = vadd.f32 %v5162, -0.28449672
        %v5165 = vadd.f32 %v5163, -0.28449672
        %v5166 = vmul.f32 %v5164, %v5138
        %v5167 = vmul.f32 %v5165, %v5153
        %v5168 = vadd.f32 %v5166, 0.2548296
        %v5169 = vadd.f32 %v5167, 0.2548296
        %v5170 = vmul.f32 %v5168, %v5138
        %v5171 = vmul.f32 %v5169, %v5153
        %v5172 = vmul.f32 %v5118, %v5118
        %v5173 = vmul.f32 %v5119, %v5119
        %v5174 = vsub.f32 0.0, %v5172
        %v5175 = vsub.f32 0.0, %v5173
        %v5176 = vmul.f32 %v5174, 1.442695
        %v5177 = vpow.pop %v5176
        %v5178 = vmul.f32 %v5175, 1.442695
        %v5179 = vpow.pop %v5178
        %v5180 = vmul.f32 %v5170, %v5177
        %v5181 = vmul.f32 %v5171, %v5179
        %v5182 = vsub.f32 1.0, %v5180
        %v5183 = vsub.f32 1.0, %v5181
        %vm5184 = vcmp.lt.f32.partialorder %v5116, 0.0
        %vm5185 = vcmp.lt.f32.partialorder %v5117, 0.0
        %v5186 = vsub.f32 0.0, %v5182
        %v5187 = vsub.f32 0.0, %v5183
        %v5188 = vsel %vm5184, %v5186, %v5182
        %v5189 = vsel %vm5185, %v5187, %v5183
        %v5190 = vadd.f32 %v5188, 1.0
        %v5191 = vadd.f32 %v5189, 1.0
        %v5192 = vmul.f32 %v5114, %v5190
        %v5193 = vmul.f32 %v5115, %v5191
        %v5194 = vpack.c.bf16 %v5192, %v5192
        %v5195 = vpack.c.bf16 %v5193, %v5193
        %v5196 = vld [vmem:[%s22] sm:$0xf]
        %v5197 = vld [vmem:[%s22 + $0x4] sm:$0xf]
        %v5198 = vld [vmem:[%s22 + $0x8] sm:$0xf]
        %v5199 = vld [vmem:[%s22 + $0xc] sm:$0xf]
        %v5200 = vld [vmem:[%s22 + $0x10] sm:$0xf]
        %v5201 = vld [vmem:[%s22 + $0x14] sm:$0xf]
        %v5202 = vld [vmem:[%s22 + $0x18] sm:$0xf]
        %v5203 = vld [vmem:[%s22 + $0x1c] sm:$0xf]
        %v5204 = vld [vmem:[%s22 + $0x20] sm:$0xf]
        %v5205 = vld [vmem:[%s22 + $0x24] sm:$0xf]
        %v5206 = vld [vmem:[%s22 + $0x28] sm:$0xf]
        %v5207 = vld [vmem:[%s22 + $0x2c] sm:$0xf]
        %v5208 = vld [vmem:[%s22 + $0x30] sm:$0xf]
        %v5209 = vld [vmem:[%s22 + $0x34] sm:$0xf]
        %v5210 = vld [vmem:[%s22 + $0x38] sm:$0xf]
        %v5211 = vld [vmem:[%s22 + $0x3c] sm:$0xf]
        %v5212 = vld [vmem:[%s22 + $0x40] sm:$0xf]
        %v5213 = vld [vmem:[%s22 + $0x44] sm:$0xf]
        %v5214 = vld [vmem:[%s22 + $0x48] sm:$0xf]
        %v5215 = vld [vmem:[%s22 + $0x4c] sm:$0xf]
        %v5216 = vld [vmem:[%s22 + $0x50] sm:$0xf]
        %v5217 = vld [vmem:[%s22 + $0x54] sm:$0xf]
        %v5218 = vld [vmem:[%s22 + $0x58] sm:$0xf]
        %v5219 = vld [vmem:[%s22 + $0x5c] sm:$0xf]
        %v5220 = vld [vmem:[%s22 + $0x60] sm:$0xf]
        %v5221 = vld [vmem:[%s22 + $0x64] sm:$0xf]
        %v5222 = vld [vmem:[%s22 + $0x68] sm:$0xf]
        %v5223 = vld [vmem:[%s22 + $0x6c] sm:$0xf]
        %v5224 = vld [vmem:[%s22 + $0x70] sm:$0xf]
        %v5225 = vld [vmem:[%s22 + $0x74] sm:$0xf]
        %v5226 = vld [vmem:[%s22 + $0x78] sm:$0xf]
        %v5227 = vld [vmem:[%s22 + $0x7c] sm:$0xf]
        %v5228 = vld [vmem:[%s23] sm:$0x1]
        %v5261 = vunpack.c.l.b16 %v5196
        %v5262 = vunpack.c.l.b16 %v5197
        %v5263 = vunpack.c.l.b16 %v5198
        %v5264 = vunpack.c.l.b16 %v5199
        %v5265 = vunpack.c.l.b16 %v5200
        %v5266 = vunpack.c.l.b16 %v5201
        %v5267 = vunpack.c.l.b16 %v5202
        %v5268 = vunpack.c.l.b16 %v5203
        %v5269 = vunpack.c.l.b16 %v5204
        %v5270 = vunpack.c.l.b16 %v5205
        %v5271 = vunpack.c.l.b16 %v5206
        %v5272 = vunpack.c.l.b16 %v5207
        %v5273 = vunpack.c.l.b16 %v5208
        %v5274 = vunpack.c.l.b16 %v5209
        %v5275 = vunpack.c.l.b16 %v5210
        %v5276 = vunpack.c.l.b16 %v5211
        %v5277 = vunpack.c.l.b16 %v5212
        %v5278 = vunpack.c.l.b16 %v5213
        %v5279 = vunpack.c.l.b16 %v5214
        %v5280 = vunpack.c.l.b16 %v5215
        %v5281 = vunpack.c.l.b16 %v5216
        %v5282 = vunpack.c.l.b16 %v5217
        %v5283 = vunpack.c.l.b16 %v5218
        %v5284 = vunpack.c.l.b16 %v5219
        %v5285 = vunpack.c.l.b16 %v5220
        %v5286 = vunpack.c.l.b16 %v5221
        %v5287 = vunpack.c.l.b16 %v5222
        %v5288 = vunpack.c.l.b16 %v5223
        %v5289 = vunpack.c.l.b16 %v5224
        %v5290 = vunpack.c.l.b16 %v5225
        %v5291 = vunpack.c.l.b16 %v5226
        %v5292 = vunpack.c.l.b16 %v5227
        %v5293 = vpack.c.b16 %v5262, %v5261
        %v5294 = vpack.c.b16 %v5264, %v5263
        %v5295 = vpack.c.b16 %v5266, %v5265
        %v5296 = vpack.c.b16 %v5268, %v5267
        %v5297 = vpack.c.b16 %v5270, %v5269
        %v5298 = vpack.c.b16 %v5272, %v5271
        %v5299 = vpack.c.b16 %v5274, %v5273
        %v5300 = vpack.c.b16 %v5276, %v5275
        %v5301 = vpack.c.b16 %v5278, %v5277
        %v5302 = vpack.c.b16 %v5280, %v5279
        %v5303 = vpack.c.b16 %v5282, %v5281
        %v5304 = vpack.c.b16 %v5284, %v5283
        %v5305 = vpack.c.b16 %v5286, %v5285
        %v5306 = vpack.c.b16 %v5288, %v5287
        %v5307 = vpack.c.b16 %v5290, %v5289
        %v5308 = vpack.c.b16 %v5292, %v5291
        %5325 = vmatpush.bf16.msra.mxu0 %v5300
        %5326 = vmatpush.bf16.msra.mxu0 %v5299
        %5327 = vmatpush.bf16.msra.mxu0 %v5298
        %5328 = vmatpush.bf16.msra.mxu0 %v5297
        %5329 = vmatpush.bf16.msra.mxu0 %v5296
        %5330 = vmatpush.bf16.msra.mxu0 %v5295
        %5331 = vmatpush.bf16.msra.mxu0 %v5294
        %5332 = vmatpush.bf16.msra.mxu0 %v5293
        %5333 = vmatmul.bf16.gmra.mxu0 %v5194
        %v5334 = vpop.f32.mrf.mxu0
        %v5335 = vadd.f32 %v5228, %v5334
        %v5336 = vpop.f32.mrf.mxu0
        %5337 = vdwg.mxu0
        %5338 = vmatpush.bf16.msra.mxu0 %v5308
        %5339 = vmatpush.bf16.msra.mxu0 %v5307
        %5340 = vmatpush.bf16.msra.mxu0 %v5306
        %5341 = vmatpush.bf16.msra.mxu0 %v5305
        %5342 = vmatpush.bf16.msra.mxu0 %v5304
        %5343 = vmatpush.bf16.msra.mxu0 %v5303
        %5344 = vmatpush.bf16.msra.mxu0 %v5302
        %5345 = vmatpush.bf16.msra.mxu0 %v5301
        %5346 = vmatmul.bf16.gmra.mxu0 %v5195
        %v5347 = vpop.f32.mrf.mxu0
        %v5348 = vadd.f32 %v5335, %v5347
        %v5349 = vpop.f32.mrf.mxu0
        %5350 = vdwg.mxu0
        %vm5351 = vcmask 73728
        %5352 = vst.msk [vmem:[%s727] sm:$0x1] %vm5351, %v5348
        %s5353 = sand.u32 %s555, 1
        %s5354 = scalar_lea.sflag [#allocation4], %s5353
        %s5355 = sand.u32 %s555, 1
        %s5356 = scalar_lea.vmem [#allocation3], %s5355
        // Predicated region
        $region117: #{tpu_custom_call.1} parent=115 // pred_check
          %p5357 = pneg %p565
        $region118: #{tpu_custom_call.1} parent=115 // pred_check_branch
          %5359 = sbr.rel (%p5357) target = $region120
        $region119: #{tpu_custom_call.1} parent=115 // pred_region
          %5361 = vsyncadd %s5354, 0
          %s5362 = scalar_lea.hbm %s24, %s38
          %s5364 = sshll.u32 %s5356, 4
          %s5365 = int_to_ptr.vmem [resolvable:$true] %s5364
          %s5366 = sshll.u32 %s5362, 4
          %s5367 = int_to_ptr.hbm [resolvable:$true] %s5366
          %5369 = dma.vmem_to_hbm [thread:$0]  %s5365, 16, %s5367, %s5354
        $region120: #{tpu_custom_call.1} parent=115 // pred_fallthru
          _
      $region116: #{tpu_custom_call.1} parent=5 // pred_fallthru
        _
      %p5370 = scmp.le.s32.totalorder 2, %s33
      // Predicated region
      $region121: #{tpu_custom_call.1} parent=5 // pred_check
        %p5371 = pneg %p5370
      $region122: #{tpu_custom_call.1} parent=5 // pred_check_branch
        %5373 = sbr.rel (%p5371) target = $region124
      $region123: #{tpu_custom_call.1} parent=5 // pred_region
        %s5374 = ssub.s32 %s33, 2
        // Predicated region
        $region125: #{tpu_custom_call.1} parent=123 // pred_check
          %p5375 = pneg %p571
        $region126: #{tpu_custom_call.1} parent=123 // pred_check_branch
          %5377 = sbr.rel (%p5375) target = $region128
        $region127: #{tpu_custom_call.1} parent=123 // pred_region
          %s5378 = sand.u32 %s556, 1
          %s5379 = scalar_lea.sflag [#allocation4], %s5378
          %s5380 = sand.u32 %s556, 1
          %s5381 = scalar_lea.vmem [#allocation3], %s5380
          %5383 = dma.done %s5379, 16
        $region128: #{tpu_custom_call.1} parent=123 // pred_fallthru
          _
      $region124: #{tpu_custom_call.1} parent=5 // pred_fallthru
        _
    $region6: #{tpu_custom_call.1} parent=1 // loop_footer
      %s37 = sadd.s32 1, %s33
    $region7: #{tpu_custom_call.1} parent=1 // loop_footer_branch
      %32 = sbr.rel target = $region3
    $region8: #{tpu_custom_call.1} parent=1 // loop_exit
      _
    %5384 = vsyncpa [#allocation4], 1
    %s5385 = scalar_lea.sflag [#allocation4], 1
    %5386 = vsyncpa %s5385, 1

</llo_original>
